<compile_context>
chip_gen: v5e
topology: v5e:2x2
jax: 0.10.0
libtpu: 0.0.40
codegen_flags: <defaults>
</compile_context>

<pallas_src>
import jax
import jax.numpy as jnp
from jax import lax
from jax.experimental import pallas as pl
from jax.experimental.pallas import tpu as pltpu

LAYER_SIZES = [784, 512, 256, 128, 64, 32, 10]           # PyTorch layer sizes
# Lane-padded (x128) hidden/output sizes.  The 784 input dim is NOT padded.
PADDED_SIZES = [784, 512, 256, 128, 128, 128, 128]
NUM_CLASSES = 10
NUM_LAYERS = 6
MAX_TILE_B = 512  # batch-tile cap; ~7 MiB VMEM footprint -> safe on v5e/v6e/v7x


def _mlp_kernel(x_ref,
                w1_ref, w2_ref, w3_ref, w4_ref, w5_ref, w6_ref,
                b1_ref, b2_ref, b3_ref, b4_ref, b5_ref, b6_ref,
                o_ref):
    """One batch tile: 6 linear layers (bf16 MXU, f32 acc) + ReLU + log_softmax."""
    h = x_ref[...]  # already bf16: cast was fused with the pad in the wrapper

    def linear(h_bf16, w_ref, b_ref):
        return jnp.dot(h_bf16, w_ref[...],
                       preferred_element_type=jnp.float32) + b_ref[...]

    def linear_relu(h_bf16, w_ref, b_ref):
        return jnp.maximum(linear(h_bf16, w_ref, b_ref), 0.0).astype(jnp.bfloat16)

    h = linear_relu(h, w1_ref, b1_ref)
    h = linear_relu(h, w2_ref, b2_ref)
    h = linear_relu(h, w3_ref, b3_ref)
    h = linear_relu(h, w4_ref, b4_ref)
    h = linear_relu(h, w5_ref, b5_ref)
    logits = linear(h, w6_ref, b6_ref)   # [TILE_B, 128]; only first 10 cols valid

    # Stable log_softmax over the first NUM_CLASSES lanes only (rest are padding).
    col = lax.broadcasted_iota(jnp.int32, logits.shape, 1)
    valid = col < NUM_CLASSES
    masked = jnp.where(valid, logits, jnp.float32(-1e30))
    m = jnp.max(masked, axis=1, keepdims=True)
    shifted = masked - m
    lse = jnp.log(jnp.sum(jnp.where(valid, jnp.exp(shifted), 0.0),
                          axis=1, keepdims=True))
    # Lane-dense [TILE_B, 128] store; cols >= 10 are garbage, wrapper slices them off.
    o_ref[...] = shifted - lse


def _round_up(n, m):
    return (n + m - 1) // m * m


def _choose_tile_b(B):
    """Batch tile: multiple of 128, <= MAX_TILE_B, and >= 2 grid steps when possible."""
    b128 = _round_up(max(B, 1), 128)
    tile = min(MAX_TILE_B, b128)
    if b128 >= 2 * 128:
        # Keep at least 2 grid steps so a 2-TensorCore chip (v7x) splits the batch.
        tile = min(tile, _round_up(b128 // 2, 128))
    return tile


def prepare_params(weights, biases):
    """Pad [in, out] f32 params to lane-friendly shapes; weights -> bf16, biases stay f32."""
    pw, pb = [], []
    for i, (w, b) in enumerate(zip(weights, biases)):
        in_p, out_p = PADDED_SIZES[i], PADDED_SIZES[i + 1]
        w = jnp.asarray(w, jnp.float32)
        b = jnp.asarray(b, jnp.float32).reshape(1, -1)
        w_pad = jnp.pad(w, ((0, in_p - w.shape[0]), (0, out_p - w.shape[1])))
        b_pad = jnp.pad(b, ((0, 0), (0, out_p - b.shape[1])))
        pw.append(w_pad.astype(jnp.bfloat16))
        pb.append(b_pad)
    return pw, pb


@jax.jit
def net_forward(x, padded_weights, padded_biases):
    """x: [B, 784]. padded_weights/biases: output of prepare_params. Returns [B, 10] log-probs."""
    B = x.shape[0]
    tile_b = _choose_tile_b(B)
    B_pad = _round_up(max(B, 1), tile_b)
    F_IN = PADDED_SIZES[0]     # 784, unpadded
    OUT_P = PADDED_SIZES[-1]   # 128

    # torch's x.float(); cast to bf16 here (fused with the batch pad) so the
    # per-step x DMA is half-width.  The kernel would cast to bf16 anyway.
    x_bf16 = x.astype(jnp.float32).astype(jnp.bfloat16)
    x_pad = jnp.pad(x_bf16, ((0, B_pad - B), (0, 0)))

    num_tiles = B_pad // tile_b

    x_spec = pl.BlockSpec((tile_b, F_IN), lambda i: (i, 0))
    # Constant index_maps keep weights/biases VMEM-resident across the whole grid.
    w_specs = [pl.BlockSpec(w.shape, lambda i: (0, 0)) for w in padded_weights]
    b_specs = [pl.BlockSpec(b.shape, lambda i: (0, 0)) for b in padded_biases]
    out_spec = pl.BlockSpec((tile_b, OUT_P), lambda i: (i, 0))

    flops = 2 * B_pad * sum(PADDED_SIZES[i] * PADDED_SIZES[i + 1]
                            for i in range(NUM_LAYERS))
    bytes_accessed = (x_pad.size * 2 + B_pad * OUT_P * 4
                      + sum(w.size * 2 for w in padded_weights)
                      + sum(b.size * 4 for b in padded_biases))
    cost = pl.CostEstimate(flops=flops,
                           transcendentals=B_pad * NUM_CLASSES,
                           bytes_accessed=bytes_accessed)

    out = pl.pallas_call(
        _mlp_kernel,
        out_shape=jax.ShapeDtypeStruct((B_pad, OUT_P), jnp.float32),
        grid=(num_tiles,),
        in_specs=[x_spec] + w_specs + b_specs,
        out_specs=out_spec,
        compiler_params=pltpu.CompilerParams(
            dimension_semantics=("parallel",),
            vmem_limit_bytes=32 * 1024 * 1024),
        cost_estimate=cost,
    )(x_pad, *padded_weights, *padded_biases)

    return out[:B, :NUM_CLASSES]


def init_params(key):
    """Deterministic PyTorch-style init: U(-1/sqrt(fan_in), 1/sqrt(fan_in)).

    Weights stored as [in, out] so y = x @ W + b matches PyTorch's x @ W_pt.T + b.
    """
    weights, biases = [], []
    for i, (fan_in, fan_out) in enumerate(zip(LAYER_SIZES[:-1], LAYER_SIZES[1:])):
        kw, kb, key = jax.random.split(jax.random.fold_in(key, i), 3)
        bound = 1.0 / jnp.sqrt(jnp.float32(fan_in))
        w = jax.random.uniform(kw, (fan_in, fan_out), jnp.float32, -bound, bound)
        b = jax.random.uniform(kb, (1, fan_out), jnp.float32, -bound, bound)
        weights.append(w)
        biases.append(b)
    return weights, biases


if __name__ == "__main__":
    key = jax.random.PRNGKey(0)
    k_x, k_p = jax.random.split(key)

    # Non-multiple-of-128 batch to exercise wrapper-side padding + 2-tile grid.
    B = 200
    x = jax.random.normal(k_x, (B, 784), dtype=jnp.float32)

    weights, biases = init_params(k_p)
    pw, pb = prepare_params(weights, biases)

    out = net_forward(x, pw, pb)
    out = jax.block_until_ready(out)

    # Shape + valid log-probabilities.
    assert out.shape == (B, NUM_CLASSES)
    row_sums = jnp.sum(jnp.exp(out), axis=1)
    assert bool(jnp.all(jnp.abs(row_sums - 1.0) < 1e-3))

    # Pure-JAX reference using the same bf16 quantization / f32 accumulation.
    def ref_forward(x, weights, biases):
        h = x.astype(jnp.float32)
        for i, (w, b) in enumerate(zip(weights, biases)):
            h = jnp.dot(h.astype(jnp.bfloat16), w.astype(jnp.bfloat16),
                        preferred_element_type=jnp.float32) + b.reshape(1, -1)
            if i < len(weights) - 1:
                h = jnp.maximum(h, 0.0)
        return jax.nn.log_softmax(h, axis=1)

    ref = jax.block_until_ready(ref_forward(x, weights, biases))
    max_err = float(jnp.max(jnp.abs(out - ref)))
    assert max_err < 5e-2, f"max abs err {max_err}"

    print("KERNEL_OK")
</pallas_src>

<mosaic_0001>
module attributes {stable_mosaic.version = 11 : i64} {
  func.func @_mlp_kernel(%arg0: i32, %arg1: memref<128x784xbf16, #tpu.memory_space<vmem>>, %arg2: memref<784x512xbf16, #tpu.memory_space<vmem>>, %arg3: memref<512x256xbf16, #tpu.memory_space<vmem>>, %arg4: memref<256x128xbf16, #tpu.memory_space<vmem>>, %arg5: memref<128x128xbf16, #tpu.memory_space<vmem>>, %arg6: memref<128x128xbf16, #tpu.memory_space<vmem>>, %arg7: memref<128x128xbf16, #tpu.memory_space<vmem>>, %arg8: memref<1x512xf32, #tpu.memory_space<vmem>>, %arg9: memref<1x256xf32, #tpu.memory_space<vmem>>, %arg10: memref<1x128xf32, #tpu.memory_space<vmem>>, %arg11: memref<1x128xf32, #tpu.memory_space<vmem>>, %arg12: memref<1x128xf32, #tpu.memory_space<vmem>>, %arg13: memref<1x128xf32, #tpu.memory_space<vmem>>, %arg14: memref<128x128xf32, #tpu.memory_space<vmem>>) attributes {dimension_semantics = [#tpu.dimension_semantics<parallel>], iteration_bounds = array<i64: 2>, scalar_prefetch = 0 : i64, scratch_operands = 0 : i64, tpu.core_type = #tpu.core_type<tc>, window_params = [{transform_indices = @transform_0, window_bounds = array<i64: 128, 784>}, {pipeline_mode = #tpu.pipeline_mode<synchronous>, transform_indices = @transform_1, window_bounds = array<i64: 784, 512>}, {pipeline_mode = #tpu.pipeline_mode<synchronous>, transform_indices = @transform_2, window_bounds = array<i64: 512, 256>}, {pipeline_mode = #tpu.pipeline_mode<synchronous>, transform_indices = @transform_3, window_bounds = array<i64: 256, 128>}, {pipeline_mode = #tpu.pipeline_mode<synchronous>, transform_indices = @transform_4, window_bounds = array<i64: 128, 128>}, {pipeline_mode = #tpu.pipeline_mode<synchronous>, transform_indices = @transform_5, window_bounds = array<i64: 128, 128>}, {pipeline_mode = #tpu.pipeline_mode<synchronous>, transform_indices = @transform_6, window_bounds = array<i64: 128, 128>}, {pipeline_mode = #tpu.pipeline_mode<synchronous>, transform_indices = @transform_7, window_bounds = array<i64: 1, 512>}, {pipeline_mode = #tpu.pipeline_mode<synchronous>, transform_indices = @transform_8, window_bounds = array<i64: 1, 256>}, {pipeline_mode = #tpu.pipeline_mode<synchronous>, transform_indices = @transform_9, window_bounds = array<i64: 1, 128>}, {pipeline_mode = #tpu.pipeline_mode<synchronous>, transform_indices = @transform_10, window_bounds = array<i64: 1, 128>}, {pipeline_mode = #tpu.pipeline_mode<synchronous>, transform_indices = @transform_11, window_bounds = array<i64: 1, 128>}, {pipeline_mode = #tpu.pipeline_mode<synchronous>, transform_indices = @transform_12, window_bounds = array<i64: 1, 128>}, {transform_indices = @transform_13, window_bounds = array<i64: 128, 128>}]} {
    %c0 = arith.constant 0 : index
    %c0_0 = arith.constant 0 : index
    %0 = vector.load %arg1[%c0, %c0_0] : memref<128x784xbf16, #tpu.memory_space<vmem>>, vector<128x784xbf16>
    %c0_1 = arith.constant 0 : index
    %c0_2 = arith.constant 0 : index
    %1 = vector.load %arg2[%c0_1, %c0_2] : memref<784x512xbf16, #tpu.memory_space<vmem>>, vector<784x512xbf16>
    %cst = arith.constant dense<0.000000e+00> : vector<128x512xf32>
    %2 = tpu.matmul %0, %1, %cst {dimension_numbers = #tpu.dot_dimension_numbers<[1], [0], [0], [1], [0, 0, 1, 1], [], []>} : vector<128x784xbf16>, vector<784x512xbf16>, vector<128x512xf32> -> vector<128x512xf32>
    %c0_3 = arith.constant 0 : index
    %c0_4 = arith.constant 0 : index
    %3 = vector.load %arg8[%c0_3, %c0_4] : memref<1x512xf32, #tpu.memory_space<vmem>>, vector<1x512xf32>
    %4 = vector.broadcast %3 : vector<1x512xf32> to vector<128x512xf32>
    %5 = arith.addf %2, %4 : vector<128x512xf32>
    %cst_5 = arith.constant 0.000000e+00 : f32
    %6 = vector.broadcast %cst_5 : f32 to vector<128x512xf32>
    %7 = arith.maximumf %5, %6 : vector<128x512xf32>
    %8 = arith.truncf %7 : vector<128x512xf32> to vector<128x512xbf16>
    %c0_6 = arith.constant 0 : index
    %c0_7 = arith.constant 0 : index
    %9 = vector.load %arg3[%c0_6, %c0_7] : memref<512x256xbf16, #tpu.memory_space<vmem>>, vector<512x256xbf16>
    %cst_8 = arith.constant dense<0.000000e+00> : vector<128x256xf32>
    %10 = tpu.matmul %8, %9, %cst_8 {dimension_numbers = #tpu.dot_dimension_numbers<[1], [0], [0], [1], [0, 0, 1, 1], [], []>} : vector<128x512xbf16>, vector<512x256xbf16>, vector<128x256xf32> -> vector<128x256xf32>
    %c0_9 = arith.constant 0 : index
    %c0_10 = arith.constant 0 : index
    %11 = vector.load %arg9[%c0_9, %c0_10] : memref<1x256xf32, #tpu.memory_space<vmem>>, vector<1x256xf32>
    %12 = vector.broadcast %11 : vector<1x256xf32> to vector<128x256xf32>
    %13 = arith.addf %10, %12 : vector<128x256xf32>
    %cst_11 = arith.constant 0.000000e+00 : f32
    %14 = vector.broadcast %cst_11 : f32 to vector<128x256xf32>
    %15 = arith.maximumf %13, %14 : vector<128x256xf32>
    %16 = arith.truncf %15 : vector<128x256xf32> to vector<128x256xbf16>
    %c0_12 = arith.constant 0 : index
    %c0_13 = arith.constant 0 : index
    %17 = vector.load %arg4[%c0_12, %c0_13] : memref<256x128xbf16, #tpu.memory_space<vmem>>, vector<256x128xbf16>
    %cst_14 = arith.constant dense<0.000000e+00> : vector<128x128xf32>
    %18 = tpu.matmul %16, %17, %cst_14 {dimension_numbers = #tpu.dot_dimension_numbers<[1], [0], [0], [1], [0, 0, 1, 1], [], []>} : vector<128x256xbf16>, vector<256x128xbf16>, vector<128x128xf32> -> vector<128x128xf32>
    %c0_15 = arith.constant 0 : index
    %c0_16 = arith.constant 0 : index
    %19 = vector.load %arg10[%c0_15, %c0_16] : memref<1x128xf32, #tpu.memory_space<vmem>>, vector<1x128xf32>
    %20 = vector.broadcast %19 : vector<1x128xf32> to vector<128x128xf32>
    %21 = arith.addf %18, %20 : vector<128x128xf32>
    %cst_17 = arith.constant 0.000000e+00 : f32
    %22 = vector.broadcast %cst_17 : f32 to vector<128x128xf32>
    %23 = arith.maximumf %21, %22 : vector<128x128xf32>
    %24 = arith.truncf %23 : vector<128x128xf32> to vector<128x128xbf16>
    %c0_18 = arith.constant 0 : index
    %c0_19 = arith.constant 0 : index
    %25 = vector.load %arg5[%c0_18, %c0_19] : memref<128x128xbf16, #tpu.memory_space<vmem>>, vector<128x128xbf16>
    %cst_20 = arith.constant dense<0.000000e+00> : vector<128x128xf32>
    %26 = tpu.matmul %24, %25, %cst_20 {dimension_numbers = #tpu.dot_dimension_numbers<[1], [0], [0], [1], [0, 0, 1, 1], [], []>} : vector<128x128xbf16>, vector<128x128xbf16>, vector<128x128xf32> -> vector<128x128xf32>
    %c0_21 = arith.constant 0 : index
    %c0_22 = arith.constant 0 : index
    %27 = vector.load %arg11[%c0_21, %c0_22] : memref<1x128xf32, #tpu.memory_space<vmem>>, vector<1x128xf32>
    %28 = vector.broadcast %27 : vector<1x128xf32> to vector<128x128xf32>
    %29 = arith.addf %26, %28 : vector<128x128xf32>
    %cst_23 = arith.constant 0.000000e+00 : f32
    %30 = vector.broadcast %cst_23 : f32 to vector<128x128xf32>
    %31 = arith.maximumf %29, %30 : vector<128x128xf32>
    %32 = arith.truncf %31 : vector<128x128xf32> to vector<128x128xbf16>
    %c0_24 = arith.constant 0 : index
    %c0_25 = arith.constant 0 : index
    %33 = vector.load %arg6[%c0_24, %c0_25] : memref<128x128xbf16, #tpu.memory_space<vmem>>, vector<128x128xbf16>
    %cst_26 = arith.constant dense<0.000000e+00> : vector<128x128xf32>
    %34 = tpu.matmul %32, %33, %cst_26 {dimension_numbers = #tpu.dot_dimension_numbers<[1], [0], [0], [1], [0, 0, 1, 1], [], []>} : vector<128x128xbf16>, vector<128x128xbf16>, vector<128x128xf32> -> vector<128x128xf32>
    %c0_27 = arith.constant 0 : index
    %c0_28 = arith.constant 0 : index
    %35 = vector.load %arg12[%c0_27, %c0_28] : memref<1x128xf32, #tpu.memory_space<vmem>>, vector<1x128xf32>
    %36 = vector.broadcast %35 : vector<1x128xf32> to vector<128x128xf32>
    %37 = arith.addf %34, %36 : vector<128x128xf32>
    %cst_29 = arith.constant 0.000000e+00 : f32
    %38 = vector.broadcast %cst_29 : f32 to vector<128x128xf32>
    %39 = arith.maximumf %37, %38 : vector<128x128xf32>
    %40 = arith.truncf %39 : vector<128x128xf32> to vector<128x128xbf16>
    %c0_30 = arith.constant 0 : index
    %c0_31 = arith.constant 0 : index
    %41 = vector.load %arg7[%c0_30, %c0_31] : memref<128x128xbf16, #tpu.memory_space<vmem>>, vector<128x128xbf16>
    %cst_32 = arith.constant dense<0.000000e+00> : vector<128x128xf32>
    %42 = tpu.matmul %40, %41, %cst_32 {dimension_numbers = #tpu.dot_dimension_numbers<[1], [0], [0], [1], [0, 0, 1, 1], [], []>} : vector<128x128xbf16>, vector<128x128xbf16>, vector<128x128xf32> -> vector<128x128xf32>
    %c0_33 = arith.constant 0 : index
    %c0_34 = arith.constant 0 : index
    %43 = vector.load %arg13[%c0_33, %c0_34] : memref<1x128xf32, #tpu.memory_space<vmem>>, vector<1x128xf32>
    %44 = vector.broadcast %43 : vector<1x128xf32> to vector<128x128xf32>
    %45 = arith.addf %42, %44 : vector<128x128xf32>
    %46 = tpu.iota {dimensions = array<i32: 1>} : vector<128x128xi32>
    %c10_i32 = arith.constant 10 : i32
    %47 = vector.broadcast %c10_i32 : i32 to vector<128x128xi32>
    %48 = arith.cmpi slt, %46, %47 : vector<128x128xi32>
    %cst_35 = arith.constant -1.000000e+30 : f32
    %49 = vector.broadcast %cst_35 : f32 to vector<128x128xf32>
    %50 = arith.select %48, %45, %49 : vector<128x128xi1>, vector<128x128xf32>
    %cst_36 = arith.constant dense<0xFF800000> : vector<128xf32>
    %51 = vector.multi_reduction <maximumf>, %50, %cst_36 [1] : vector<128x128xf32> to vector<128xf32>
    %52 = vector.shape_cast %51 : vector<128xf32> to vector<128x1xf32>
    %53 = vector.broadcast %52 : vector<128x1xf32> to vector<128x128xf32>
    %54 = arith.subf %50, %53 : vector<128x128xf32>
    %55 = math.exp %54 : vector<128x128xf32>
    %cst_37 = arith.constant 0.000000e+00 : f32
    %56 = vector.broadcast %cst_37 : f32 to vector<128x128xf32>
    %57 = arith.select %48, %55, %56 : vector<128x128xi1>, vector<128x128xf32>
    %cst_38 = arith.constant dense<0.000000e+00> : vector<128xf32>
    %58 = vector.multi_reduction <add>, %57, %cst_38 [1] : vector<128x128xf32> to vector<128xf32>
    %59 = vector.shape_cast %58 : vector<128xf32> to vector<128x1xf32>
    %60 = math.log %59 : vector<128x1xf32>
    %61 = vector.broadcast %60 : vector<128x1xf32> to vector<128x128xf32>
    %62 = arith.subf %54, %61 : vector<128x128xf32>
    %c0_39 = arith.constant 0 : index
    %c0_40 = arith.constant 0 : index
    %63 = vector.load %arg14[%c0_39, %c0_40] : memref<128x128xf32, #tpu.memory_space<vmem>>, vector<128x128xf32>
    tpu.vector_store %arg14[%c0_39, %c0_40], %62 {strides = array<i32>} : memref<128x128xf32, #tpu.memory_space<vmem>>, vector<128x128xf32>,
    return
  }
  func.func @transform_0(%arg0: i32) -> (i32, i32) {
    %c0_i32 = arith.constant 0 : i32
    %c0_i32_0 = arith.constant 0 : i32
    return %arg0, %c0_i32 : i32, i32
  }
  func.func @transform_1(%arg0: i32) -> (i32, i32) {
    %c0_i32 = arith.constant 0 : i32
    %c0_i32_0 = arith.constant 0 : i32
    %c0_i32_1 = arith.constant 0 : i32
    return %c0_i32, %c0_i32_0 : i32, i32
  }
  func.func @transform_2(%arg0: i32) -> (i32, i32) {
    %c0_i32 = arith.constant 0 : i32
    %c0_i32_0 = arith.constant 0 : i32
    %c0_i32_1 = arith.constant 0 : i32
    return %c0_i32, %c0_i32_0 : i32, i32
  }
  func.func @transform_3(%arg0: i32) -> (i32, i32) {
    %c0_i32 = arith.constant 0 : i32
    %c0_i32_0 = arith.constant 0 : i32
    %c0_i32_1 = arith.constant 0 : i32
    return %c0_i32, %c0_i32_0 : i32, i32
  }
  func.func @transform_4(%arg0: i32) -> (i32, i32) {
    %c0_i32 = arith.constant 0 : i32
    %c0_i32_0 = arith.constant 0 : i32
    %c0_i32_1 = arith.constant 0 : i32
    return %c0_i32, %c0_i32_0 : i32, i32
  }
  func.func @transform_5(%arg0: i32) -> (i32, i32) {
    %c0_i32 = arith.constant 0 : i32
    %c0_i32_0 = arith.constant 0 : i32
    %c0_i32_1 = arith.constant 0 : i32
    return %c0_i32, %c0_i32_0 : i32, i32
  }
  func.func @transform_6(%arg0: i32) -> (i32, i32) {
    %c0_i32 = arith.constant 0 : i32
    %c0_i32_0 = arith.constant 0 : i32
    %c0_i32_1 = arith.constant 0 : i32
    return %c0_i32, %c0_i32_0 : i32, i32
  }
  func.func @transform_7(%arg0: i32) -> (i32, i32) {
    %c0_i32 = arith.constant 0 : i32
    %c0_i32_0 = arith.constant 0 : i32
    %c0_i32_1 = arith.constant 0 : i32
    return %c0_i32, %c0_i32_0 : i32, i32
  }
  func.func @transform_8(%arg0: i32) -> (i32, i32) {
    %c0_i32 = arith.constant 0 : i32
    %c0_i32_0 = arith.constant 0 : i32
    %c0_i32_1 = arith.constant 0 : i32
    return %c0_i32, %c0_i32_0 : i32, i32
  }
  func.func @transform_9(%arg0: i32) -> (i32, i32) {
    %c0_i32 = arith.constant 0 : i32
    %c0_i32_0 = arith.constant 0 : i32
    %c0_i32_1 = arith.constant 0 : i32
    return %c0_i32, %c0_i32_0 : i32, i32
  }
  func.func @transform_10(%arg0: i32) -> (i32, i32) {
    %c0_i32 = arith.constant 0 : i32
    %c0_i32_0 = arith.constant 0 : i32
    %c0_i32_1 = arith.constant 0 : i32
    return %c0_i32, %c0_i32_0 : i32, i32
  }
  func.func @transform_11(%arg0: i32) -> (i32, i32) {
    %c0_i32 = arith.constant 0 : i32
    %c0_i32_0 = arith.constant 0 : i32
    %c0_i32_1 = arith.constant 0 : i32
    return %c0_i32, %c0_i32_0 : i32, i32
  }
  func.func @transform_12(%arg0: i32) -> (i32, i32) {
    %c0_i32 = arith.constant 0 : i32
    %c0_i32_0 = arith.constant 0 : i32
    %c0_i32_1 = arith.constant 0 : i32
    return %c0_i32, %c0_i32_0 : i32, i32
  }
  func.func @transform_13(%arg0: i32) -> (i32, i32) {
    %c0_i32 = arith.constant 0 : i32
    %c0_i32_0 = arith.constant 0 : i32
    return %arg0, %c0_i32 : i32, i32
  }
}

</mosaic_0001>

<llo_original>
// kernel: net_forward.1
$region0: #{net_forward.1}
  #allocation0 [shape = 'u32[]', space=smem, size = 0x4, offset = 0x4, fixed_abs, tag = 'smem constant byte address 0x4 - core index']
  #allocation1 [shape = 'u32[72,128]{1,0:T(1,128)}', space=vmem, size = 0x9000, scoped, tag = 'internal scratch']
  %s0 = inlined_call_operand.vmem [shape: bf16[256,784], index: 0, kind: input, shape index: {}]
  %s1 = inlined_call_operand.vmem [shape: bf16[784,512], index: 1, kind: input, shape index: {}]
  %s2 = inlined_call_operand.vmem [shape: bf16[512,256], index: 2, kind: input, shape index: {}]
  %s3 = inlined_call_operand.vmem [shape: bf16[256,128], index: 3, kind: input, shape index: {}]
  %s4 = inlined_call_operand.vmem [shape: bf16[128,128], index: 4, kind: input, shape index: {}]
  %s5 = inlined_call_operand.vmem [shape: bf16[128,128], index: 5, kind: input, shape index: {}]
  %s6 = inlined_call_operand.vmem [shape: bf16[128,128], index: 6, kind: input, shape index: {}]
  %s7 = inlined_call_operand.vmem [shape: f32[1,512], index: 7, kind: input, shape index: {}]
  %s8 = inlined_call_operand.vmem [shape: f32[1,256], index: 8, kind: input, shape index: {}]
  %s9 = inlined_call_operand.vmem [shape: f32[1,128], index: 9, kind: input, shape index: {}]
  %s10 = inlined_call_operand.vmem [shape: f32[1,128], index: 10, kind: input, shape index: {}]
  %s11 = inlined_call_operand.vmem [shape: f32[1,128], index: 11, kind: input, shape index: {}]
  %s12 = inlined_call_operand.vmem [shape: f32[1,128], index: 12, kind: input, shape index: {}]
  %s13 = inlined_call_operand.vmem [shape: f32[256,128], index: 13, kind: output, shape index: {}]
  %s14 = sld [smem:[#allocation0]]
  $region85: #{net_forward.1} parent=0
    _
  %s16 = ssub.s32 1, %s14
  %s17 = scalar_select 0, %s16, %s14
  loop: start=0, step=1, limit=4
  $region2: #{net_forward.1} parent=0 // loop_pre_header
    _
  $region3: #{net_forward.1} parent=0 // loop_header
    %s19 = sphi 0, %s23
    %p20 = scmp.ge.s32.totalorder %s19, 4
    %s29 = sphi 0, %s31
    %s32 = sphi 0, %s29
    %s33 = sphi 0, %s32
    %s49 = sphi 0, %s33
    %s53 = sphi 0, %s53
    %s55 = sphi 0, %s53
    %s56 = sphi 0, %s55
    %s70 = sphi 0, %s56
    %s74 = sphi 0, %s74
    %s76 = sphi 0, %s74
    %s77 = sphi 0, %s76
    %s91 = sphi 0, %s77
    %s95 = sphi 0, %s95
    %s97 = sphi 0, %s95
    %s98 = sphi 0, %s97
    %s112 = sphi 0, %s98
    %s116 = sphi 0, %s116
    %s118 = sphi 0, %s116
    %s119 = sphi 0, %s118
    %s133 = sphi 0, %s119
    %s137 = sphi 0, %s137
    %s139 = sphi 0, %s137
    %s140 = sphi 0, %s139
    %s154 = sphi 0, %s140
    %s158 = sphi 0, %s158
    %s160 = sphi 0, %s158
    %s161 = sphi 0, %s160
    %s175 = sphi 0, %s161
    %s179 = sphi 0, %s179
    %s181 = sphi 0, %s179
    %s182 = sphi 0, %s181
    %s196 = sphi 0, %s182
    %s200 = sphi 0, %s200
    %s202 = sphi 0, %s200
    %s203 = sphi 0, %s202
    %s217 = sphi 0, %s203
    %s221 = sphi 0, %s221
    %s223 = sphi 0, %s221
    %s224 = sphi 0, %s223
    %s238 = sphi 0, %s224
    %s242 = sphi 0, %s242
    %s244 = sphi 0, %s242
    %s245 = sphi 0, %s244
    %s259 = sphi 0, %s245
    %s263 = sphi 0, %s263
    %s265 = sphi 0, %s263
    %s266 = sphi 0, %s265
    %s280 = sphi 0, %s266
    %s284 = sphi 0, %s284
    %s286 = sphi 0, %s284
    %s287 = sphi 0, %s286
    %s301 = sphi 0, %s287
    %s307 = sphi 0, %s309
    %s310 = sphi 0, %s307
    %s311 = sphi 0, %s310
    %s327 = sphi 0, %s311
  $region4: #{net_forward.1} parent=0 // loop_header_branch
    %22 = sbr.rel (%p20) target = $region8
  $region5: #{net_forward.1} parent=0 // loop_body
    %s24 = ssub.s32 %s19, 1
    %s25 = ssub.s32 %s19, 2
    %s26 = sadd.s32 %s19, 1
    %s27 = ssub.s32 %s19, %s26
    %p28 = scmp.eq.s32.totalorder %s27, 0
    %s30 = sadd.s32 %s29, 1
    %s31 = scalar_select %p28, %s29, %s30
    %p34 = pneg %p28
    %p35 = scmp.eq.s32.totalorder %s19, 1
    %p36 = por %p34, %p35
    %p37 = scmp.ne.s32.totalorder %s29, %s32
    %p38 = scmp.eq.s32.totalorder %s19, 0
    %p39 = por %p37, %p38
    %p40 = scmp.ne.s32.totalorder %s29, %s32
    %p41 = scmp.eq.s32.totalorder %s24, 1
    %p42 = por %p40, %p41
    %p43 = scmp.ne.s32.totalorder %s32, %s33
    %p44 = scmp.eq.s32.totalorder %s24, 0
    %p45 = por %p43, %p44
    %p46 = scmp.ne.s32.totalorder %s32, %s33
    %p47 = scmp.eq.s32.totalorder %s25, 1
    %p48 = por %p46, %p47
    %p50 = scmp.ne.s32.totalorder %s33, %s49
    %p51 = scmp.eq.s32.totalorder %s25, 0
    %p52 = por %p50, %p51
    %s54 = sadd.s32 %s53, 1
    %p57 = scmp.eq.s32.totalorder %s19, 1
    %p58 = scmp.ne.s32.totalorder %s53, %s55
    %p59 = scmp.eq.s32.totalorder %s19, 0
    %p60 = por %p58, %p59
    %p61 = scmp.ne.s32.totalorder %s53, %s55
    %p62 = scmp.eq.s32.totalorder %s24, 1
    %p63 = por %p61, %p62
    %p64 = scmp.ne.s32.totalorder %s55, %s56
    %p65 = scmp.eq.s32.totalorder %s24, 0
    %p66 = por %p64, %p65
    %p67 = scmp.ne.s32.totalorder %s55, %s56
    %p68 = scmp.eq.s32.totalorder %s25, 1
    %p69 = por %p67, %p68
    %p71 = scmp.ne.s32.totalorder %s56, %s70
    %p72 = scmp.eq.s32.totalorder %s25, 0
    %p73 = por %p71, %p72
    %s75 = sadd.s32 %s74, 1
    %p78 = scmp.eq.s32.totalorder %s19, 1
    %p79 = scmp.ne.s32.totalorder %s74, %s76
    %p80 = scmp.eq.s32.totalorder %s19, 0
    %p81 = por %p79, %p80
    %p82 = scmp.ne.s32.totalorder %s74, %s76
    %p83 = scmp.eq.s32.totalorder %s24, 1
    %p84 = por %p82, %p83
    %p85 = scmp.ne.s32.totalorder %s76, %s77
    %p86 = scmp.eq.s32.totalorder %s24, 0
    %p87 = por %p85, %p86
    %p88 = scmp.ne.s32.totalorder %s76, %s77
    %p89 = scmp.eq.s32.totalorder %s25, 1
    %p90 = por %p88, %p89
    %p92 = scmp.ne.s32.totalorder %s77, %s91
    %p93 = scmp.eq.s32.totalorder %s25, 0
    %p94 = por %p92, %p93
    %s96 = sadd.s32 %s95, 1
    %p99 = scmp.eq.s32.totalorder %s19, 1
    %p100 = scmp.ne.s32.totalorder %s95, %s97
    %p101 = scmp.eq.s32.totalorder %s19, 0
    %p102 = por %p100, %p101
    %p103 = scmp.ne.s32.totalorder %s95, %s97
    %p104 = scmp.eq.s32.totalorder %s24, 1
    %p105 = por %p103, %p104
    %p106 = scmp.ne.s32.totalorder %s97, %s98
    %p107 = scmp.eq.s32.totalorder %s24, 0
    %p108 = por %p106, %p107
    %p109 = scmp.ne.s32.totalorder %s97, %s98
    %p110 = scmp.eq.s32.totalorder %s25, 1
    %p111 = por %p109, %p110
    %p113 = scmp.ne.s32.totalorder %s98, %s112
    %p114 = scmp.eq.s32.totalorder %s25, 0
    %p115 = por %p113, %p114
    %s117 = sadd.s32 %s116, 1
    %p120 = scmp.eq.s32.totalorder %s19, 1
    %p121 = scmp.ne.s32.totalorder %s116, %s118
    %p122 = scmp.eq.s32.totalorder %s19, 0
    %p123 = por %p121, %p122
    %p124 = scmp.ne.s32.totalorder %s116, %s118
    %p125 = scmp.eq.s32.totalorder %s24, 1
    %p126 = por %p124, %p125
    %p127 = scmp.ne.s32.totalorder %s118, %s119
    %p128 = scmp.eq.s32.totalorder %s24, 0
    %p129 = por %p127, %p128
    %p130 = scmp.ne.s32.totalorder %s118, %s119
    %p131 = scmp.eq.s32.totalorder %s25, 1
    %p132 = por %p130, %p131
    %p134 = scmp.ne.s32.totalorder %s119, %s133
    %p135 = scmp.eq.s32.totalorder %s25, 0
    %p136 = por %p134, %p135
    %s138 = sadd.s32 %s137, 1
    %p141 = scmp.eq.s32.totalorder %s19, 1
    %p142 = scmp.ne.s32.totalorder %s137, %s139
    %p143 = scmp.eq.s32.totalorder %s19, 0
    %p144 = por %p142, %p143
    %p145 = scmp.ne.s32.totalorder %s137, %s139
    %p146 = scmp.eq.s32.totalorder %s24, 1
    %p147 = por %p145, %p146
    %p148 = scmp.ne.s32.totalorder %s139, %s140
    %p149 = scmp.eq.s32.totalorder %s24, 0
    %p150 = por %p148, %p149
    %p151 = scmp.ne.s32.totalorder %s139, %s140
    %p152 = scmp.eq.s32.totalorder %s25, 1
    %p153 = por %p151, %p152
    %p155 = scmp.ne.s32.totalorder %s140, %s154
    %p156 = scmp.eq.s32.totalorder %s25, 0
    %p157 = por %p155, %p156
    %s159 = sadd.s32 %s158, 1
    %p162 = scmp.eq.s32.totalorder %s19, 1
    %p163 = scmp.ne.s32.totalorder %s158, %s160
    %p164 = scmp.eq.s32.totalorder %s19, 0
    %p165 = por %p163, %p164
    %p166 = scmp.ne.s32.totalorder %s158, %s160
    %p167 = scmp.eq.s32.totalorder %s24, 1
    %p168 = por %p166, %p167
    %p169 = scmp.ne.s32.totalorder %s160, %s161
    %p170 = scmp.eq.s32.totalorder %s24, 0
    %p171 = por %p169, %p170
    %p172 = scmp.ne.s32.totalorder %s160, %s161
    %p173 = scmp.eq.s32.totalorder %s25, 1
    %p174 = por %p172, %p173
    %p176 = scmp.ne.s32.totalorder %s161, %s175
    %p177 = scmp.eq.s32.totalorder %s25, 0
    %p178 = por %p176, %p177
    %s180 = sadd.s32 %s179, 1
    %p183 = scmp.eq.s32.totalorder %s19, 1
    %p184 = scmp.ne.s32.totalorder %s179, %s181
    %p185 = scmp.eq.s32.totalorder %s19, 0
    %p186 = por %p184, %p185
    %p187 = scmp.ne.s32.totalorder %s179, %s181
    %p188 = scmp.eq.s32.totalorder %s24, 1
    %p189 = por %p187, %p188
    %p190 = scmp.ne.s32.totalorder %s181, %s182
    %p191 = scmp.eq.s32.totalorder %s24, 0
    %p192 = por %p190, %p191
    %p193 = scmp.ne.s32.totalorder %s181, %s182
    %p194 = scmp.eq.s32.totalorder %s25, 1
    %p195 = por %p193, %p194
    %p197 = scmp.ne.s32.totalorder %s182, %s196
    %p198 = scmp.eq.s32.totalorder %s25, 0
    %p199 = por %p197, %p198
    %s201 = sadd.s32 %s200, 1
    %p204 = scmp.eq.s32.totalorder %s19, 1
    %p205 = scmp.ne.s32.totalorder %s200, %s202
    %p206 = scmp.eq.s32.totalorder %s19, 0
    %p207 = por %p205, %p206
    %p208 = scmp.ne.s32.totalorder %s200, %s202
    %p209 = scmp.eq.s32.totalorder %s24, 1
    %p210 = por %p208, %p209
    %p211 = scmp.ne.s32.totalorder %s202, %s203
    %p212 = scmp.eq.s32.totalorder %s24, 0
    %p213 = por %p211, %p212
    %p214 = scmp.ne.s32.totalorder %s202, %s203
    %p215 = scmp.eq.s32.totalorder %s25, 1
    %p216 = por %p214, %p215
    %p218 = scmp.ne.s32.totalorder %s203, %s217
    %p219 = scmp.eq.s32.totalorder %s25, 0
    %p220 = por %p218, %p219
    %s222 = sadd.s32 %s221, 1
    %p225 = scmp.eq.s32.totalorder %s19, 1
    %p226 = scmp.ne.s32.totalorder %s221, %s223
    %p227 = scmp.eq.s32.totalorder %s19, 0
    %p228 = por %p226, %p227
    %p229 = scmp.ne.s32.totalorder %s221, %s223
    %p230 = scmp.eq.s32.totalorder %s24, 1
    %p231 = por %p229, %p230
    %p232 = scmp.ne.s32.totalorder %s223, %s224
    %p233 = scmp.eq.s32.totalorder %s24, 0
    %p234 = por %p232, %p233
    %p235 = scmp.ne.s32.totalorder %s223, %s224
    %p236 = scmp.eq.s32.totalorder %s25, 1
    %p237 = por %p235, %p236
    %p239 = scmp.ne.s32.totalorder %s224, %s238
    %p240 = scmp.eq.s32.totalorder %s25, 0
    %p241 = por %p239, %p240
    %s243 = sadd.s32 %s242, 1
    %p246 = scmp.eq.s32.totalorder %s19, 1
    %p247 = scmp.ne.s32.totalorder %s242, %s244
    %p248 = scmp.eq.s32.totalorder %s19, 0
    %p249 = por %p247, %p248
    %p250 = scmp.ne.s32.totalorder %s242, %s244
    %p251 = scmp.eq.s32.totalorder %s24, 1
    %p252 = por %p250, %p251
    %p253 = scmp.ne.s32.totalorder %s244, %s245
    %p254 = scmp.eq.s32.totalorder %s24, 0
    %p255 = por %p253, %p254
    %p256 = scmp.ne.s32.totalorder %s244, %s245
    %p257 = scmp.eq.s32.totalorder %s25, 1
    %p258 = por %p256, %p257
    %p260 = scmp.ne.s32.totalorder %s245, %s259
    %p261 = scmp.eq.s32.totalorder %s25, 0
    %p262 = por %p260, %p261
    %s264 = sadd.s32 %s263, 1
    %p267 = scmp.eq.s32.totalorder %s19, 1
    %p268 = scmp.ne.s32.totalorder %s263, %s265
    %p269 = scmp.eq.s32.totalorder %s19, 0
    %p270 = por %p268, %p269
    %p271 = scmp.ne.s32.totalorder %s263, %s265
    %p272 = scmp.eq.s32.totalorder %s24, 1
    %p273 = por %p271, %p272
    %p274 = scmp.ne.s32.totalorder %s265, %s266
    %p275 = scmp.eq.s32.totalorder %s24, 0
    %p276 = por %p274, %p275
    %p277 = scmp.ne.s32.totalorder %s265, %s266
    %p278 = scmp.eq.s32.totalorder %s25, 1
    %p279 = por %p277, %p278
    %p281 = scmp.ne.s32.totalorder %s266, %s280
    %p282 = scmp.eq.s32.totalorder %s25, 0
    %p283 = por %p281, %p282
    %s285 = sadd.s32 %s284, 1
    %p288 = scmp.eq.s32.totalorder %s19, 1
    %p289 = scmp.ne.s32.totalorder %s284, %s286
    %p290 = scmp.eq.s32.totalorder %s19, 0
    %p291 = por %p289, %p290
    %p292 = scmp.ne.s32.totalorder %s284, %s286
    %p293 = scmp.eq.s32.totalorder %s24, 1
    %p294 = por %p292, %p293
    %p295 = scmp.ne.s32.totalorder %s286, %s287
    %p296 = scmp.eq.s32.totalorder %s24, 0
    %p297 = por %p295, %p296
    %p298 = scmp.ne.s32.totalorder %s286, %s287
    %p299 = scmp.eq.s32.totalorder %s25, 1
    %p300 = por %p298, %p299
    %p302 = scmp.ne.s32.totalorder %s287, %s301
    %p303 = scmp.eq.s32.totalorder %s25, 0
    %p304 = por %p302, %p303
    %s305 = ssub.s32 %s19, %s26
    %p306 = scmp.eq.s32.totalorder %s305, 0
    %s308 = sadd.s32 %s307, 1
    %s309 = scalar_select %p306, %s307, %s308
    %p312 = pneg %p306
    %p313 = scmp.eq.s32.totalorder %s19, 1
    %p314 = por %p312, %p313
    %p315 = scmp.ne.s32.totalorder %s307, %s310
    %p316 = scmp.eq.s32.totalorder %s19, 0
    %p317 = por %p315, %p316
    %p318 = scmp.ne.s32.totalorder %s307, %s310
    %p319 = scmp.eq.s32.totalorder %s24, 1
    %p320 = por %p318, %p319
    %p321 = scmp.ne.s32.totalorder %s310, %s311
    %p322 = scmp.eq.s32.totalorder %s24, 0
    %p323 = por %p321, %p322
    %p324 = scmp.ne.s32.totalorder %s310, %s311
    %p325 = scmp.eq.s32.totalorder %s25, 1
    %p326 = por %p324, %p325
    %p328 = scmp.ne.s32.totalorder %s311, %s327
    %p329 = scmp.eq.s32.totalorder %s25, 0
    %p330 = por %p328, %p329
    %p331 = scmp.le.s32.totalorder 1, %s19
    %p332 = scmp.lt.s32.totalorder %s19, 3
    %p333 = pnand %p331, %p332
    %p334 = pneg %p333
    // Predicated region
    $region9: #{net_forward.1} parent=5 // pred_check
      _
    $region10: #{net_forward.1} parent=5 // pred_check_branch
      %336 = sbr.rel (%p333) target = $region12
    $region11: #{net_forward.1} parent=5 // pred_region
      %s337 = ssub.s32 %s19, 1
      // Predicated region
      $region13: #{net_forward.1} parent=11 // pred_check
        %p338 = pneg %p66
      $region14: #{net_forward.1} parent=11 // pred_check_branch
        %340 = sbr.rel (%p338) target = $region16
      $region15: #{net_forward.1} parent=11 // pred_region
        _
      $region16: #{net_forward.1} parent=11 // pred_fallthru
        _
      // Predicated region
      $region17: #{net_forward.1} parent=11 // pred_check
        %p341 = pneg %p87
      $region18: #{net_forward.1} parent=11 // pred_check_branch
        %343 = sbr.rel (%p341) target = $region20
      $region19: #{net_forward.1} parent=11 // pred_region
        _
      $region20: #{net_forward.1} parent=11 // pred_fallthru
        _
      // Predicated region
      $region21: #{net_forward.1} parent=11 // pred_check
        %p344 = pneg %p108
      $region22: #{net_forward.1} parent=11 // pred_check_branch
        %346 = sbr.rel (%p344) target = $region24
      $region23: #{net_forward.1} parent=11 // pred_region
        _
      $region24: #{net_forward.1} parent=11 // pred_fallthru
        _
      // Predicated region
      $region25: #{net_forward.1} parent=11 // pred_check
        %p347 = pneg %p129
      $region26: #{net_forward.1} parent=11 // pred_check_branch
        %349 = sbr.rel (%p347) target = $region28
      $region27: #{net_forward.1} parent=11 // pred_region
        _
      $region28: #{net_forward.1} parent=11 // pred_fallthru
        _
      // Predicated region
      $region29: #{net_forward.1} parent=11 // pred_check
        %p350 = pneg %p150
      $region30: #{net_forward.1} parent=11 // pred_check_branch
        %352 = sbr.rel (%p350) target = $region32
      $region31: #{net_forward.1} parent=11 // pred_region
        _
      $region32: #{net_forward.1} parent=11 // pred_fallthru
        _
      // Predicated region
      $region33: #{net_forward.1} parent=11 // pred_check
        %p353 = pneg %p171
      $region34: #{net_forward.1} parent=11 // pred_check_branch
        %355 = sbr.rel (%p353) target = $region36
      $region35: #{net_forward.1} parent=11 // pred_region
        _
      $region36: #{net_forward.1} parent=11 // pred_fallthru
        _
      // Predicated region
      $region37: #{net_forward.1} parent=11 // pred_check
        %p356 = pneg %p192
      $region38: #{net_forward.1} parent=11 // pred_check_branch
        %358 = sbr.rel (%p356) target = $region40
      $region39: #{net_forward.1} parent=11 // pred_region
        _
      $region40: #{net_forward.1} parent=11 // pred_fallthru
        _
      // Predicated region
      $region41: #{net_forward.1} parent=11 // pred_check
        %p359 = pneg %p213
      $region42: #{net_forward.1} parent=11 // pred_check_branch
        %361 = sbr.rel (%p359) target = $region44
      $region43: #{net_forward.1} parent=11 // pred_region
        _
      $region44: #{net_forward.1} parent=11 // pred_fallthru
        _
      // Predicated region
      $region45: #{net_forward.1} parent=11 // pred_check
        %p362 = pneg %p234
      $region46: #{net_forward.1} parent=11 // pred_check_branch
        %364 = sbr.rel (%p362) target = $region48
      $region47: #{net_forward.1} parent=11 // pred_region
        _
      $region48: #{net_forward.1} parent=11 // pred_fallthru
        _
      // Predicated region
      $region49: #{net_forward.1} parent=11 // pred_check
        %p365 = pneg %p255
      $region50: #{net_forward.1} parent=11 // pred_check_branch
        %367 = sbr.rel (%p365) target = $region52
      $region51: #{net_forward.1} parent=11 // pred_region
        _
      $region52: #{net_forward.1} parent=11 // pred_fallthru
        _
      // Predicated region
      $region53: #{net_forward.1} parent=11 // pred_check
        %p368 = pneg %p276
      $region54: #{net_forward.1} parent=11 // pred_check_branch
        %370 = sbr.rel (%p368) target = $region56
      $region55: #{net_forward.1} parent=11 // pred_region
        _
      $region56: #{net_forward.1} parent=11 // pred_fallthru
        _
      // Predicated region
      $region57: #{net_forward.1} parent=11 // pred_check
        %p371 = pneg %p297
      $region58: #{net_forward.1} parent=11 // pred_check_branch
        %373 = sbr.rel (%p371) target = $region60
      $region59: #{net_forward.1} parent=11 // pred_region
        _
      $region60: #{net_forward.1} parent=11 // pred_fallthru
        _
    $region12: #{net_forward.1} parent=5 // pred_fallthru
      _
    %p374 = scmp.lt.s32.totalorder %s19, 2
    // Predicated region
    $region61: #{net_forward.1} parent=5 // pred_check
      %p375 = pneg %p374
    $region62: #{net_forward.1} parent=5 // pred_check_branch
      %377 = sbr.rel (%p375) target = $region64
    $region63: #{net_forward.1} parent=5 // pred_region
      // Predicated region
      $region65: #{net_forward.1} parent=63 // pred_check
        %p378 = pneg %p39
      $region66: #{net_forward.1} parent=63 // pred_check_branch
        %380 = sbr.rel (%p378) target = $region68
      $region67: #{net_forward.1} parent=63 // pred_region
        %s381 = smul.u32 16, %s19
        %p382 = scmp.lt.s32.totalorder %s381, 31
        %s383 = scalar_select %p382, %s381, 31
        %s384 = smul.addr %s383, 7
        %s385 = smul.addr %s384, 4
        %s386 = scalar_lea.vmem %s0, %s385
        %s387 = smul.u32 16, %s19
      $region68: #{net_forward.1} parent=63 // pred_fallthru
        _
    $region64: #{net_forward.1} parent=5 // pred_fallthru
      _
    %p388 = scmp.le.s32.totalorder 1, %s19
    %p389 = scmp.lt.s32.totalorder %s19, 3
    %p390 = pnand %p388, %p389
    %p391 = pneg %p390
    // Predicated region
    $region69: #{net_forward.1} parent=5 // pred_check
      _
    $region70: #{net_forward.1} parent=5 // pred_check_branch
      %393 = sbr.rel (%p390) target = $region72
    $region71: #{net_forward.1} parent=5 // pred_region
      %s394 = ssub.s32 %s19, 1
      %s395 = smul.u32 16, %s24
      %p396 = scmp.lt.s32.totalorder %s395, 31
      %s397 = scalar_select %p396, %s395, 31
      %s398 = smul.addr %s397, 7
      %s399 = smul.addr %s398, 4
      %s400 = scalar_lea.vmem %s0, %s399
      %p401 = pneg %p45
      %p402 = pneg %p42
      %p403 = pneg %p66
      %p404 = pneg %p63
      %p405 = pneg %p87
      %p406 = pneg %p84
      %p407 = pneg %p108
      %p408 = pneg %p105
      %p409 = pneg %p129
      %p410 = pneg %p126
      %p411 = pneg %p150
      %p412 = pneg %p147
      %p413 = pneg %p171
      %p414 = pneg %p168
      %p415 = pneg %p192
      %p416 = pneg %p189
      %p417 = pneg %p213
      %p418 = pneg %p210
      %p419 = pneg %p234
      %p420 = pneg %p231
      %p421 = pneg %p255
      %p422 = pneg %p252
      %p423 = pneg %p276
      %p424 = pneg %p273
      %p425 = pneg %p297
      %p426 = pneg %p294
      %p427 = pneg %p323
      %p428 = pneg %p320
      %s429 = smul.u32 16, %s24
      %p430 = scmp.lt.s32.totalorder %s429, 31
      %s431 = scalar_select %p430, %s429, 31
      %s432 = smul.addr %s431, 8
      %s433 = scalar_lea.vmem %s13, %s432
      %s434 = smul.u32 16, %s24
      %p435 = scmp.lt.s32.totalorder %s434, 31
      %s436 = scalar_select %p435, %s434, 31
      %s437 = smul.addr %s436, 7
      %s438 = smul.addr %s437, 4
      %s439 = scalar_lea.vmem %s0, %s438
      %s440 = smul.u32 16, %s24
      %s441 = smul.u32 16, %s24
      %p442 = scmp.lt.s32.totalorder %s441, 31
      %s443 = scalar_select %p442, %s441, 31
      %s444 = smul.addr %s443, 8
      %s445 = scalar_lea.vmem %s13, %s444
      %s446 = smul.u32 16, %s24
      %v448 = vld [vmem:[%s439] sm:$0xff]
      %v449 = vld [vmem:[%s439 + $0x8] sm:$0xff]
      %v450 = vld [vmem:[%s439 + $0x10] sm:$0xff]
      %v451 = vld [vmem:[%s439 + $0x18] sm:$0xf]
      %v452 = vld [vmem:[%s439 + $0x1c] sm:$0xff]
      %v453 = vld [vmem:[%s439 + $0x24] sm:$0xff]
      %v454 = vld [vmem:[%s439 + $0x2c] sm:$0xff]
      %v455 = vld [vmem:[%s439 + $0x34] sm:$0xf]
      %v456 = vld [vmem:[%s439 + $0x38] sm:$0xff]
      %v457 = vld [vmem:[%s439 + $0x40] sm:$0xff]
      %v458 = vld [vmem:[%s439 + $0x48] sm:$0xff]
      %v459 = vld [vmem:[%s439 + $0x50] sm:$0xf]
      %v460 = vld [vmem:[%s439 + $0x54] sm:$0xff]
      %v461 = vld [vmem:[%s439 + $0x5c] sm:$0xff]
      %v462 = vld [vmem:[%s439 + $0x64] sm:$0xff]
      %v463 = vld [vmem:[%s439 + $0x6c] sm:$0xf]
      %v464 = vld [vmem:[%s439 + $0x70] sm:$0xff]
      %v465 = vld [vmem:[%s439 + $0x78] sm:$0xff]
      %v466 = vld [vmem:[%s439 + $0x80] sm:$0xff]
      %v467 = vld [vmem:[%s439 + $0x88] sm:$0xf]
      %v468 = vld [vmem:[%s439 + $0x8c] sm:$0xff]
      %v469 = vld [vmem:[%s439 + $0x94] sm:$0xff]
      %v470 = vld [vmem:[%s439 + $0x9c] sm:$0xff]
      %v471 = vld [vmem:[%s439 + $0xa4] sm:$0xf]
      %v472 = vld [vmem:[%s439 + $0xa8] sm:$0xff]
      %v473 = vld [vmem:[%s439 + $0xb0] sm:$0xff]
      %v474 = vld [vmem:[%s439 + $0xb8] sm:$0xff]
      %v475 = vld [vmem:[%s439 + $0xc0] sm:$0xf]
      %v476 = vld [vmem:[%s439 + $0xc4] sm:$0xff]
      %v477 = vld [vmem:[%s439 + $0xcc] sm:$0xff]
      %v478 = vld [vmem:[%s439 + $0xd4] sm:$0xff]
      %v479 = vld [vmem:[%s439 + $0xdc] sm:$0xf]
      %v480 = vld [vmem:[%s439 + $0xe0] sm:$0xff]
      %v481 = vld [vmem:[%s439 + $0xe8] sm:$0xff]
      %v482 = vld [vmem:[%s439 + $0xf0] sm:$0xff]
      %v483 = vld [vmem:[%s439 + $0xf8] sm:$0xf]
      %v484 = vld [vmem:[%s439 + $0xfc] sm:$0xff]
      %v485 = vld [vmem:[%s439 + $0x104] sm:$0xff]
      %v486 = vld [vmem:[%s439 + $0x10c] sm:$0xff]
      %v487 = vld [vmem:[%s439 + $0x114] sm:$0xf]
      %v488 = vld [vmem:[%s439 + $0x118] sm:$0xff]
      %v489 = vld [vmem:[%s439 + $0x120] sm:$0xff]
      %v490 = vld [vmem:[%s439 + $0x128] sm:$0xff]
      %v491 = vld [vmem:[%s439 + $0x130] sm:$0xf]
      %v492 = vld [vmem:[%s439 + $0x134] sm:$0xff]
      %v493 = vld [vmem:[%s439 + $0x13c] sm:$0xff]
      %v494 = vld [vmem:[%s439 + $0x144] sm:$0xff]
      %v495 = vld [vmem:[%s439 + $0x14c] sm:$0xf]
      %v496 = vld [vmem:[%s439 + $0x150] sm:$0xff]
      %v497 = vld [vmem:[%s439 + $0x158] sm:$0xff]
      %v498 = vld [vmem:[%s439 + $0x160] sm:$0xff]
      %v499 = vld [vmem:[%s439 + $0x168] sm:$0xf]
      %v500 = vld [vmem:[%s439 + $0x16c] sm:$0xff]
      %v501 = vld [vmem:[%s439 + $0x174] sm:$0xff]
      %v502 = vld [vmem:[%s439 + $0x17c] sm:$0xff]
      %v503 = vld [vmem:[%s439 + $0x184] sm:$0xf]
      %v504 = vld [vmem:[%s439 + $0x188] sm:$0xff]
      %v505 = vld [vmem:[%s439 + $0x190] sm:$0xff]
      %v506 = vld [vmem:[%s439 + $0x198] sm:$0xff]
      %v507 = vld [vmem:[%s439 + $0x1a0] sm:$0xf]
      %v508 = vld [vmem:[%s439 + $0x1a4] sm:$0xff]
      %v509 = vld [vmem:[%s439 + $0x1ac] sm:$0xff]
      %v510 = vld [vmem:[%s439 + $0x1b4] sm:$0xff]
      %v511 = vld [vmem:[%s439 + $0x1bc] sm:$0xf]
      %v512 = vld [vmem:[%s1] sm:$0xff]
      %v513 = vld [vmem:[%s1 + $0x8] sm:$0xff]
      %v514 = vld [vmem:[%s1 + $0x10] sm:$0xff]
      %v515 = vld [vmem:[%s1 + $0x18] sm:$0xff]
      %v516 = vld [vmem:[%s1 + $0x20] sm:$0xff]
      %v517 = vld [vmem:[%s1 + $0x28] sm:$0xff]
      %v518 = vld [vmem:[%s1 + $0x30] sm:$0xff]
      %v519 = vld [vmem:[%s1 + $0x38] sm:$0xff]
      %v520 = vld [vmem:[%s1 + $0x40] sm:$0xff]
      %v521 = vld [vmem:[%s1 + $0x48] sm:$0xff]
      %v522 = vld [vmem:[%s1 + $0x50] sm:$0xff]
      %v523 = vld [vmem:[%s1 + $0x58] sm:$0xff]
      %v524 = vld [vmem:[%s1 + $0x60] sm:$0xff]
      %v525 = vld [vmem:[%s1 + $0x68] sm:$0xff]
      %v526 = vld [vmem:[%s1 + $0x70] sm:$0xff]
      %v527 = vld [vmem:[%s1 + $0x78] sm:$0xff]
      %v528 = vld [vmem:[%s1 + $0x80] sm:$0xff]
      %v529 = vld [vmem:[%s1 + $0x88] sm:$0xff]
      %v530 = vld [vmem:[%s1 + $0x90] sm:$0xff]
      %v531 = vld [vmem:[%s1 + $0x98] sm:$0xff]
      %v532 = vld [vmem:[%s1 + $0xa0] sm:$0xff]
      %v533 = vld [vmem:[%s1 + $0xa8] sm:$0xff]
      %v534 = vld [vmem:[%s1 + $0xb0] sm:$0xff]
      %v535 = vld [vmem:[%s1 + $0xb8] sm:$0xff]
      %v536 = vld [vmem:[%s1 + $0xc0] sm:$0xff]
      %v537 = vld [vmem:[%s1 + $0xc8] sm:$0xff]
      %v538 = vld [vmem:[%s1 + $0xd0] sm:$0xff]
      %v539 = vld [vmem:[%s1 + $0xd8] sm:$0xff]
      %v540 = vld [vmem:[%s1 + $0xe0] sm:$0xff]
      %v541 = vld [vmem:[%s1 + $0xe8] sm:$0xff]
      %v542 = vld [vmem:[%s1 + $0xf0] sm:$0xff]
      %v543 = vld [vmem:[%s1 + $0xf8] sm:$0xff]
      %v544 = vld [vmem:[%s1 + $0x100] sm:$0xff]
      %v545 = vld [vmem:[%s1 + $0x108] sm:$0xff]
      %v546 = vld [vmem:[%s1 + $0x110] sm:$0xff]
      %v547 = vld [vmem:[%s1 + $0x118] sm:$0xff]
      %v548 = vld [vmem:[%s1 + $0x120] sm:$0xff]
      %v549 = vld [vmem:[%s1 + $0x128] sm:$0xff]
      %v550 = vld [vmem:[%s1 + $0x130] sm:$0xff]
      %v551 = vld [vmem:[%s1 + $0x138] sm:$0xff]
      %v552 = vld [vmem:[%s1 + $0x140] sm:$0xff]
      %v553 = vld [vmem:[%s1 + $0x148] sm:$0xff]
      %v554 = vld [vmem:[%s1 + $0x150] sm:$0xff]
      %v555 = vld [vmem:[%s1 + $0x158] sm:$0xff]
      %v556 = vld [vmem:[%s1 + $0x160] sm:$0xff]
      %v557 = vld [vmem:[%s1 + $0x168] sm:$0xff]
      %v558 = vld [vmem:[%s1 + $0x170] sm:$0xff]
      %v559 = vld [vmem:[%s1 + $0x178] sm:$0xff]
      %v560 = vld [vmem:[%s1 + $0x180] sm:$0xff]
      %v561 = vld [vmem:[%s1 + $0x188] sm:$0xff]
      %v562 = vld [vmem:[%s1 + $0x190] sm:$0xff]
      %v563 = vld [vmem:[%s1 + $0x198] sm:$0xff]
      %v564 = vld [vmem:[%s1 + $0x1a0] sm:$0xff]
      %v565 = vld [vmem:[%s1 + $0x1a8] sm:$0xff]
      %v566 = vld [vmem:[%s1 + $0x1b0] sm:$0xff]
      %v567 = vld [vmem:[%s1 + $0x1b8] sm:$0xff]
      %v568 = vld [vmem:[%s1 + $0x1c0] sm:$0xff]
      %v569 = vld [vmem:[%s1 + $0x1c8] sm:$0xff]
      %v570 = vld [vmem:[%s1 + $0x1d0] sm:$0xff]
      %v571 = vld [vmem:[%s1 + $0x1d8] sm:$0xff]
      %v572 = vld [vmem:[%s1 + $0x1e0] sm:$0xff]
      %v573 = vld [vmem:[%s1 + $0x1e8] sm:$0xff]
      %v574 = vld [vmem:[%s1 + $0x1f0] sm:$0xff]
      %v575 = vld [vmem:[%s1 + $0x1f8] sm:$0xff]
      %v576 = vld [vmem:[%s1 + $0x200] sm:$0xff]
      %v577 = vld [vmem:[%s1 + $0x208] sm:$0xff]
      %v578 = vld [vmem:[%s1 + $0x210] sm:$0xff]
      %v579 = vld [vmem:[%s1 + $0x218] sm:$0xff]
      %v580 = vld [vmem:[%s1 + $0x220] sm:$0xff]
      %v581 = vld [vmem:[%s1 + $0x228] sm:$0xff]
      %v582 = vld [vmem:[%s1 + $0x230] sm:$0xff]
      %v583 = vld [vmem:[%s1 + $0x238] sm:$0xff]
      %v584 = vld [vmem:[%s1 + $0x240] sm:$0xff]
      %v585 = vld [vmem:[%s1 + $0x248] sm:$0xff]
      %v586 = vld [vmem:[%s1 + $0x250] sm:$0xff]
      %v587 = vld [vmem:[%s1 + $0x258] sm:$0xff]
      %v588 = vld [vmem:[%s1 + $0x260] sm:$0xff]
      %v589 = vld [vmem:[%s1 + $0x268] sm:$0xff]
      %v590 = vld [vmem:[%s1 + $0x270] sm:$0xff]
      %v591 = vld [vmem:[%s1 + $0x278] sm:$0xff]
      %v592 = vld [vmem:[%s1 + $0x280] sm:$0xff]
      %v593 = vld [vmem:[%s1 + $0x288] sm:$0xff]
      %v594 = vld [vmem:[%s1 + $0x290] sm:$0xff]
      %v595 = vld [vmem:[%s1 + $0x298] sm:$0xff]
      %v596 = vld [vmem:[%s1 + $0x2a0] sm:$0xff]
      %v597 = vld [vmem:[%s1 + $0x2a8] sm:$0xff]
      %v598 = vld [vmem:[%s1 + $0x2b0] sm:$0xff]
      %v599 = vld [vmem:[%s1 + $0x2b8] sm:$0xff]
      %v600 = vld [vmem:[%s1 + $0x2c0] sm:$0xff]
      %v601 = vld [vmem:[%s1 + $0x2c8] sm:$0xff]
      %v602 = vld [vmem:[%s1 + $0x2d0] sm:$0xff]
      %v603 = vld [vmem:[%s1 + $0x2d8] sm:$0xff]
      %v604 = vld [vmem:[%s1 + $0x2e0] sm:$0xff]
      %v605 = vld [vmem:[%s1 + $0x2e8] sm:$0xff]
      %v606 = vld [vmem:[%s1 + $0x2f0] sm:$0xff]
      %v607 = vld [vmem:[%s1 + $0x2f8] sm:$0xff]
      %v608 = vld [vmem:[%s1 + $0x300] sm:$0xff]
      %v609 = vld [vmem:[%s1 + $0x308] sm:$0xff]
      %v610 = vld [vmem:[%s1 + $0x310] sm:$0xff]
      %v611 = vld [vmem:[%s1 + $0x318] sm:$0xff]
      %v612 = vld [vmem:[%s1 + $0x320] sm:$0xff]
      %v613 = vld [vmem:[%s1 + $0x328] sm:$0xff]
      %v614 = vld [vmem:[%s1 + $0x330] sm:$0xff]
      %v615 = vld [vmem:[%s1 + $0x338] sm:$0xff]
      %v616 = vld [vmem:[%s1 + $0x340] sm:$0xff]
      %v617 = vld [vmem:[%s1 + $0x348] sm:$0xff]
      %v618 = vld [vmem:[%s1 + $0x350] sm:$0xff]
      %v619 = vld [vmem:[%s1 + $0x358] sm:$0xff]
      %v620 = vld [vmem:[%s1 + $0x360] sm:$0xff]
      %v621 = vld [vmem:[%s1 + $0x368] sm:$0xff]
      %v622 = vld [vmem:[%s1 + $0x370] sm:$0xff]
      %v623 = vld [vmem:[%s1 + $0x378] sm:$0xff]
      %v624 = vld [vmem:[%s1 + $0x380] sm:$0xff]
      %v625 = vld [vmem:[%s1 + $0x388] sm:$0xff]
      %v626 = vld [vmem:[%s1 + $0x390] sm:$0xff]
      %v627 = vld [vmem:[%s1 + $0x398] sm:$0xff]
      %v628 = vld [vmem:[%s1 + $0x3a0] sm:$0xff]
      %v629 = vld [vmem:[%s1 + $0x3a8] sm:$0xff]
      %v630 = vld [vmem:[%s1 + $0x3b0] sm:$0xff]
      %v631 = vld [vmem:[%s1 + $0x3b8] sm:$0xff]
      %v632 = vld [vmem:[%s1 + $0x3c0] sm:$0xff]
      %v633 = vld [vmem:[%s1 + $0x3c8] sm:$0xff]
      %v634 = vld [vmem:[%s1 + $0x3d0] sm:$0xff]
      %v635 = vld [vmem:[%s1 + $0x3d8] sm:$0xff]
      %v636 = vld [vmem:[%s1 + $0x3e0] sm:$0xff]
      %v637 = vld [vmem:[%s1 + $0x3e8] sm:$0xff]
      %v638 = vld [vmem:[%s1 + $0x3f0] sm:$0xff]
      %v639 = vld [vmem:[%s1 + $0x3f8] sm:$0xff]
      %v640 = vld [vmem:[%s1 + $0x400] sm:$0xff]
      %v641 = vld [vmem:[%s1 + $0x408] sm:$0xff]
      %v642 = vld [vmem:[%s1 + $0x410] sm:$0xff]
      %v643 = vld [vmem:[%s1 + $0x418] sm:$0xff]
      %v644 = vld [vmem:[%s1 + $0x420] sm:$0xff]
      %v645 = vld [vmem:[%s1 + $0x428] sm:$0xff]
      %v646 = vld [vmem:[%s1 + $0x430] sm:$0xff]
      %v647 = vld [vmem:[%s1 + $0x438] sm:$0xff]
      %v648 = vld [vmem:[%s1 + $0x440] sm:$0xff]
      %v649 = vld [vmem:[%s1 + $0x448] sm:$0xff]
      %v650 = vld [vmem:[%s1 + $0x450] sm:$0xff]
      %v651 = vld [vmem:[%s1 + $0x458] sm:$0xff]
      %v652 = vld [vmem:[%s1 + $0x460] sm:$0xff]
      %v653 = vld [vmem:[%s1 + $0x468] sm:$0xff]
      %v654 = vld [vmem:[%s1 + $0x470] sm:$0xff]
      %v655 = vld [vmem:[%s1 + $0x478] sm:$0xff]
      %v656 = vld [vmem:[%s1 + $0x480] sm:$0xff]
      %v657 = vld [vmem:[%s1 + $0x488] sm:$0xff]
      %v658 = vld [vmem:[%s1 + $0x490] sm:$0xff]
      %v659 = vld [vmem:[%s1 + $0x498] sm:$0xff]
      %v660 = vld [vmem:[%s1 + $0x4a0] sm:$0xff]
      %v661 = vld [vmem:[%s1 + $0x4a8] sm:$0xff]
      %v662 = vld [vmem:[%s1 + $0x4b0] sm:$0xff]
      %v663 = vld [vmem:[%s1 + $0x4b8] sm:$0xff]
      %v664 = vld [vmem:[%s1 + $0x4c0] sm:$0xff]
      %v665 = vld [vmem:[%s1 + $0x4c8] sm:$0xff]
      %v666 = vld [vmem:[%s1 + $0x4d0] sm:$0xff]
      %v667 = vld [vmem:[%s1 + $0x4d8] sm:$0xff]
      %v668 = vld [vmem:[%s1 + $0x4e0] sm:$0xff]
      %v669 = vld [vmem:[%s1 + $0x4e8] sm:$0xff]
      %v670 = vld [vmem:[%s1 + $0x4f0] sm:$0xff]
      %v671 = vld [vmem:[%s1 + $0x4f8] sm:$0xff]
      %v672 = vld [vmem:[%s1 + $0x500] sm:$0xff]
      %v673 = vld [vmem:[%s1 + $0x508] sm:$0xff]
      %v674 = vld [vmem:[%s1 + $0x510] sm:$0xff]
      %v675 = vld [vmem:[%s1 + $0x518] sm:$0xff]
      %v676 = vld [vmem:[%s1 + $0x520] sm:$0xff]
      %v677 = vld [vmem:[%s1 + $0x528] sm:$0xff]
      %v678 = vld [vmem:[%s1 + $0x530] sm:$0xff]
      %v679 = vld [vmem:[%s1 + $0x538] sm:$0xff]
      %v680 = vld [vmem:[%s1 + $0x540] sm:$0xff]
      %v681 = vld [vmem:[%s1 + $0x548] sm:$0xff]
      %v682 = vld [vmem:[%s1 + $0x550] sm:$0xff]
      %v683 = vld [vmem:[%s1 + $0x558] sm:$0xff]
      %v684 = vld [vmem:[%s1 + $0x560] sm:$0xff]
      %v685 = vld [vmem:[%s1 + $0x568] sm:$0xff]
      %v686 = vld [vmem:[%s1 + $0x570] sm:$0xff]
      %v687 = vld [vmem:[%s1 + $0x578] sm:$0xff]
      %v688 = vld [vmem:[%s1 + $0x580] sm:$0xff]
      %v689 = vld [vmem:[%s1 + $0x588] sm:$0xff]
      %v690 = vld [vmem:[%s1 + $0x590] sm:$0xff]
      %v691 = vld [vmem:[%s1 + $0x598] sm:$0xff]
      %v692 = vld [vmem:[%s1 + $0x5a0] sm:$0xff]
      %v693 = vld [vmem:[%s1 + $0x5a8] sm:$0xff]
      %v694 = vld [vmem:[%s1 + $0x5b0] sm:$0xff]
      %v695 = vld [vmem:[%s1 + $0x5b8] sm:$0xff]
      %v696 = vld [vmem:[%s1 + $0x5c0] sm:$0xff]
      %v697 = vld [vmem:[%s1 + $0x5c8] sm:$0xff]
      %v698 = vld [vmem:[%s1 + $0x5d0] sm:$0xff]
      %v699 = vld [vmem:[%s1 + $0x5d8] sm:$0xff]
      %v700 = vld [vmem:[%s1 + $0x5e0] sm:$0xff]
      %v701 = vld [vmem:[%s1 + $0x5e8] sm:$0xff]
      %v702 = vld [vmem:[%s1 + $0x5f0] sm:$0xff]
      %v703 = vld [vmem:[%s1 + $0x5f8] sm:$0xff]
      %v704 = vld [vmem:[%s1 + $0x600] sm:$0xff]
      %v705 = vld [vmem:[%s1 + $0x608] sm:$0xff]
      %v706 = vld [vmem:[%s1 + $0x610] sm:$0xff]
      %v707 = vld [vmem:[%s1 + $0x618] sm:$0xff]
      %v708 = vld [vmem:[%s7] sm:$0xf]
      %v710 = vperm.slane %v708, 0
      %v711 = vperm.slane %v708, 1
      %v712 = vperm.slane %v708, 2
      %v713 = vperm.slane %v708, 3
      %v782 = vunpack.c.l.b16 %v448
      %v783 = vunpack.c.h.b16 %v448
      %v784 = vunpack.c.l.b16 %v449
      %v785 = vunpack.c.h.b16 %v449
      %v786 = vunpack.c.l.b16 %v450
      %v787 = vunpack.c.h.b16 %v450
      %v788 = vunpack.c.l.b16 %v451
      %v789 = vunpack.c.l.b16 %v452
      %v790 = vunpack.c.h.b16 %v452
      %v791 = vunpack.c.l.b16 %v453
      %v792 = vunpack.c.h.b16 %v453
      %v793 = vunpack.c.l.b16 %v454
      %v794 = vunpack.c.h.b16 %v454
      %v795 = vunpack.c.l.b16 %v455
      %v796 = vunpack.c.l.b16 %v456
      %v797 = vunpack.c.h.b16 %v456
      %v798 = vunpack.c.l.b16 %v457
      %v799 = vunpack.c.h.b16 %v457
      %v800 = vunpack.c.l.b16 %v458
      %v801 = vunpack.c.h.b16 %v458
      %v802 = vunpack.c.l.b16 %v459
      %v803 = vunpack.c.l.b16 %v460
      %v804 = vunpack.c.h.b16 %v460
      %v805 = vunpack.c.l.b16 %v461
      %v806 = vunpack.c.h.b16 %v461
      %v807 = vunpack.c.l.b16 %v462
      %v808 = vunpack.c.h.b16 %v462
      %v809 = vunpack.c.l.b16 %v463
      %v810 = vunpack.c.l.b16 %v464
      %v811 = vunpack.c.h.b16 %v464
      %v812 = vunpack.c.l.b16 %v465
      %v813 = vunpack.c.h.b16 %v465
      %v814 = vunpack.c.l.b16 %v466
      %v815 = vunpack.c.h.b16 %v466
      %v816 = vunpack.c.l.b16 %v467
      %v817 = vunpack.c.l.b16 %v468
      %v818 = vunpack.c.h.b16 %v468
      %v819 = vunpack.c.l.b16 %v469
      %v820 = vunpack.c.h.b16 %v469
      %v821 = vunpack.c.l.b16 %v470
      %v822 = vunpack.c.h.b16 %v470
      %v823 = vunpack.c.l.b16 %v471
      %v824 = vunpack.c.l.b16 %v472
      %v825 = vunpack.c.h.b16 %v472
      %v826 = vunpack.c.l.b16 %v473
      %v827 = vunpack.c.h.b16 %v473
      %v828 = vunpack.c.l.b16 %v474
      %v829 = vunpack.c.h.b16 %v474
      %v830 = vunpack.c.l.b16 %v475
      %v831 = vunpack.c.l.b16 %v476
      %v832 = vunpack.c.h.b16 %v476
      %v833 = vunpack.c.l.b16 %v477
      %v834 = vunpack.c.h.b16 %v477
      %v835 = vunpack.c.l.b16 %v478
      %v836 = vunpack.c.h.b16 %v478
      %v837 = vunpack.c.l.b16 %v479
      %v838 = vunpack.c.l.b16 %v480
      %v839 = vunpack.c.h.b16 %v480
      %v840 = vunpack.c.l.b16 %v481
      %v841 = vunpack.c.h.b16 %v481
      %v842 = vunpack.c.l.b16 %v482
      %v843 = vunpack.c.h.b16 %v482
      %v844 = vunpack.c.l.b16 %v483
      %v845 = vunpack.c.l.b16 %v484
      %v846 = vunpack.c.h.b16 %v484
      %v847 = vunpack.c.l.b16 %v485
      %v848 = vunpack.c.h.b16 %v485
      %v849 = vunpack.c.l.b16 %v486
      %v850 = vunpack.c.h.b16 %v486
      %v851 = vunpack.c.l.b16 %v487
      %v852 = vunpack.c.l.b16 %v488
      %v853 = vunpack.c.h.b16 %v488
      %v854 = vunpack.c.l.b16 %v489
      %v855 = vunpack.c.h.b16 %v489
      %v856 = vunpack.c.l.b16 %v490
      %v857 = vunpack.c.h.b16 %v490
      %v858 = vunpack.c.l.b16 %v491
      %v859 = vunpack.c.l.b16 %v492
      %v860 = vunpack.c.h.b16 %v492
      %v861 = vunpack.c.l.b16 %v493
      %v862 = vunpack.c.h.b16 %v493
      %v863 = vunpack.c.l.b16 %v494
      %v864 = vunpack.c.h.b16 %v494
      %v865 = vunpack.c.l.b16 %v495
      %v866 = vunpack.c.l.b16 %v496
      %v867 = vunpack.c.h.b16 %v496
      %v868 = vunpack.c.l.b16 %v497
      %v869 = vunpack.c.h.b16 %v497
      %v870 = vunpack.c.l.b16 %v498
      %v871 = vunpack.c.h.b16 %v498
      %v872 = vunpack.c.l.b16 %v499
      %v873 = vunpack.c.l.b16 %v500
      %v874 = vunpack.c.h.b16 %v500
      %v875 = vunpack.c.l.b16 %v501
      %v876 = vunpack.c.h.b16 %v501
      %v877 = vunpack.c.l.b16 %v502
      %v878 = vunpack.c.h.b16 %v502
      %v879 = vunpack.c.l.b16 %v503
      %v880 = vunpack.c.l.b16 %v504
      %v881 = vunpack.c.h.b16 %v504
      %v882 = vunpack.c.l.b16 %v505
      %v883 = vunpack.c.h.b16 %v505
      %v884 = vunpack.c.l.b16 %v506
      %v885 = vunpack.c.h.b16 %v506
      %v886 = vunpack.c.l.b16 %v507
      %v887 = vunpack.c.l.b16 %v508
      %v888 = vunpack.c.h.b16 %v508
      %v889 = vunpack.c.l.b16 %v509
      %v890 = vunpack.c.h.b16 %v509
      %v891 = vunpack.c.l.b16 %v510
      %v892 = vunpack.c.h.b16 %v510
      %v893 = vunpack.c.l.b16 %v511
      %v894 = vpack.c.b16 %v789, %v782
      %v895 = vpack.c.b16 %v790, %v783
      %v896 = vpack.c.b16 %v791, %v784
      %v897 = vpack.c.b16 %v792, %v785
      %v898 = vpack.c.b16 %v793, %v786
      %v899 = vpack.c.b16 %v794, %v787
      %v900 = vpack.c.b16 %v795, %v788
      %v901 = vpack.c.b16 %v803, %v796
      %v902 = vpack.c.b16 %v804, %v797
      %v903 = vpack.c.b16 %v805, %v798
      %v904 = vpack.c.b16 %v806, %v799
      %v905 = vpack.c.b16 %v807, %v800
      %v906 = vpack.c.b16 %v808, %v801
      %v907 = vpack.c.b16 %v809, %v802
      %v908 = vpack.c.b16 %v817, %v810
      %v909 = vpack.c.b16 %v818, %v811
      %v910 = vpack.c.b16 %v819, %v812
      %v911 = vpack.c.b16 %v820, %v813
      %v912 = vpack.c.b16 %v821, %v814
      %v913 = vpack.c.b16 %v822, %v815
      %v914 = vpack.c.b16 %v823, %v816
      %v915 = vpack.c.b16 %v831, %v824
      %v916 = vpack.c.b16 %v832, %v825
      %v917 = vpack.c.b16 %v833, %v826
      %v918 = vpack.c.b16 %v834, %v827
      %v919 = vpack.c.b16 %v835, %v828
      %v920 = vpack.c.b16 %v836, %v829
      %v921 = vpack.c.b16 %v837, %v830
      %v922 = vpack.c.b16 %v845, %v838
      %v923 = vpack.c.b16 %v846, %v839
      %v924 = vpack.c.b16 %v847, %v840
      %v925 = vpack.c.b16 %v848, %v841
      %v926 = vpack.c.b16 %v849, %v842
      %v927 = vpack.c.b16 %v850, %v843
      %v928 = vpack.c.b16 %v851, %v844
      %v929 = vpack.c.b16 %v859, %v852
      %v930 = vpack.c.b16 %v860, %v853
      %v931 = vpack.c.b16 %v861, %v854
      %v932 = vpack.c.b16 %v862, %v855
      %v933 = vpack.c.b16 %v863, %v856
      %v934 = vpack.c.b16 %v864, %v857
      %v935 = vpack.c.b16 %v865, %v858
      %v936 = vpack.c.b16 %v873, %v866
      %v937 = vpack.c.b16 %v874, %v867
      %v938 = vpack.c.b16 %v875, %v868
      %v939 = vpack.c.b16 %v876, %v869
      %v940 = vpack.c.b16 %v877, %v870
      %v941 = vpack.c.b16 %v878, %v871
      %v942 = vpack.c.b16 %v879, %v872
      %v943 = vpack.c.b16 %v887, %v880
      %v944 = vpack.c.b16 %v888, %v881
      %v945 = vpack.c.b16 %v889, %v882
      %v946 = vpack.c.b16 %v890, %v883
      %v947 = vpack.c.b16 %v891, %v884
      %v948 = vpack.c.b16 %v892, %v885
      %v949 = vpack.c.b16 %v893, %v886
      %v1194 = vunpack.c.l.b16 %v512
      %v1195 = vunpack.c.h.b16 %v512
      %v1196 = vunpack.c.l.b16 %v513
      %v1197 = vunpack.c.h.b16 %v513
      %v1198 = vunpack.c.l.b16 %v514
      %v1199 = vunpack.c.h.b16 %v514
      %v1200 = vunpack.c.l.b16 %v515
      %v1201 = vunpack.c.h.b16 %v515
      %v1202 = vunpack.c.l.b16 %v516
      %v1203 = vunpack.c.h.b16 %v516
      %v1204 = vunpack.c.l.b16 %v517
      %v1205 = vunpack.c.h.b16 %v517
      %v1206 = vunpack.c.l.b16 %v518
      %v1207 = vunpack.c.h.b16 %v518
      %v1208 = vunpack.c.l.b16 %v519
      %v1209 = vunpack.c.h.b16 %v519
      %v1210 = vunpack.c.l.b16 %v520
      %v1211 = vunpack.c.h.b16 %v520
      %v1212 = vunpack.c.l.b16 %v521
      %v1213 = vunpack.c.h.b16 %v521
      %v1214 = vunpack.c.l.b16 %v522
      %v1215 = vunpack.c.h.b16 %v522
      %v1216 = vunpack.c.l.b16 %v523
      %v1217 = vunpack.c.h.b16 %v523
      %v1218 = vunpack.c.l.b16 %v524
      %v1219 = vunpack.c.h.b16 %v524
      %v1220 = vunpack.c.l.b16 %v525
      %v1221 = vunpack.c.h.b16 %v525
      %v1222 = vunpack.c.l.b16 %v526
      %v1223 = vunpack.c.h.b16 %v526
      %v1224 = vunpack.c.l.b16 %v527
      %v1225 = vunpack.c.h.b16 %v527
      %v1226 = vunpack.c.l.b16 %v528
      %v1227 = vunpack.c.h.b16 %v528
      %v1228 = vunpack.c.l.b16 %v529
      %v1229 = vunpack.c.h.b16 %v529
      %v1230 = vunpack.c.l.b16 %v530
      %v1231 = vunpack.c.h.b16 %v530
      %v1232 = vunpack.c.l.b16 %v531
      %v1233 = vunpack.c.h.b16 %v531
      %v1234 = vunpack.c.l.b16 %v532
      %v1235 = vunpack.c.h.b16 %v532
      %v1236 = vunpack.c.l.b16 %v533
      %v1237 = vunpack.c.h.b16 %v533
      %v1238 = vunpack.c.l.b16 %v534
      %v1239 = vunpack.c.h.b16 %v534
      %v1240 = vunpack.c.l.b16 %v535
      %v1241 = vunpack.c.h.b16 %v535
      %v1242 = vunpack.c.l.b16 %v536
      %v1243 = vunpack.c.h.b16 %v536
      %v1244 = vunpack.c.l.b16 %v537
      %v1245 = vunpack.c.h.b16 %v537
      %v1246 = vunpack.c.l.b16 %v538
      %v1247 = vunpack.c.h.b16 %v538
      %v1248 = vunpack.c.l.b16 %v539
      %v1249 = vunpack.c.h.b16 %v539
      %v1250 = vunpack.c.l.b16 %v540
      %v1251 = vunpack.c.h.b16 %v540
      %v1252 = vunpack.c.l.b16 %v541
      %v1253 = vunpack.c.h.b16 %v541
      %v1254 = vunpack.c.l.b16 %v542
      %v1255 = vunpack.c.h.b16 %v542
      %v1256 = vunpack.c.l.b16 %v543
      %v1257 = vunpack.c.h.b16 %v543
      %v1258 = vunpack.c.l.b16 %v544
      %v1259 = vunpack.c.h.b16 %v544
      %v1260 = vunpack.c.l.b16 %v545
      %v1261 = vunpack.c.h.b16 %v545
      %v1262 = vunpack.c.l.b16 %v546
      %v1263 = vunpack.c.h.b16 %v546
      %v1264 = vunpack.c.l.b16 %v547
      %v1265 = vunpack.c.h.b16 %v547
      %v1266 = vunpack.c.l.b16 %v548
      %v1267 = vunpack.c.h.b16 %v548
      %v1268 = vunpack.c.l.b16 %v549
      %v1269 = vunpack.c.h.b16 %v549
      %v1270 = vunpack.c.l.b16 %v550
      %v1271 = vunpack.c.h.b16 %v550
      %v1272 = vunpack.c.l.b16 %v551
      %v1273 = vunpack.c.h.b16 %v551
      %v1274 = vunpack.c.l.b16 %v552
      %v1275 = vunpack.c.h.b16 %v552
      %v1276 = vunpack.c.l.b16 %v553
      %v1277 = vunpack.c.h.b16 %v553
      %v1278 = vunpack.c.l.b16 %v554
      %v1279 = vunpack.c.h.b16 %v554
      %v1280 = vunpack.c.l.b16 %v555
      %v1281 = vunpack.c.h.b16 %v555
      %v1282 = vunpack.c.l.b16 %v556
      %v1283 = vunpack.c.h.b16 %v556
      %v1284 = vunpack.c.l.b16 %v557
      %v1285 = vunpack.c.h.b16 %v557
      %v1286 = vunpack.c.l.b16 %v558
      %v1287 = vunpack.c.h.b16 %v558
      %v1288 = vunpack.c.l.b16 %v559
      %v1289 = vunpack.c.h.b16 %v559
      %v1290 = vunpack.c.l.b16 %v560
      %v1291 = vunpack.c.h.b16 %v560
      %v1292 = vunpack.c.l.b16 %v561
      %v1293 = vunpack.c.h.b16 %v561
      %v1294 = vunpack.c.l.b16 %v562
      %v1295 = vunpack.c.h.b16 %v562
      %v1296 = vunpack.c.l.b16 %v563
      %v1297 = vunpack.c.h.b16 %v563
      %v1298 = vunpack.c.l.b16 %v564
      %v1299 = vunpack.c.h.b16 %v564
      %v1300 = vunpack.c.l.b16 %v565
      %v1301 = vunpack.c.h.b16 %v565
      %v1302 = vunpack.c.l.b16 %v566
      %v1303 = vunpack.c.h.b16 %v566
      %v1304 = vunpack.c.l.b16 %v567
      %v1305 = vunpack.c.h.b16 %v567
      %v1306 = vunpack.c.l.b16 %v568
      %v1307 = vunpack.c.h.b16 %v568
      %v1308 = vunpack.c.l.b16 %v569
      %v1309 = vunpack.c.h.b16 %v569
      %v1310 = vunpack.c.l.b16 %v570
      %v1311 = vunpack.c.h.b16 %v570
      %v1312 = vunpack.c.l.b16 %v571
      %v1313 = vunpack.c.h.b16 %v571
      %v1314 = vunpack.c.l.b16 %v572
      %v1315 = vunpack.c.h.b16 %v572
      %v1316 = vunpack.c.l.b16 %v573
      %v1317 = vunpack.c.h.b16 %v573
      %v1318 = vunpack.c.l.b16 %v574
      %v1319 = vunpack.c.h.b16 %v574
      %v1320 = vunpack.c.l.b16 %v575
      %v1321 = vunpack.c.h.b16 %v575
      %v1322 = vunpack.c.l.b16 %v576
      %v1323 = vunpack.c.h.b16 %v576
      %v1324 = vunpack.c.l.b16 %v577
      %v1325 = vunpack.c.h.b16 %v577
      %v1326 = vunpack.c.l.b16 %v578
      %v1327 = vunpack.c.h.b16 %v578
      %v1328 = vunpack.c.l.b16 %v579
      %v1329 = vunpack.c.h.b16 %v579
      %v1330 = vunpack.c.l.b16 %v580
      %v1331 = vunpack.c.h.b16 %v580
      %v1332 = vunpack.c.l.b16 %v581
      %v1333 = vunpack.c.h.b16 %v581
      %v1334 = vunpack.c.l.b16 %v582
      %v1335 = vunpack.c.h.b16 %v582
      %v1336 = vunpack.c.l.b16 %v583
      %v1337 = vunpack.c.h.b16 %v583
      %v1338 = vunpack.c.l.b16 %v584
      %v1339 = vunpack.c.h.b16 %v584
      %v1340 = vunpack.c.l.b16 %v585
      %v1341 = vunpack.c.h.b16 %v585
      %v1342 = vunpack.c.l.b16 %v586
      %v1343 = vunpack.c.h.b16 %v586
      %v1344 = vunpack.c.l.b16 %v587
      %v1345 = vunpack.c.h.b16 %v587
      %v1346 = vunpack.c.l.b16 %v588
      %v1347 = vunpack.c.h.b16 %v588
      %v1348 = vunpack.c.l.b16 %v589
      %v1349 = vunpack.c.h.b16 %v589
      %v1350 = vunpack.c.l.b16 %v590
      %v1351 = vunpack.c.h.b16 %v590
      %v1352 = vunpack.c.l.b16 %v591
      %v1353 = vunpack.c.h.b16 %v591
      %v1354 = vunpack.c.l.b16 %v592
      %v1355 = vunpack.c.h.b16 %v592
      %v1356 = vunpack.c.l.b16 %v593
      %v1357 = vunpack.c.h.b16 %v593
      %v1358 = vunpack.c.l.b16 %v594
      %v1359 = vunpack.c.h.b16 %v594
      %v1360 = vunpack.c.l.b16 %v595
      %v1361 = vunpack.c.h.b16 %v595
      %v1362 = vunpack.c.l.b16 %v596
      %v1363 = vunpack.c.h.b16 %v596
      %v1364 = vunpack.c.l.b16 %v597
      %v1365 = vunpack.c.h.b16 %v597
      %v1366 = vunpack.c.l.b16 %v598
      %v1367 = vunpack.c.h.b16 %v598
      %v1368 = vunpack.c.l.b16 %v599
      %v1369 = vunpack.c.h.b16 %v599
      %v1370 = vunpack.c.l.b16 %v600
      %v1371 = vunpack.c.h.b16 %v600
      %v1372 = vunpack.c.l.b16 %v601
      %v1373 = vunpack.c.h.b16 %v601
      %v1374 = vunpack.c.l.b16 %v602
      %v1375 = vunpack.c.h.b16 %v602
      %v1376 = vunpack.c.l.b16 %v603
      %v1377 = vunpack.c.h.b16 %v603
      %v1378 = vunpack.c.l.b16 %v604
      %v1379 = vunpack.c.h.b16 %v604
      %v1380 = vunpack.c.l.b16 %v605
      %v1381 = vunpack.c.h.b16 %v605
      %v1382 = vunpack.c.l.b16 %v606
      %v1383 = vunpack.c.h.b16 %v606
      %v1384 = vunpack.c.l.b16 %v607
      %v1385 = vunpack.c.h.b16 %v607
      %v1386 = vunpack.c.l.b16 %v608
      %v1387 = vunpack.c.h.b16 %v608
      %v1388 = vunpack.c.l.b16 %v609
      %v1389 = vunpack.c.h.b16 %v609
      %v1390 = vunpack.c.l.b16 %v610
      %v1391 = vunpack.c.h.b16 %v610
      %v1392 = vunpack.c.l.b16 %v611
      %v1393 = vunpack.c.h.b16 %v611
      %v1394 = vunpack.c.l.b16 %v612
      %v1395 = vunpack.c.h.b16 %v612
      %v1396 = vunpack.c.l.b16 %v613
      %v1397 = vunpack.c.h.b16 %v613
      %v1398 = vunpack.c.l.b16 %v614
      %v1399 = vunpack.c.h.b16 %v614
      %v1400 = vunpack.c.l.b16 %v615
      %v1401 = vunpack.c.h.b16 %v615
      %v1402 = vunpack.c.l.b16 %v616
      %v1403 = vunpack.c.h.b16 %v616
      %v1404 = vunpack.c.l.b16 %v617
      %v1405 = vunpack.c.h.b16 %v617
      %v1406 = vunpack.c.l.b16 %v618
      %v1407 = vunpack.c.h.b16 %v618
      %v1408 = vunpack.c.l.b16 %v619
      %v1409 = vunpack.c.h.b16 %v619
      %v1410 = vunpack.c.l.b16 %v620
      %v1411 = vunpack.c.h.b16 %v620
      %v1412 = vunpack.c.l.b16 %v621
      %v1413 = vunpack.c.h.b16 %v621
      %v1414 = vunpack.c.l.b16 %v622
      %v1415 = vunpack.c.h.b16 %v622
      %v1416 = vunpack.c.l.b16 %v623
      %v1417 = vunpack.c.h.b16 %v623
      %v1418 = vunpack.c.l.b16 %v624
      %v1419 = vunpack.c.h.b16 %v624
      %v1420 = vunpack.c.l.b16 %v625
      %v1421 = vunpack.c.h.b16 %v625
      %v1422 = vunpack.c.l.b16 %v626
      %v1423 = vunpack.c.h.b16 %v626
      %v1424 = vunpack.c.l.b16 %v627
      %v1425 = vunpack.c.h.b16 %v627
      %v1426 = vunpack.c.l.b16 %v628
      %v1427 = vunpack.c.h.b16 %v628
      %v1428 = vunpack.c.l.b16 %v629
      %v1429 = vunpack.c.h.b16 %v629
      %v1430 = vunpack.c.l.b16 %v630
      %v1431 = vunpack.c.h.b16 %v630
      %v1432 = vunpack.c.l.b16 %v631
      %v1433 = vunpack.c.h.b16 %v631
      %v1434 = vunpack.c.l.b16 %v632
      %v1435 = vunpack.c.h.b16 %v632
      %v1436 = vunpack.c.l.b16 %v633
      %v1437 = vunpack.c.h.b16 %v633
      %v1438 = vunpack.c.l.b16 %v634
      %v1439 = vunpack.c.h.b16 %v634
      %v1440 = vunpack.c.l.b16 %v635
      %v1441 = vunpack.c.h.b16 %v635
      %v1442 = vunpack.c.l.b16 %v636
      %v1443 = vunpack.c.h.b16 %v636
      %v1444 = vunpack.c.l.b16 %v637
      %v1445 = vunpack.c.h.b16 %v637
      %v1446 = vunpack.c.l.b16 %v638
      %v1447 = vunpack.c.h.b16 %v638
      %v1448 = vunpack.c.l.b16 %v639
      %v1449 = vunpack.c.h.b16 %v639
      %v1450 = vunpack.c.l.b16 %v640
      %v1451 = vunpack.c.h.b16 %v640
      %v1452 = vunpack.c.l.b16 %v641
      %v1453 = vunpack.c.h.b16 %v641
      %v1454 = vunpack.c.l.b16 %v642
      %v1455 = vunpack.c.h.b16 %v642
      %v1456 = vunpack.c.l.b16 %v643
      %v1457 = vunpack.c.h.b16 %v643
      %v1458 = vunpack.c.l.b16 %v644
      %v1459 = vunpack.c.h.b16 %v644
      %v1460 = vunpack.c.l.b16 %v645
      %v1461 = vunpack.c.h.b16 %v645
      %v1462 = vunpack.c.l.b16 %v646
      %v1463 = vunpack.c.h.b16 %v646
      %v1464 = vunpack.c.l.b16 %v647
      %v1465 = vunpack.c.h.b16 %v647
      %v1466 = vunpack.c.l.b16 %v648
      %v1467 = vunpack.c.h.b16 %v648
      %v1468 = vunpack.c.l.b16 %v649
      %v1469 = vunpack.c.h.b16 %v649
      %v1470 = vunpack.c.l.b16 %v650
      %v1471 = vunpack.c.h.b16 %v650
      %v1472 = vunpack.c.l.b16 %v651
      %v1473 = vunpack.c.h.b16 %v651
      %v1474 = vunpack.c.l.b16 %v652
      %v1475 = vunpack.c.h.b16 %v652
      %v1476 = vunpack.c.l.b16 %v653
      %v1477 = vunpack.c.h.b16 %v653
      %v1478 = vunpack.c.l.b16 %v654
      %v1479 = vunpack.c.h.b16 %v654
      %v1480 = vunpack.c.l.b16 %v655
      %v1481 = vunpack.c.h.b16 %v655
      %v1482 = vunpack.c.l.b16 %v656
      %v1483 = vunpack.c.h.b16 %v656
      %v1484 = vunpack.c.l.b16 %v657
      %v1485 = vunpack.c.h.b16 %v657
      %v1486 = vunpack.c.l.b16 %v658
      %v1487 = vunpack.c.h.b16 %v658
      %v1488 = vunpack.c.l.b16 %v659
      %v1489 = vunpack.c.h.b16 %v659
      %v1490 = vunpack.c.l.b16 %v660
      %v1491 = vunpack.c.h.b16 %v660
      %v1492 = vunpack.c.l.b16 %v661
      %v1493 = vunpack.c.h.b16 %v661
      %v1494 = vunpack.c.l.b16 %v662
      %v1495 = vunpack.c.h.b16 %v662
      %v1496 = vunpack.c.l.b16 %v663
      %v1497 = vunpack.c.h.b16 %v663
      %v1498 = vunpack.c.l.b16 %v664
      %v1499 = vunpack.c.h.b16 %v664
      %v1500 = vunpack.c.l.b16 %v665
      %v1501 = vunpack.c.h.b16 %v665
      %v1502 = vunpack.c.l.b16 %v666
      %v1503 = vunpack.c.h.b16 %v666
      %v1504 = vunpack.c.l.b16 %v667
      %v1505 = vunpack.c.h.b16 %v667
      %v1506 = vunpack.c.l.b16 %v668
      %v1507 = vunpack.c.h.b16 %v668
      %v1508 = vunpack.c.l.b16 %v669
      %v1509 = vunpack.c.h.b16 %v669
      %v1510 = vunpack.c.l.b16 %v670
      %v1511 = vunpack.c.h.b16 %v670
      %v1512 = vunpack.c.l.b16 %v671
      %v1513 = vunpack.c.h.b16 %v671
      %v1514 = vunpack.c.l.b16 %v672
      %v1515 = vunpack.c.h.b16 %v672
      %v1516 = vunpack.c.l.b16 %v673
      %v1517 = vunpack.c.h.b16 %v673
      %v1518 = vunpack.c.l.b16 %v674
      %v1519 = vunpack.c.h.b16 %v674
      %v1520 = vunpack.c.l.b16 %v675
      %v1521 = vunpack.c.h.b16 %v675
      %v1522 = vunpack.c.l.b16 %v676
      %v1523 = vunpack.c.h.b16 %v676
      %v1524 = vunpack.c.l.b16 %v677
      %v1525 = vunpack.c.h.b16 %v677
      %v1526 = vunpack.c.l.b16 %v678
      %v1527 = vunpack.c.h.b16 %v678
      %v1528 = vunpack.c.l.b16 %v679
      %v1529 = vunpack.c.h.b16 %v679
      %v1530 = vunpack.c.l.b16 %v680
      %v1531 = vunpack.c.h.b16 %v680
      %v1532 = vunpack.c.l.b16 %v681
      %v1533 = vunpack.c.h.b16 %v681
      %v1534 = vunpack.c.l.b16 %v682
      %v1535 = vunpack.c.h.b16 %v682
      %v1536 = vunpack.c.l.b16 %v683
      %v1537 = vunpack.c.h.b16 %v683
      %v1538 = vunpack.c.l.b16 %v684
      %v1539 = vunpack.c.h.b16 %v684
      %v1540 = vunpack.c.l.b16 %v685
      %v1541 = vunpack.c.h.b16 %v685
      %v1542 = vunpack.c.l.b16 %v686
      %v1543 = vunpack.c.h.b16 %v686
      %v1544 = vunpack.c.l.b16 %v687
      %v1545 = vunpack.c.h.b16 %v687
      %v1546 = vunpack.c.l.b16 %v688
      %v1547 = vunpack.c.h.b16 %v688
      %v1548 = vunpack.c.l.b16 %v689
      %v1549 = vunpack.c.h.b16 %v689
      %v1550 = vunpack.c.l.b16 %v690
      %v1551 = vunpack.c.h.b16 %v690
      %v1552 = vunpack.c.l.b16 %v691
      %v1553 = vunpack.c.h.b16 %v691
      %v1554 = vunpack.c.l.b16 %v692
      %v1555 = vunpack.c.h.b16 %v692
      %v1556 = vunpack.c.l.b16 %v693
      %v1557 = vunpack.c.h.b16 %v693
      %v1558 = vunpack.c.l.b16 %v694
      %v1559 = vunpack.c.h.b16 %v694
      %v1560 = vunpack.c.l.b16 %v695
      %v1561 = vunpack.c.h.b16 %v695
      %v1562 = vunpack.c.l.b16 %v696
      %v1563 = vunpack.c.h.b16 %v696
      %v1564 = vunpack.c.l.b16 %v697
      %v1565 = vunpack.c.h.b16 %v697
      %v1566 = vunpack.c.l.b16 %v698
      %v1567 = vunpack.c.h.b16 %v698
      %v1568 = vunpack.c.l.b16 %v699
      %v1569 = vunpack.c.h.b16 %v699
      %v1570 = vunpack.c.l.b16 %v700
      %v1571 = vunpack.c.h.b16 %v700
      %v1572 = vunpack.c.l.b16 %v701
      %v1573 = vunpack.c.h.b16 %v701
      %v1574 = vunpack.c.l.b16 %v702
      %v1575 = vunpack.c.h.b16 %v702
      %v1576 = vunpack.c.l.b16 %v703
      %v1577 = vunpack.c.h.b16 %v703
      %v1578 = vunpack.c.l.b16 %v704
      %v1579 = vunpack.c.h.b16 %v704
      %v1580 = vunpack.c.l.b16 %v705
      %v1581 = vunpack.c.h.b16 %v705
      %v1582 = vunpack.c.l.b16 %v706
      %v1583 = vunpack.c.h.b16 %v706
      %v1584 = vunpack.c.l.b16 %v707
      %v1585 = vunpack.c.h.b16 %v707
      %v1586 = vpack.c.b16 %v1198, %v1194
      %v1587 = vpack.c.b16 %v1199, %v1195
      %v1588 = vpack.c.b16 %v1200, %v1196
      %v1589 = vpack.c.b16 %v1201, %v1197
      %v1590 = vpack.c.b16 %v1206, %v1202
      %v1591 = vpack.c.b16 %v1207, %v1203
      %v1592 = vpack.c.b16 %v1208, %v1204
      %v1593 = vpack.c.b16 %v1209, %v1205
      %v1594 = vpack.c.b16 %v1214, %v1210
      %v1595 = vpack.c.b16 %v1215, %v1211
      %v1596 = vpack.c.b16 %v1216, %v1212
      %v1597 = vpack.c.b16 %v1217, %v1213
      %v1598 = vpack.c.b16 %v1222, %v1218
      %v1599 = vpack.c.b16 %v1223, %v1219
      %v1600 = vpack.c.b16 %v1224, %v1220
      %v1601 = vpack.c.b16 %v1225, %v1221
      %v1602 = vpack.c.b16 %v1230, %v1226
      %v1603 = vpack.c.b16 %v1231, %v1227
      %v1604 = vpack.c.b16 %v1232, %v1228
      %v1605 = vpack.c.b16 %v1233, %v1229
      %v1606 = vpack.c.b16 %v1238, %v1234
      %v1607 = vpack.c.b16 %v1239, %v1235
      %v1608 = vpack.c.b16 %v1240, %v1236
      %v1609 = vpack.c.b16 %v1241, %v1237
      %v1610 = vpack.c.b16 %v1246, %v1242
      %v1611 = vpack.c.b16 %v1247, %v1243
      %v1612 = vpack.c.b16 %v1248, %v1244
      %v1613 = vpack.c.b16 %v1249, %v1245
      %v1614 = vpack.c.b16 %v1254, %v1250
      %v1615 = vpack.c.b16 %v1255, %v1251
      %v1616 = vpack.c.b16 %v1256, %v1252
      %v1617 = vpack.c.b16 %v1257, %v1253
      %v1618 = vpack.c.b16 %v1262, %v1258
      %v1619 = vpack.c.b16 %v1263, %v1259
      %v1620 = vpack.c.b16 %v1264, %v1260
      %v1621 = vpack.c.b16 %v1265, %v1261
      %v1622 = vpack.c.b16 %v1270, %v1266
      %v1623 = vpack.c.b16 %v1271, %v1267
      %v1624 = vpack.c.b16 %v1272, %v1268
      %v1625 = vpack.c.b16 %v1273, %v1269
      %v1626 = vpack.c.b16 %v1278, %v1274
      %v1627 = vpack.c.b16 %v1279, %v1275
      %v1628 = vpack.c.b16 %v1280, %v1276
      %v1629 = vpack.c.b16 %v1281, %v1277
      %v1630 = vpack.c.b16 %v1286, %v1282
      %v1631 = vpack.c.b16 %v1287, %v1283
      %v1632 = vpack.c.b16 %v1288, %v1284
      %v1633 = vpack.c.b16 %v1289, %v1285
      %v1634 = vpack.c.b16 %v1294, %v1290
      %v1635 = vpack.c.b16 %v1295, %v1291
      %v1636 = vpack.c.b16 %v1296, %v1292
      %v1637 = vpack.c.b16 %v1297, %v1293
      %v1638 = vpack.c.b16 %v1302, %v1298
      %v1639 = vpack.c.b16 %v1303, %v1299
      %v1640 = vpack.c.b16 %v1304, %v1300
      %v1641 = vpack.c.b16 %v1305, %v1301
      %v1642 = vpack.c.b16 %v1310, %v1306
      %v1643 = vpack.c.b16 %v1311, %v1307
      %v1644 = vpack.c.b16 %v1312, %v1308
      %v1645 = vpack.c.b16 %v1313, %v1309
      %v1646 = vpack.c.b16 %v1318, %v1314
      %v1647 = vpack.c.b16 %v1319, %v1315
      %v1648 = vpack.c.b16 %v1320, %v1316
      %v1649 = vpack.c.b16 %v1321, %v1317
      %v1650 = vpack.c.b16 %v1326, %v1322
      %v1651 = vpack.c.b16 %v1327, %v1323
      %v1652 = vpack.c.b16 %v1328, %v1324
      %v1653 = vpack.c.b16 %v1329, %v1325
      %v1654 = vpack.c.b16 %v1334, %v1330
      %v1655 = vpack.c.b16 %v1335, %v1331
      %v1656 = vpack.c.b16 %v1336, %v1332
      %v1657 = vpack.c.b16 %v1337, %v1333
      %v1658 = vpack.c.b16 %v1342, %v1338
      %v1659 = vpack.c.b16 %v1343, %v1339
      %v1660 = vpack.c.b16 %v1344, %v1340
      %v1661 = vpack.c.b16 %v1345, %v1341
      %v1662 = vpack.c.b16 %v1350, %v1346
      %v1663 = vpack.c.b16 %v1351, %v1347
      %v1664 = vpack.c.b16 %v1352, %v1348
      %v1665 = vpack.c.b16 %v1353, %v1349
      %v1666 = vpack.c.b16 %v1358, %v1354
      %v1667 = vpack.c.b16 %v1359, %v1355
      %v1668 = vpack.c.b16 %v1360, %v1356
      %v1669 = vpack.c.b16 %v1361, %v1357
      %v1670 = vpack.c.b16 %v1366, %v1362
      %v1671 = vpack.c.b16 %v1367, %v1363
      %v1672 = vpack.c.b16 %v1368, %v1364
      %v1673 = vpack.c.b16 %v1369, %v1365
      %v1674 = vpack.c.b16 %v1374, %v1370
      %v1675 = vpack.c.b16 %v1375, %v1371
      %v1676 = vpack.c.b16 %v1376, %v1372
      %v1677 = vpack.c.b16 %v1377, %v1373
      %v1678 = vpack.c.b16 %v1382, %v1378
      %v1679 = vpack.c.b16 %v1383, %v1379
      %v1680 = vpack.c.b16 %v1384, %v1380
      %v1681 = vpack.c.b16 %v1385, %v1381
      %v1682 = vpack.c.b16 %v1390, %v1386
      %v1683 = vpack.c.b16 %v1391, %v1387
      %v1684 = vpack.c.b16 %v1392, %v1388
      %v1685 = vpack.c.b16 %v1393, %v1389
      %v1686 = vpack.c.b16 %v1398, %v1394
      %v1687 = vpack.c.b16 %v1399, %v1395
      %v1688 = vpack.c.b16 %v1400, %v1396
      %v1689 = vpack.c.b16 %v1401, %v1397
      %v1690 = vpack.c.b16 %v1406, %v1402
      %v1691 = vpack.c.b16 %v1407, %v1403
      %v1692 = vpack.c.b16 %v1408, %v1404
      %v1693 = vpack.c.b16 %v1409, %v1405
      %v1694 = vpack.c.b16 %v1414, %v1410
      %v1695 = vpack.c.b16 %v1415, %v1411
      %v1696 = vpack.c.b16 %v1416, %v1412
      %v1697 = vpack.c.b16 %v1417, %v1413
      %v1698 = vpack.c.b16 %v1422, %v1418
      %v1699 = vpack.c.b16 %v1423, %v1419
      %v1700 = vpack.c.b16 %v1424, %v1420
      %v1701 = vpack.c.b16 %v1425, %v1421
      %v1702 = vpack.c.b16 %v1430, %v1426
      %v1703 = vpack.c.b16 %v1431, %v1427
      %v1704 = vpack.c.b16 %v1432, %v1428
      %v1705 = vpack.c.b16 %v1433, %v1429
      %v1706 = vpack.c.b16 %v1438, %v1434
      %v1707 = vpack.c.b16 %v1439, %v1435
      %v1708 = vpack.c.b16 %v1440, %v1436
      %v1709 = vpack.c.b16 %v1441, %v1437
      %v1710 = vpack.c.b16 %v1446, %v1442
      %v1711 = vpack.c.b16 %v1447, %v1443
      %v1712 = vpack.c.b16 %v1448, %v1444
      %v1713 = vpack.c.b16 %v1449, %v1445
      %v1714 = vpack.c.b16 %v1454, %v1450
      %v1715 = vpack.c.b16 %v1455, %v1451
      %v1716 = vpack.c.b16 %v1456, %v1452
      %v1717 = vpack.c.b16 %v1457, %v1453
      %v1718 = vpack.c.b16 %v1462, %v1458
      %v1719 = vpack.c.b16 %v1463, %v1459
      %v1720 = vpack.c.b16 %v1464, %v1460
      %v1721 = vpack.c.b16 %v1465, %v1461
      %v1722 = vpack.c.b16 %v1470, %v1466
      %v1723 = vpack.c.b16 %v1471, %v1467
      %v1724 = vpack.c.b16 %v1472, %v1468
      %v1725 = vpack.c.b16 %v1473, %v1469
      %v1726 = vpack.c.b16 %v1478, %v1474
      %v1727 = vpack.c.b16 %v1479, %v1475
      %v1728 = vpack.c.b16 %v1480, %v1476
      %v1729 = vpack.c.b16 %v1481, %v1477
      %v1730 = vpack.c.b16 %v1486, %v1482
      %v1731 = vpack.c.b16 %v1487, %v1483
      %v1732 = vpack.c.b16 %v1488, %v1484
      %v1733 = vpack.c.b16 %v1489, %v1485
      %v1734 = vpack.c.b16 %v1494, %v1490
      %v1735 = vpack.c.b16 %v1495, %v1491
      %v1736 = vpack.c.b16 %v1496, %v1492
      %v1737 = vpack.c.b16 %v1497, %v1493
      %v1738 = vpack.c.b16 %v1502, %v1498
      %v1739 = vpack.c.b16 %v1503, %v1499
      %v1740 = vpack.c.b16 %v1504, %v1500
      %v1741 = vpack.c.b16 %v1505, %v1501
      %v1742 = vpack.c.b16 %v1510, %v1506
      %v1743 = vpack.c.b16 %v1511, %v1507
      %v1744 = vpack.c.b16 %v1512, %v1508
      %v1745 = vpack.c.b16 %v1513, %v1509
      %v1746 = vpack.c.b16 %v1518, %v1514
      %v1747 = vpack.c.b16 %v1519, %v1515
      %v1748 = vpack.c.b16 %v1520, %v1516
      %v1749 = vpack.c.b16 %v1521, %v1517
      %v1750 = vpack.c.b16 %v1526, %v1522
      %v1751 = vpack.c.b16 %v1527, %v1523
      %v1752 = vpack.c.b16 %v1528, %v1524
      %v1753 = vpack.c.b16 %v1529, %v1525
      %v1754 = vpack.c.b16 %v1534, %v1530
      %v1755 = vpack.c.b16 %v1535, %v1531
      %v1756 = vpack.c.b16 %v1536, %v1532
      %v1757 = vpack.c.b16 %v1537, %v1533
      %v1758 = vpack.c.b16 %v1542, %v1538
      %v1759 = vpack.c.b16 %v1543, %v1539
      %v1760 = vpack.c.b16 %v1544, %v1540
      %v1761 = vpack.c.b16 %v1545, %v1541
      %v1762 = vpack.c.b16 %v1550, %v1546
      %v1763 = vpack.c.b16 %v1551, %v1547
      %v1764 = vpack.c.b16 %v1552, %v1548
      %v1765 = vpack.c.b16 %v1553, %v1549
      %v1766 = vpack.c.b16 %v1558, %v1554
      %v1767 = vpack.c.b16 %v1559, %v1555
      %v1768 = vpack.c.b16 %v1560, %v1556
      %v1769 = vpack.c.b16 %v1561, %v1557
      %v1770 = vpack.c.b16 %v1566, %v1562
      %v1771 = vpack.c.b16 %v1567, %v1563
      %v1772 = vpack.c.b16 %v1568, %v1564
      %v1773 = vpack.c.b16 %v1569, %v1565
      %v1774 = vpack.c.b16 %v1574, %v1570
      %v1775 = vpack.c.b16 %v1575, %v1571
      %v1776 = vpack.c.b16 %v1576, %v1572
      %v1777 = vpack.c.b16 %v1577, %v1573
      %v1778 = vpack.c.b16 %v1582, %v1578
      %v1779 = vpack.c.b16 %v1583, %v1579
      %v1780 = vpack.c.b16 %v1584, %v1580
      %v1781 = vpack.c.b16 %v1585, %v1581
      %vm1978 = vcmask 130048
      %v1980 = vsel %vm1978, %v900, 0
      %v1983 = vsel %vm1978, %v907, 0
      %v1986 = vsel %vm1978, %v914, 0
      %v1989 = vsel %vm1978, %v921, 0
      %v1992 = vsel %vm1978, %v928, 0
      %v1995 = vsel %vm1978, %v935, 0
      %v1998 = vsel %vm1978, %v942, 0
      %v2001 = vsel %vm1978, %v949, 0
      %2003 = vmatpush.bf16.msra.mxu0 %v1614
      %2004 = vmatpush.bf16.msra.mxu0 %v1610
      %2005 = vmatpush.bf16.msra.mxu0 %v1606
      %2006 = vmatpush.bf16.msra.mxu0 %v1602
      %2007 = vmatpush.bf16.msra.mxu0 %v1598
      %2008 = vmatpush.bf16.msra.mxu0 %v1594
      %2009 = vmatpush.bf16.msra.mxu0 %v1590
      %2010 = vmatpush.bf16.msra.mxu0 %v1586
      %2011 = vmatmul.bf16.gmra.mxu0 %v894
      %v2012 = vpop.f32.mrf.mxu0
      %v2013 = vadd.f32 %v710, %v2012
      %v2014 = vpop.f32.mrf.mxu0
      %v2015 = vadd.f32 %v710, %v2014
      %2016 = vmatmul.bf16.gmra.mxu0 %v901
      %v2017 = vpop.f32.mrf.mxu0
      %v2018 = vadd.f32 %v710, %v2017
      %v2019 = vpop.f32.mrf.mxu0
      %v2020 = vadd.f32 %v710, %v2019
      %2021 = vmatmul.bf16.gmra.mxu0 %v908
      %v2022 = vpop.f32.mrf.mxu0
      %v2023 = vadd.f32 %v710, %v2022
      %v2024 = vpop.f32.mrf.mxu0
      %v2025 = vadd.f32 %v710, %v2024
      %2026 = vmatmul.bf16.gmra.mxu0 %v915
      %v2027 = vpop.f32.mrf.mxu0
      %v2028 = vadd.f32 %v710, %v2027
      %v2029 = vpop.f32.mrf.mxu0
      %v2030 = vadd.f32 %v710, %v2029
      %2031 = vmatmul.bf16.gmra.mxu0 %v922
      %v2032 = vpop.f32.mrf.mxu0
      %v2033 = vadd.f32 %v710, %v2032
      %v2034 = vpop.f32.mrf.mxu0
      %v2035 = vadd.f32 %v710, %v2034
      %2036 = vmatmul.bf16.gmra.mxu0 %v929
      %v2037 = vpop.f32.mrf.mxu0
      %v2038 = vadd.f32 %v710, %v2037
      %v2039 = vpop.f32.mrf.mxu0
      %v2040 = vadd.f32 %v710, %v2039
      %2041 = vmatmul.bf16.gmra.mxu0 %v936
      %v2042 = vpop.f32.mrf.mxu0
      %v2043 = vadd.f32 %v710, %v2042
      %v2044 = vpop.f32.mrf.mxu0
      %v2045 = vadd.f32 %v710, %v2044
      %2046 = vmatmul.bf16.gmra.mxu0 %v943
      %v2047 = vpop.f32.mrf.mxu0
      %v2048 = vadd.f32 %v710, %v2047
      %v2049 = vpop.f32.mrf.mxu0
      %v2050 = vadd.f32 %v710, %v2049
      %2051 = vdwg.mxu0
      %2052 = vmatpush.bf16.msra.mxu0 %v1646
      %2053 = vmatpush.bf16.msra.mxu0 %v1642
      %2054 = vmatpush.bf16.msra.mxu0 %v1638
      %2055 = vmatpush.bf16.msra.mxu0 %v1634
      %2056 = vmatpush.bf16.msra.mxu0 %v1630
      %2057 = vmatpush.bf16.msra.mxu0 %v1626
      %2058 = vmatpush.bf16.msra.mxu0 %v1622
      %2059 = vmatpush.bf16.msra.mxu0 %v1618
      %2060 = vmatmul.bf16.gmra.mxu0 %v895
      %v2061 = vpop.f32.mrf.mxu0
      %v2062 = vadd.f32 %v2013, %v2061
      %v2063 = vpop.f32.mrf.mxu0
      %v2064 = vadd.f32 %v2015, %v2063
      %2065 = vmatmul.bf16.gmra.mxu0 %v902
      %v2066 = vpop.f32.mrf.mxu0
      %v2067 = vadd.f32 %v2018, %v2066
      %v2068 = vpop.f32.mrf.mxu0
      %v2069 = vadd.f32 %v2020, %v2068
      %2070 = vmatmul.bf16.gmra.mxu0 %v909
      %v2071 = vpop.f32.mrf.mxu0
      %v2072 = vadd.f32 %v2023, %v2071
      %v2073 = vpop.f32.mrf.mxu0
      %v2074 = vadd.f32 %v2025, %v2073
      %2075 = vmatmul.bf16.gmra.mxu0 %v916
      %v2076 = vpop.f32.mrf.mxu0
      %v2077 = vadd.f32 %v2028, %v2076
      %v2078 = vpop.f32.mrf.mxu0
      %v2079 = vadd.f32 %v2030, %v2078
      %2080 = vmatmul.bf16.gmra.mxu0 %v923
      %v2081 = vpop.f32.mrf.mxu0
      %v2082 = vadd.f32 %v2033, %v2081
      %v2083 = vpop.f32.mrf.mxu0
      %v2084 = vadd.f32 %v2035, %v2083
      %2085 = vmatmul.bf16.gmra.mxu0 %v930
      %v2086 = vpop.f32.mrf.mxu0
      %v2087 = vadd.f32 %v2038, %v2086
      %v2088 = vpop.f32.mrf.mxu0
      %v2089 = vadd.f32 %v2040, %v2088
      %2090 = vmatmul.bf16.gmra.mxu0 %v937
      %v2091 = vpop.f32.mrf.mxu0
      %v2092 = vadd.f32 %v2043, %v2091
      %v2093 = vpop.f32.mrf.mxu0
      %v2094 = vadd.f32 %v2045, %v2093
      %2095 = vmatmul.bf16.gmra.mxu0 %v944
      %v2096 = vpop.f32.mrf.mxu0
      %v2097 = vadd.f32 %v2048, %v2096
      %v2098 = vpop.f32.mrf.mxu0
      %v2099 = vadd.f32 %v2050, %v2098
      %2100 = vdwg.mxu0
      %2101 = vmatpush.bf16.msra.mxu0 %v1678
      %2102 = vmatpush.bf16.msra.mxu0 %v1674
      %2103 = vmatpush.bf16.msra.mxu0 %v1670
      %2104 = vmatpush.bf16.msra.mxu0 %v1666
      %2105 = vmatpush.bf16.msra.mxu0 %v1662
      %2106 = vmatpush.bf16.msra.mxu0 %v1658
      %2107 = vmatpush.bf16.msra.mxu0 %v1654
      %2108 = vmatpush.bf16.msra.mxu0 %v1650
      %2109 = vmatmul.bf16.gmra.mxu0 %v896
      %v2110 = vpop.f32.mrf.mxu0
      %v2111 = vadd.f32 %v2062, %v2110
      %v2112 = vpop.f32.mrf.mxu0
      %v2113 = vadd.f32 %v2064, %v2112
      %2114 = vmatmul.bf16.gmra.mxu0 %v903
      %v2115 = vpop.f32.mrf.mxu0
      %v2116 = vadd.f32 %v2067, %v2115
      %v2117 = vpop.f32.mrf.mxu0
      %v2118 = vadd.f32 %v2069, %v2117
      %2119 = vmatmul.bf16.gmra.mxu0 %v910
      %v2120 = vpop.f32.mrf.mxu0
      %v2121 = vadd.f32 %v2072, %v2120
      %v2122 = vpop.f32.mrf.mxu0
      %v2123 = vadd.f32 %v2074, %v2122
      %2124 = vmatmul.bf16.gmra.mxu0 %v917
      %v2125 = vpop.f32.mrf.mxu0
      %v2126 = vadd.f32 %v2077, %v2125
      %v2127 = vpop.f32.mrf.mxu0
      %v2128 = vadd.f32 %v2079, %v2127
      %2129 = vmatmul.bf16.gmra.mxu0 %v924
      %v2130 = vpop.f32.mrf.mxu0
      %v2131 = vadd.f32 %v2082, %v2130
      %v2132 = vpop.f32.mrf.mxu0
      %v2133 = vadd.f32 %v2084, %v2132
      %2134 = vmatmul.bf16.gmra.mxu0 %v931
      %v2135 = vpop.f32.mrf.mxu0
      %v2136 = vadd.f32 %v2087, %v2135
      %v2137 = vpop.f32.mrf.mxu0
      %v2138 = vadd.f32 %v2089, %v2137
      %2139 = vmatmul.bf16.gmra.mxu0 %v938
      %v2140 = vpop.f32.mrf.mxu0
      %v2141 = vadd.f32 %v2092, %v2140
      %v2142 = vpop.f32.mrf.mxu0
      %v2143 = vadd.f32 %v2094, %v2142
      %2144 = vmatmul.bf16.gmra.mxu0 %v945
      %v2145 = vpop.f32.mrf.mxu0
      %v2146 = vadd.f32 %v2097, %v2145
      %v2147 = vpop.f32.mrf.mxu0
      %v2148 = vadd.f32 %v2099, %v2147
      %2149 = vdwg.mxu0
      %2150 = vmatpush.bf16.msra.mxu0 %v1710
      %2151 = vmatpush.bf16.msra.mxu0 %v1706
      %2152 = vmatpush.bf16.msra.mxu0 %v1702
      %2153 = vmatpush.bf16.msra.mxu0 %v1698
      %2154 = vmatpush.bf16.msra.mxu0 %v1694
      %2155 = vmatpush.bf16.msra.mxu0 %v1690
      %2156 = vmatpush.bf16.msra.mxu0 %v1686
      %2157 = vmatpush.bf16.msra.mxu0 %v1682
      %2158 = vmatmul.bf16.gmra.mxu0 %v897
      %v2159 = vpop.f32.mrf.mxu0
      %v2160 = vadd.f32 %v2111, %v2159
      %v2161 = vpop.f32.mrf.mxu0
      %v2162 = vadd.f32 %v2113, %v2161
      %2163 = vmatmul.bf16.gmra.mxu0 %v904
      %v2164 = vpop.f32.mrf.mxu0
      %v2165 = vadd.f32 %v2116, %v2164
      %v2166 = vpop.f32.mrf.mxu0
      %v2167 = vadd.f32 %v2118, %v2166
      %2168 = vmatmul.bf16.gmra.mxu0 %v911
      %v2169 = vpop.f32.mrf.mxu0
      %v2170 = vadd.f32 %v2121, %v2169
      %v2171 = vpop.f32.mrf.mxu0
      %v2172 = vadd.f32 %v2123, %v2171
      %2173 = vmatmul.bf16.gmra.mxu0 %v918
      %v2174 = vpop.f32.mrf.mxu0
      %v2175 = vadd.f32 %v2126, %v2174
      %v2176 = vpop.f32.mrf.mxu0
      %v2177 = vadd.f32 %v2128, %v2176
      %2178 = vmatmul.bf16.gmra.mxu0 %v925
      %v2179 = vpop.f32.mrf.mxu0
      %v2180 = vadd.f32 %v2131, %v2179
      %v2181 = vpop.f32.mrf.mxu0
      %v2182 = vadd.f32 %v2133, %v2181
      %2183 = vmatmul.bf16.gmra.mxu0 %v932
      %v2184 = vpop.f32.mrf.mxu0
      %v2185 = vadd.f32 %v2136, %v2184
      %v2186 = vpop.f32.mrf.mxu0
      %v2187 = vadd.f32 %v2138, %v2186
      %2188 = vmatmul.bf16.gmra.mxu0 %v939
      %v2189 = vpop.f32.mrf.mxu0
      %v2190 = vadd.f32 %v2141, %v2189
      %v2191 = vpop.f32.mrf.mxu0
      %v2192 = vadd.f32 %v2143, %v2191
      %2193 = vmatmul.bf16.gmra.mxu0 %v946
      %v2194 = vpop.f32.mrf.mxu0
      %v2195 = vadd.f32 %v2146, %v2194
      %v2196 = vpop.f32.mrf.mxu0
      %v2197 = vadd.f32 %v2148, %v2196
      %2198 = vdwg.mxu0
      %2199 = vmatpush.bf16.msra.mxu0 %v1742
      %2200 = vmatpush.bf16.msra.mxu0 %v1738
      %2201 = vmatpush.bf16.msra.mxu0 %v1734
      %2202 = vmatpush.bf16.msra.mxu0 %v1730
      %2203 = vmatpush.bf16.msra.mxu0 %v1726
      %2204 = vmatpush.bf16.msra.mxu0 %v1722
      %2205 = vmatpush.bf16.msra.mxu0 %v1718
      %2206 = vmatpush.bf16.msra.mxu0 %v1714
      %2207 = vmatmul.bf16.gmra.mxu0 %v898
      %v2208 = vpop.f32.mrf.mxu0
      %v2209 = vadd.f32 %v2160, %v2208
      %v2210 = vpop.f32.mrf.mxu0
      %v2211 = vadd.f32 %v2162, %v2210
      %2212 = vmatmul.bf16.gmra.mxu0 %v905
      %v2213 = vpop.f32.mrf.mxu0
      %v2214 = vadd.f32 %v2165, %v2213
      %v2215 = vpop.f32.mrf.mxu0
      %v2216 = vadd.f32 %v2167, %v2215
      %2217 = vmatmul.bf16.gmra.mxu0 %v912
      %v2218 = vpop.f32.mrf.mxu0
      %v2219 = vadd.f32 %v2170, %v2218
      %v2220 = vpop.f32.mrf.mxu0
      %v2221 = vadd.f32 %v2172, %v2220
      %2222 = vmatmul.bf16.gmra.mxu0 %v919
      %v2223 = vpop.f32.mrf.mxu0
      %v2224 = vadd.f32 %v2175, %v2223
      %v2225 = vpop.f32.mrf.mxu0
      %v2226 = vadd.f32 %v2177, %v2225
      %2227 = vmatmul.bf16.gmra.mxu0 %v926
      %v2228 = vpop.f32.mrf.mxu0
      %v2229 = vadd.f32 %v2180, %v2228
      %v2230 = vpop.f32.mrf.mxu0
      %v2231 = vadd.f32 %v2182, %v2230
      %2232 = vmatmul.bf16.gmra.mxu0 %v933
      %v2233 = vpop.f32.mrf.mxu0
      %v2234 = vadd.f32 %v2185, %v2233
      %v2235 = vpop.f32.mrf.mxu0
      %v2236 = vadd.f32 %v2187, %v2235
      %2237 = vmatmul.bf16.gmra.mxu0 %v940
      %v2238 = vpop.f32.mrf.mxu0
      %v2239 = vadd.f32 %v2190, %v2238
      %v2240 = vpop.f32.mrf.mxu0
      %v2241 = vadd.f32 %v2192, %v2240
      %2242 = vmatmul.bf16.gmra.mxu0 %v947
      %v2243 = vpop.f32.mrf.mxu0
      %v2244 = vadd.f32 %v2195, %v2243
      %v2245 = vpop.f32.mrf.mxu0
      %v2246 = vadd.f32 %v2197, %v2245
      %2247 = vdwg.mxu0
      %2248 = vmatpush.bf16.msra.mxu0 %v1774
      %2249 = vmatpush.bf16.msra.mxu0 %v1770
      %2250 = vmatpush.bf16.msra.mxu0 %v1766
      %2251 = vmatpush.bf16.msra.mxu0 %v1762
      %2252 = vmatpush.bf16.msra.mxu0 %v1758
      %2253 = vmatpush.bf16.msra.mxu0 %v1754
      %2254 = vmatpush.bf16.msra.mxu0 %v1750
      %2255 = vmatpush.bf16.msra.mxu0 %v1746
      %2256 = vmatmul.bf16.gmra.mxu0 %v899
      %v2257 = vpop.f32.mrf.mxu0
      %v2258 = vadd.f32 %v2209, %v2257
      %v2259 = vpop.f32.mrf.mxu0
      %v2260 = vadd.f32 %v2211, %v2259
      %2261 = vmatmul.bf16.gmra.mxu0 %v906
      %v2262 = vpop.f32.mrf.mxu0
      %v2263 = vadd.f32 %v2214, %v2262
      %v2264 = vpop.f32.mrf.mxu0
      %v2265 = vadd.f32 %v2216, %v2264
      %2266 = vmatmul.bf16.gmra.mxu0 %v913
      %v2267 = vpop.f32.mrf.mxu0
      %v2268 = vadd.f32 %v2219, %v2267
      %v2269 = vpop.f32.mrf.mxu0
      %v2270 = vadd.f32 %v2221, %v2269
      %2271 = vmatmul.bf16.gmra.mxu0 %v920
      %v2272 = vpop.f32.mrf.mxu0
      %v2273 = vadd.f32 %v2224, %v2272
      %v2274 = vpop.f32.mrf.mxu0
      %v2275 = vadd.f32 %v2226, %v2274
      %2276 = vmatmul.bf16.gmra.mxu0 %v927
      %v2277 = vpop.f32.mrf.mxu0
      %v2278 = vadd.f32 %v2229, %v2277
      %v2279 = vpop.f32.mrf.mxu0
      %v2280 = vadd.f32 %v2231, %v2279
      %2281 = vmatmul.bf16.gmra.mxu0 %v934
      %v2282 = vpop.f32.mrf.mxu0
      %v2283 = vadd.f32 %v2234, %v2282
      %v2284 = vpop.f32.mrf.mxu0
      %v2285 = vadd.f32 %v2236, %v2284
      %2286 = vmatmul.bf16.gmra.mxu0 %v941
      %v2287 = vpop.f32.mrf.mxu0
      %v2288 = vadd.f32 %v2239, %v2287
      %v2289 = vpop.f32.mrf.mxu0
      %v2290 = vadd.f32 %v2241, %v2289
      %2291 = vmatmul.bf16.gmra.mxu0 %v948
      %v2292 = vpop.f32.mrf.mxu0
      %v2293 = vadd.f32 %v2244, %v2292
      %v2294 = vpop.f32.mrf.mxu0
      %v2295 = vadd.f32 %v2246, %v2294
      %2296 = vdwg.mxu0
      %2297 = vmatpush.bf16.msra.mxu0 0
      %2298 = vmatpush.bf16.msra.mxu0 0
      %2299 = vmatpush.bf16.msra.mxu0 0
      %2300 = vmatpush.bf16.msra.mxu0 0
      %2301 = vmatpush.bf16.msra.mxu0 0
      %2302 = vmatpush.bf16.msra.mxu0 0
      %2303 = vmatpush.bf16.msra.mxu0 0
      %2304 = vmatpush.bf16.msra.mxu0 %v1778
      %2305 = vmatmul.bf16.gmra.mxu0 %v1980
      %v2306 = vpop.f32.mrf.mxu0
      %v2307 = vadd.f32 %v2258, %v2306
      %v2308 = vpop.f32.mrf.mxu0
      %v2309 = vadd.f32 %v2260, %v2308
      %2310 = vmatmul.bf16.gmra.mxu0 %v1983
      %v2311 = vpop.f32.mrf.mxu0
      %v2312 = vadd.f32 %v2263, %v2311
      %v2313 = vpop.f32.mrf.mxu0
      %v2314 = vadd.f32 %v2265, %v2313
      %2315 = vmatmul.bf16.gmra.mxu0 %v1986
      %v2316 = vpop.f32.mrf.mxu0
      %v2317 = vadd.f32 %v2268, %v2316
      %v2318 = vpop.f32.mrf.mxu0
      %v2319 = vadd.f32 %v2270, %v2318
      %2320 = vmatmul.bf16.gmra.mxu0 %v1989
      %v2321 = vpop.f32.mrf.mxu0
      %v2322 = vadd.f32 %v2273, %v2321
      %v2323 = vpop.f32.mrf.mxu0
      %v2324 = vadd.f32 %v2275, %v2323
      %2325 = vmatmul.bf16.gmra.mxu0 %v1992
      %v2326 = vpop.f32.mrf.mxu0
      %v2327 = vadd.f32 %v2278, %v2326
      %v2328 = vpop.f32.mrf.mxu0
      %v2329 = vadd.f32 %v2280, %v2328
      %2330 = vmatmul.bf16.gmra.mxu0 %v1995
      %v2331 = vpop.f32.mrf.mxu0
      %v2332 = vadd.f32 %v2283, %v2331
      %v2333 = vpop.f32.mrf.mxu0
      %v2334 = vadd.f32 %v2285, %v2333
      %2335 = vmatmul.bf16.gmra.mxu0 %v1998
      %v2336 = vpop.f32.mrf.mxu0
      %v2337 = vadd.f32 %v2288, %v2336
      %v2338 = vpop.f32.mrf.mxu0
      %v2339 = vadd.f32 %v2290, %v2338
      %2340 = vmatmul.bf16.gmra.mxu0 %v2001
      %v2341 = vpop.f32.mrf.mxu0
      %v2342 = vadd.f32 %v2293, %v2341
      %v2343 = vpop.f32.mrf.mxu0
      %v2344 = vadd.f32 %v2295, %v2343
      %2345 = vdwg.mxu0
      %2346 = vmatpush.bf16.msra.mxu0 %v1615
      %2347 = vmatpush.bf16.msra.mxu0 %v1611
      %2348 = vmatpush.bf16.msra.mxu0 %v1607
      %2349 = vmatpush.bf16.msra.mxu0 %v1603
      %2350 = vmatpush.bf16.msra.mxu0 %v1599
      %2351 = vmatpush.bf16.msra.mxu0 %v1595
      %2352 = vmatpush.bf16.msra.mxu0 %v1591
      %2353 = vmatpush.bf16.msra.mxu0 %v1587
      %2354 = vmatmul.bf16.gmra.mxu0 %v894
      %v2355 = vpop.f32.mrf.mxu0
      %v2356 = vadd.f32 %v711, %v2355
      %v2357 = vpop.f32.mrf.mxu0
      %v2358 = vadd.f32 %v711, %v2357
      %2359 = vmatmul.bf16.gmra.mxu0 %v901
      %v2360 = vpop.f32.mrf.mxu0
      %v2361 = vadd.f32 %v711, %v2360
      %v2362 = vpop.f32.mrf.mxu0
      %v2363 = vadd.f32 %v711, %v2362
      %2364 = vmatmul.bf16.gmra.mxu0 %v908
      %v2365 = vpop.f32.mrf.mxu0
      %v2366 = vadd.f32 %v711, %v2365
      %v2367 = vpop.f32.mrf.mxu0
      %v2368 = vadd.f32 %v711, %v2367
      %2369 = vmatmul.bf16.gmra.mxu0 %v915
      %v2370 = vpop.f32.mrf.mxu0
      %v2371 = vadd.f32 %v711, %v2370
      %v2372 = vpop.f32.mrf.mxu0
      %v2373 = vadd.f32 %v711, %v2372
      %2374 = vmatmul.bf16.gmra.mxu0 %v922
      %v2375 = vpop.f32.mrf.mxu0
      %v2376 = vadd.f32 %v711, %v2375
      %v2377 = vpop.f32.mrf.mxu0
      %v2378 = vadd.f32 %v711, %v2377
      %2379 = vmatmul.bf16.gmra.mxu0 %v929
      %v2380 = vpop.f32.mrf.mxu0
      %v2381 = vadd.f32 %v711, %v2380
      %v2382 = vpop.f32.mrf.mxu0
      %v2383 = vadd.f32 %v711, %v2382
      %2384 = vmatmul.bf16.gmra.mxu0 %v936
      %v2385 = vpop.f32.mrf.mxu0
      %v2386 = vadd.f32 %v711, %v2385
      %v2387 = vpop.f32.mrf.mxu0
      %v2388 = vadd.f32 %v711, %v2387
      %2389 = vmatmul.bf16.gmra.mxu0 %v943
      %v2390 = vpop.f32.mrf.mxu0
      %v2391 = vadd.f32 %v711, %v2390
      %v2392 = vpop.f32.mrf.mxu0
      %v2393 = vadd.f32 %v711, %v2392
      %2394 = vdwg.mxu0
      %2395 = vmatpush.bf16.msra.mxu0 %v1647
      %2396 = vmatpush.bf16.msra.mxu0 %v1643
      %2397 = vmatpush.bf16.msra.mxu0 %v1639
      %2398 = vmatpush.bf16.msra.mxu0 %v1635
      %2399 = vmatpush.bf16.msra.mxu0 %v1631
      %2400 = vmatpush.bf16.msra.mxu0 %v1627
      %2401 = vmatpush.bf16.msra.mxu0 %v1623
      %2402 = vmatpush.bf16.msra.mxu0 %v1619
      %2403 = vmatmul.bf16.gmra.mxu0 %v895
      %v2404 = vpop.f32.mrf.mxu0
      %v2405 = vadd.f32 %v2356, %v2404
      %v2406 = vpop.f32.mrf.mxu0
      %v2407 = vadd.f32 %v2358, %v2406
      %2408 = vmatmul.bf16.gmra.mxu0 %v902
      %v2409 = vpop.f32.mrf.mxu0
      %v2410 = vadd.f32 %v2361, %v2409
      %v2411 = vpop.f32.mrf.mxu0
      %v2412 = vadd.f32 %v2363, %v2411
      %2413 = vmatmul.bf16.gmra.mxu0 %v909
      %v2414 = vpop.f32.mrf.mxu0
      %v2415 = vadd.f32 %v2366, %v2414
      %v2416 = vpop.f32.mrf.mxu0
      %v2417 = vadd.f32 %v2368, %v2416
      %2418 = vmatmul.bf16.gmra.mxu0 %v916
      %v2419 = vpop.f32.mrf.mxu0
      %v2420 = vadd.f32 %v2371, %v2419
      %v2421 = vpop.f32.mrf.mxu0
      %v2422 = vadd.f32 %v2373, %v2421
      %2423 = vmatmul.bf16.gmra.mxu0 %v923
      %v2424 = vpop.f32.mrf.mxu0
      %v2425 = vadd.f32 %v2376, %v2424
      %v2426 = vpop.f32.mrf.mxu0
      %v2427 = vadd.f32 %v2378, %v2426
      %2428 = vmatmul.bf16.gmra.mxu0 %v930
      %v2429 = vpop.f32.mrf.mxu0
      %v2430 = vadd.f32 %v2381, %v2429
      %v2431 = vpop.f32.mrf.mxu0
      %v2432 = vadd.f32 %v2383, %v2431
      %2433 = vmatmul.bf16.gmra.mxu0 %v937
      %v2434 = vpop.f32.mrf.mxu0
      %v2435 = vadd.f32 %v2386, %v2434
      %v2436 = vpop.f32.mrf.mxu0
      %v2437 = vadd.f32 %v2388, %v2436
      %2438 = vmatmul.bf16.gmra.mxu0 %v944
      %v2439 = vpop.f32.mrf.mxu0
      %v2440 = vadd.f32 %v2391, %v2439
      %v2441 = vpop.f32.mrf.mxu0
      %v2442 = vadd.f32 %v2393, %v2441
      %2443 = vdwg.mxu0
      %2444 = vmatpush.bf16.msra.mxu0 %v1679
      %2445 = vmatpush.bf16.msra.mxu0 %v1675
      %2446 = vmatpush.bf16.msra.mxu0 %v1671
      %2447 = vmatpush.bf16.msra.mxu0 %v1667
      %2448 = vmatpush.bf16.msra.mxu0 %v1663
      %2449 = vmatpush.bf16.msra.mxu0 %v1659
      %2450 = vmatpush.bf16.msra.mxu0 %v1655
      %2451 = vmatpush.bf16.msra.mxu0 %v1651
      %2452 = vmatmul.bf16.gmra.mxu0 %v896
      %v2453 = vpop.f32.mrf.mxu0
      %v2454 = vadd.f32 %v2405, %v2453
      %v2455 = vpop.f32.mrf.mxu0
      %v2456 = vadd.f32 %v2407, %v2455
      %2457 = vmatmul.bf16.gmra.mxu0 %v903
      %v2458 = vpop.f32.mrf.mxu0
      %v2459 = vadd.f32 %v2410, %v2458
      %v2460 = vpop.f32.mrf.mxu0
      %v2461 = vadd.f32 %v2412, %v2460
      %2462 = vmatmul.bf16.gmra.mxu0 %v910
      %v2463 = vpop.f32.mrf.mxu0
      %v2464 = vadd.f32 %v2415, %v2463
      %v2465 = vpop.f32.mrf.mxu0
      %v2466 = vadd.f32 %v2417, %v2465
      %2467 = vmatmul.bf16.gmra.mxu0 %v917
      %v2468 = vpop.f32.mrf.mxu0
      %v2469 = vadd.f32 %v2420, %v2468
      %v2470 = vpop.f32.mrf.mxu0
      %v2471 = vadd.f32 %v2422, %v2470
      %2472 = vmatmul.bf16.gmra.mxu0 %v924
      %v2473 = vpop.f32.mrf.mxu0
      %v2474 = vadd.f32 %v2425, %v2473
      %v2475 = vpop.f32.mrf.mxu0
      %v2476 = vadd.f32 %v2427, %v2475
      %2477 = vmatmul.bf16.gmra.mxu0 %v931
      %v2478 = vpop.f32.mrf.mxu0
      %v2479 = vadd.f32 %v2430, %v2478
      %v2480 = vpop.f32.mrf.mxu0
      %v2481 = vadd.f32 %v2432, %v2480
      %2482 = vmatmul.bf16.gmra.mxu0 %v938
      %v2483 = vpop.f32.mrf.mxu0
      %v2484 = vadd.f32 %v2435, %v2483
      %v2485 = vpop.f32.mrf.mxu0
      %v2486 = vadd.f32 %v2437, %v2485
      %2487 = vmatmul.bf16.gmra.mxu0 %v945
      %v2488 = vpop.f32.mrf.mxu0
      %v2489 = vadd.f32 %v2440, %v2488
      %v2490 = vpop.f32.mrf.mxu0
      %v2491 = vadd.f32 %v2442, %v2490
      %2492 = vdwg.mxu0
      %2493 = vmatpush.bf16.msra.mxu0 %v1711
      %2494 = vmatpush.bf16.msra.mxu0 %v1707
      %2495 = vmatpush.bf16.msra.mxu0 %v1703
      %2496 = vmatpush.bf16.msra.mxu0 %v1699
      %2497 = vmatpush.bf16.msra.mxu0 %v1695
      %2498 = vmatpush.bf16.msra.mxu0 %v1691
      %2499 = vmatpush.bf16.msra.mxu0 %v1687
      %2500 = vmatpush.bf16.msra.mxu0 %v1683
      %2501 = vmatmul.bf16.gmra.mxu0 %v897
      %v2502 = vpop.f32.mrf.mxu0
      %v2503 = vadd.f32 %v2454, %v2502
      %v2504 = vpop.f32.mrf.mxu0
      %v2505 = vadd.f32 %v2456, %v2504
      %2506 = vmatmul.bf16.gmra.mxu0 %v904
      %v2507 = vpop.f32.mrf.mxu0
      %v2508 = vadd.f32 %v2459, %v2507
      %v2509 = vpop.f32.mrf.mxu0
      %v2510 = vadd.f32 %v2461, %v2509
      %2511 = vmatmul.bf16.gmra.mxu0 %v911
      %v2512 = vpop.f32.mrf.mxu0
      %v2513 = vadd.f32 %v2464, %v2512
      %v2514 = vpop.f32.mrf.mxu0
      %v2515 = vadd.f32 %v2466, %v2514
      %2516 = vmatmul.bf16.gmra.mxu0 %v918
      %v2517 = vpop.f32.mrf.mxu0
      %v2518 = vadd.f32 %v2469, %v2517
      %v2519 = vpop.f32.mrf.mxu0
      %v2520 = vadd.f32 %v2471, %v2519
      %2521 = vmatmul.bf16.gmra.mxu0 %v925
      %v2522 = vpop.f32.mrf.mxu0
      %v2523 = vadd.f32 %v2474, %v2522
      %v2524 = vpop.f32.mrf.mxu0
      %v2525 = vadd.f32 %v2476, %v2524
      %2526 = vmatmul.bf16.gmra.mxu0 %v932
      %v2527 = vpop.f32.mrf.mxu0
      %v2528 = vadd.f32 %v2479, %v2527
      %v2529 = vpop.f32.mrf.mxu0
      %v2530 = vadd.f32 %v2481, %v2529
      %2531 = vmatmul.bf16.gmra.mxu0 %v939
      %v2532 = vpop.f32.mrf.mxu0
      %v2533 = vadd.f32 %v2484, %v2532
      %v2534 = vpop.f32.mrf.mxu0
      %v2535 = vadd.f32 %v2486, %v2534
      %2536 = vmatmul.bf16.gmra.mxu0 %v946
      %v2537 = vpop.f32.mrf.mxu0
      %v2538 = vadd.f32 %v2489, %v2537
      %v2539 = vpop.f32.mrf.mxu0
      %v2540 = vadd.f32 %v2491, %v2539
      %2541 = vdwg.mxu0
      %2542 = vmatpush.bf16.msra.mxu0 %v1743
      %2543 = vmatpush.bf16.msra.mxu0 %v1739
      %2544 = vmatpush.bf16.msra.mxu0 %v1735
      %2545 = vmatpush.bf16.msra.mxu0 %v1731
      %2546 = vmatpush.bf16.msra.mxu0 %v1727
      %2547 = vmatpush.bf16.msra.mxu0 %v1723
      %2548 = vmatpush.bf16.msra.mxu0 %v1719
      %2549 = vmatpush.bf16.msra.mxu0 %v1715
      %2550 = vmatmul.bf16.gmra.mxu0 %v898
      %v2551 = vpop.f32.mrf.mxu0
      %v2552 = vadd.f32 %v2503, %v2551
      %v2553 = vpop.f32.mrf.mxu0
      %v2554 = vadd.f32 %v2505, %v2553
      %2555 = vmatmul.bf16.gmra.mxu0 %v905
      %v2556 = vpop.f32.mrf.mxu0
      %v2557 = vadd.f32 %v2508, %v2556
      %v2558 = vpop.f32.mrf.mxu0
      %v2559 = vadd.f32 %v2510, %v2558
      %2560 = vmatmul.bf16.gmra.mxu0 %v912
      %v2561 = vpop.f32.mrf.mxu0
      %v2562 = vadd.f32 %v2513, %v2561
      %v2563 = vpop.f32.mrf.mxu0
      %v2564 = vadd.f32 %v2515, %v2563
      %2565 = vmatmul.bf16.gmra.mxu0 %v919
      %v2566 = vpop.f32.mrf.mxu0
      %v2567 = vadd.f32 %v2518, %v2566
      %v2568 = vpop.f32.mrf.mxu0
      %v2569 = vadd.f32 %v2520, %v2568
      %2570 = vmatmul.bf16.gmra.mxu0 %v926
      %v2571 = vpop.f32.mrf.mxu0
      %v2572 = vadd.f32 %v2523, %v2571
      %v2573 = vpop.f32.mrf.mxu0
      %v2574 = vadd.f32 %v2525, %v2573
      %2575 = vmatmul.bf16.gmra.mxu0 %v933
      %v2576 = vpop.f32.mrf.mxu0
      %v2577 = vadd.f32 %v2528, %v2576
      %v2578 = vpop.f32.mrf.mxu0
      %v2579 = vadd.f32 %v2530, %v2578
      %2580 = vmatmul.bf16.gmra.mxu0 %v940
      %v2581 = vpop.f32.mrf.mxu0
      %v2582 = vadd.f32 %v2533, %v2581
      %v2583 = vpop.f32.mrf.mxu0
      %v2584 = vadd.f32 %v2535, %v2583
      %2585 = vmatmul.bf16.gmra.mxu0 %v947
      %v2586 = vpop.f32.mrf.mxu0
      %v2587 = vadd.f32 %v2538, %v2586
      %v2588 = vpop.f32.mrf.mxu0
      %v2589 = vadd.f32 %v2540, %v2588
      %2590 = vdwg.mxu0
      %2591 = vmatpush.bf16.msra.mxu0 %v1775
      %2592 = vmatpush.bf16.msra.mxu0 %v1771
      %2593 = vmatpush.bf16.msra.mxu0 %v1767
      %2594 = vmatpush.bf16.msra.mxu0 %v1763
      %2595 = vmatpush.bf16.msra.mxu0 %v1759
      %2596 = vmatpush.bf16.msra.mxu0 %v1755
      %2597 = vmatpush.bf16.msra.mxu0 %v1751
      %2598 = vmatpush.bf16.msra.mxu0 %v1747
      %2599 = vmatmul.bf16.gmra.mxu0 %v899
      %v2600 = vpop.f32.mrf.mxu0
      %v2601 = vadd.f32 %v2552, %v2600
      %v2602 = vpop.f32.mrf.mxu0
      %v2603 = vadd.f32 %v2554, %v2602
      %2604 = vmatmul.bf16.gmra.mxu0 %v906
      %v2605 = vpop.f32.mrf.mxu0
      %v2606 = vadd.f32 %v2557, %v2605
      %v2607 = vpop.f32.mrf.mxu0
      %v2608 = vadd.f32 %v2559, %v2607
      %2609 = vmatmul.bf16.gmra.mxu0 %v913
      %v2610 = vpop.f32.mrf.mxu0
      %v2611 = vadd.f32 %v2562, %v2610
      %v2612 = vpop.f32.mrf.mxu0
      %v2613 = vadd.f32 %v2564, %v2612
      %2614 = vmatmul.bf16.gmra.mxu0 %v920
      %v2615 = vpop.f32.mrf.mxu0
      %v2616 = vadd.f32 %v2567, %v2615
      %v2617 = vpop.f32.mrf.mxu0
      %v2618 = vadd.f32 %v2569, %v2617
      %2619 = vmatmul.bf16.gmra.mxu0 %v927
      %v2620 = vpop.f32.mrf.mxu0
      %v2621 = vadd.f32 %v2572, %v2620
      %v2622 = vpop.f32.mrf.mxu0
      %v2623 = vadd.f32 %v2574, %v2622
      %2624 = vmatmul.bf16.gmra.mxu0 %v934
      %v2625 = vpop.f32.mrf.mxu0
      %v2626 = vadd.f32 %v2577, %v2625
      %v2627 = vpop.f32.mrf.mxu0
      %v2628 = vadd.f32 %v2579, %v2627
      %2629 = vmatmul.bf16.gmra.mxu0 %v941
      %v2630 = vpop.f32.mrf.mxu0
      %v2631 = vadd.f32 %v2582, %v2630
      %v2632 = vpop.f32.mrf.mxu0
      %v2633 = vadd.f32 %v2584, %v2632
      %2634 = vmatmul.bf16.gmra.mxu0 %v948
      %v2635 = vpop.f32.mrf.mxu0
      %v2636 = vadd.f32 %v2587, %v2635
      %v2637 = vpop.f32.mrf.mxu0
      %v2638 = vadd.f32 %v2589, %v2637
      %2639 = vdwg.mxu0
      %2640 = vmatpush.bf16.msra.mxu0 0
      %2641 = vmatpush.bf16.msra.mxu0 0
      %2642 = vmatpush.bf16.msra.mxu0 0
      %2643 = vmatpush.bf16.msra.mxu0 0
      %2644 = vmatpush.bf16.msra.mxu0 0
      %2645 = vmatpush.bf16.msra.mxu0 0
      %2646 = vmatpush.bf16.msra.mxu0 0
      %2647 = vmatpush.bf16.msra.mxu0 %v1779
      %2648 = vmatmul.bf16.gmra.mxu0 %v1980
      %v2649 = vpop.f32.mrf.mxu0
      %v2650 = vadd.f32 %v2601, %v2649
      %v2651 = vpop.f32.mrf.mxu0
      %v2652 = vadd.f32 %v2603, %v2651
      %2653 = vmatmul.bf16.gmra.mxu0 %v1983
      %v2654 = vpop.f32.mrf.mxu0
      %v2655 = vadd.f32 %v2606, %v2654
      %v2656 = vpop.f32.mrf.mxu0
      %v2657 = vadd.f32 %v2608, %v2656
      %2658 = vmatmul.bf16.gmra.mxu0 %v1986
      %v2659 = vpop.f32.mrf.mxu0
      %v2660 = vadd.f32 %v2611, %v2659
      %v2661 = vpop.f32.mrf.mxu0
      %v2662 = vadd.f32 %v2613, %v2661
      %2663 = vmatmul.bf16.gmra.mxu0 %v1989
      %v2664 = vpop.f32.mrf.mxu0
      %v2665 = vadd.f32 %v2616, %v2664
      %v2666 = vpop.f32.mrf.mxu0
      %v2667 = vadd.f32 %v2618, %v2666
      %2668 = vmatmul.bf16.gmra.mxu0 %v1992
      %v2669 = vpop.f32.mrf.mxu0
      %v2670 = vadd.f32 %v2621, %v2669
      %v2671 = vpop.f32.mrf.mxu0
      %v2672 = vadd.f32 %v2623, %v2671
      %2673 = vmatmul.bf16.gmra.mxu0 %v1995
      %v2674 = vpop.f32.mrf.mxu0
      %v2675 = vadd.f32 %v2626, %v2674
      %v2676 = vpop.f32.mrf.mxu0
      %v2677 = vadd.f32 %v2628, %v2676
      %2678 = vmatmul.bf16.gmra.mxu0 %v1998
      %v2679 = vpop.f32.mrf.mxu0
      %v2680 = vadd.f32 %v2631, %v2679
      %v2681 = vpop.f32.mrf.mxu0
      %v2682 = vadd.f32 %v2633, %v2681
      %2683 = vmatmul.bf16.gmra.mxu0 %v2001
      %v2684 = vpop.f32.mrf.mxu0
      %v2685 = vadd.f32 %v2636, %v2684
      %v2686 = vpop.f32.mrf.mxu0
      %v2687 = vadd.f32 %v2638, %v2686
      %2688 = vdwg.mxu0
      %2689 = vmatpush.bf16.msra.mxu0 %v1616
      %2690 = vmatpush.bf16.msra.mxu0 %v1612
      %2691 = vmatpush.bf16.msra.mxu0 %v1608
      %2692 = vmatpush.bf16.msra.mxu0 %v1604
      %2693 = vmatpush.bf16.msra.mxu0 %v1600
      %2694 = vmatpush.bf16.msra.mxu0 %v1596
      %2695 = vmatpush.bf16.msra.mxu0 %v1592
      %2696 = vmatpush.bf16.msra.mxu0 %v1588
      %2697 = vmatmul.bf16.gmra.mxu0 %v894
      %v2698 = vpop.f32.mrf.mxu0
      %v2699 = vadd.f32 %v712, %v2698
      %v2700 = vpop.f32.mrf.mxu0
      %v2701 = vadd.f32 %v712, %v2700
      %2702 = vmatmul.bf16.gmra.mxu0 %v901
      %v2703 = vpop.f32.mrf.mxu0
      %v2704 = vadd.f32 %v712, %v2703
      %v2705 = vpop.f32.mrf.mxu0
      %v2706 = vadd.f32 %v712, %v2705
      %2707 = vmatmul.bf16.gmra.mxu0 %v908
      %v2708 = vpop.f32.mrf.mxu0
      %v2709 = vadd.f32 %v712, %v2708
      %v2710 = vpop.f32.mrf.mxu0
      %v2711 = vadd.f32 %v712, %v2710
      %2712 = vmatmul.bf16.gmra.mxu0 %v915
      %v2713 = vpop.f32.mrf.mxu0
      %v2714 = vadd.f32 %v712, %v2713
      %v2715 = vpop.f32.mrf.mxu0
      %v2716 = vadd.f32 %v712, %v2715
      %2717 = vmatmul.bf16.gmra.mxu0 %v922
      %v2718 = vpop.f32.mrf.mxu0
      %v2719 = vadd.f32 %v712, %v2718
      %v2720 = vpop.f32.mrf.mxu0
      %v2721 = vadd.f32 %v712, %v2720
      %2722 = vmatmul.bf16.gmra.mxu0 %v929
      %v2723 = vpop.f32.mrf.mxu0
      %v2724 = vadd.f32 %v712, %v2723
      %v2725 = vpop.f32.mrf.mxu0
      %v2726 = vadd.f32 %v712, %v2725
      %2727 = vmatmul.bf16.gmra.mxu0 %v936
      %v2728 = vpop.f32.mrf.mxu0
      %v2729 = vadd.f32 %v712, %v2728
      %v2730 = vpop.f32.mrf.mxu0
      %v2731 = vadd.f32 %v712, %v2730
      %2732 = vmatmul.bf16.gmra.mxu0 %v943
      %v2733 = vpop.f32.mrf.mxu0
      %v2734 = vadd.f32 %v712, %v2733
      %v2735 = vpop.f32.mrf.mxu0
      %v2736 = vadd.f32 %v712, %v2735
      %2737 = vdwg.mxu0
      %2738 = vmatpush.bf16.msra.mxu0 %v1648
      %2739 = vmatpush.bf16.msra.mxu0 %v1644
      %2740 = vmatpush.bf16.msra.mxu0 %v1640
      %2741 = vmatpush.bf16.msra.mxu0 %v1636
      %2742 = vmatpush.bf16.msra.mxu0 %v1632
      %2743 = vmatpush.bf16.msra.mxu0 %v1628
      %2744 = vmatpush.bf16.msra.mxu0 %v1624
      %2745 = vmatpush.bf16.msra.mxu0 %v1620
      %2746 = vmatmul.bf16.gmra.mxu0 %v895
      %v2747 = vpop.f32.mrf.mxu0
      %v2748 = vadd.f32 %v2699, %v2747
      %v2749 = vpop.f32.mrf.mxu0
      %v2750 = vadd.f32 %v2701, %v2749
      %2751 = vmatmul.bf16.gmra.mxu0 %v902
      %v2752 = vpop.f32.mrf.mxu0
      %v2753 = vadd.f32 %v2704, %v2752
      %v2754 = vpop.f32.mrf.mxu0
      %v2755 = vadd.f32 %v2706, %v2754
      %2756 = vmatmul.bf16.gmra.mxu0 %v909
      %v2757 = vpop.f32.mrf.mxu0
      %v2758 = vadd.f32 %v2709, %v2757
      %v2759 = vpop.f32.mrf.mxu0
      %v2760 = vadd.f32 %v2711, %v2759
      %2761 = vmatmul.bf16.gmra.mxu0 %v916
      %v2762 = vpop.f32.mrf.mxu0
      %v2763 = vadd.f32 %v2714, %v2762
      %v2764 = vpop.f32.mrf.mxu0
      %v2765 = vadd.f32 %v2716, %v2764
      %2766 = vmatmul.bf16.gmra.mxu0 %v923
      %v2767 = vpop.f32.mrf.mxu0
      %v2768 = vadd.f32 %v2719, %v2767
      %v2769 = vpop.f32.mrf.mxu0
      %v2770 = vadd.f32 %v2721, %v2769
      %2771 = vmatmul.bf16.gmra.mxu0 %v930
      %v2772 = vpop.f32.mrf.mxu0
      %v2773 = vadd.f32 %v2724, %v2772
      %v2774 = vpop.f32.mrf.mxu0
      %v2775 = vadd.f32 %v2726, %v2774
      %2776 = vmatmul.bf16.gmra.mxu0 %v937
      %v2777 = vpop.f32.mrf.mxu0
      %v2778 = vadd.f32 %v2729, %v2777
      %v2779 = vpop.f32.mrf.mxu0
      %v2780 = vadd.f32 %v2731, %v2779
      %2781 = vmatmul.bf16.gmra.mxu0 %v944
      %v2782 = vpop.f32.mrf.mxu0
      %v2783 = vadd.f32 %v2734, %v2782
      %v2784 = vpop.f32.mrf.mxu0
      %v2785 = vadd.f32 %v2736, %v2784
      %2786 = vdwg.mxu0
      %2787 = vmatpush.bf16.msra.mxu0 %v1680
      %2788 = vmatpush.bf16.msra.mxu0 %v1676
      %2789 = vmatpush.bf16.msra.mxu0 %v1672
      %2790 = vmatpush.bf16.msra.mxu0 %v1668
      %2791 = vmatpush.bf16.msra.mxu0 %v1664
      %2792 = vmatpush.bf16.msra.mxu0 %v1660
      %2793 = vmatpush.bf16.msra.mxu0 %v1656
      %2794 = vmatpush.bf16.msra.mxu0 %v1652
      %2795 = vmatmul.bf16.gmra.mxu0 %v896
      %v2796 = vpop.f32.mrf.mxu0
      %v2797 = vadd.f32 %v2748, %v2796
      %v2798 = vpop.f32.mrf.mxu0
      %v2799 = vadd.f32 %v2750, %v2798
      %2800 = vmatmul.bf16.gmra.mxu0 %v903
      %v2801 = vpop.f32.mrf.mxu0
      %v2802 = vadd.f32 %v2753, %v2801
      %v2803 = vpop.f32.mrf.mxu0
      %v2804 = vadd.f32 %v2755, %v2803
      %2805 = vmatmul.bf16.gmra.mxu0 %v910
      %v2806 = vpop.f32.mrf.mxu0
      %v2807 = vadd.f32 %v2758, %v2806
      %v2808 = vpop.f32.mrf.mxu0
      %v2809 = vadd.f32 %v2760, %v2808
      %2810 = vmatmul.bf16.gmra.mxu0 %v917
      %v2811 = vpop.f32.mrf.mxu0
      %v2812 = vadd.f32 %v2763, %v2811
      %v2813 = vpop.f32.mrf.mxu0
      %v2814 = vadd.f32 %v2765, %v2813
      %2815 = vmatmul.bf16.gmra.mxu0 %v924
      %v2816 = vpop.f32.mrf.mxu0
      %v2817 = vadd.f32 %v2768, %v2816
      %v2818 = vpop.f32.mrf.mxu0
      %v2819 = vadd.f32 %v2770, %v2818
      %2820 = vmatmul.bf16.gmra.mxu0 %v931
      %v2821 = vpop.f32.mrf.mxu0
      %v2822 = vadd.f32 %v2773, %v2821
      %v2823 = vpop.f32.mrf.mxu0
      %v2824 = vadd.f32 %v2775, %v2823
      %2825 = vmatmul.bf16.gmra.mxu0 %v938
      %v2826 = vpop.f32.mrf.mxu0
      %v2827 = vadd.f32 %v2778, %v2826
      %v2828 = vpop.f32.mrf.mxu0
      %v2829 = vadd.f32 %v2780, %v2828
      %2830 = vmatmul.bf16.gmra.mxu0 %v945
      %v2831 = vpop.f32.mrf.mxu0
      %v2832 = vadd.f32 %v2783, %v2831
      %v2833 = vpop.f32.mrf.mxu0
      %v2834 = vadd.f32 %v2785, %v2833
      %2835 = vdwg.mxu0
      %2836 = vmatpush.bf16.msra.mxu0 %v1712
      %2837 = vmatpush.bf16.msra.mxu0 %v1708
      %2838 = vmatpush.bf16.msra.mxu0 %v1704
      %2839 = vmatpush.bf16.msra.mxu0 %v1700
      %2840 = vmatpush.bf16.msra.mxu0 %v1696
      %2841 = vmatpush.bf16.msra.mxu0 %v1692
      %2842 = vmatpush.bf16.msra.mxu0 %v1688
      %2843 = vmatpush.bf16.msra.mxu0 %v1684
      %2844 = vmatmul.bf16.gmra.mxu0 %v897
      %v2845 = vpop.f32.mrf.mxu0
      %v2846 = vadd.f32 %v2797, %v2845
      %v2847 = vpop.f32.mrf.mxu0
      %v2848 = vadd.f32 %v2799, %v2847
      %2849 = vmatmul.bf16.gmra.mxu0 %v904
      %v2850 = vpop.f32.mrf.mxu0
      %v2851 = vadd.f32 %v2802, %v2850
      %v2852 = vpop.f32.mrf.mxu0
      %v2853 = vadd.f32 %v2804, %v2852
      %2854 = vmatmul.bf16.gmra.mxu0 %v911
      %v2855 = vpop.f32.mrf.mxu0
      %v2856 = vadd.f32 %v2807, %v2855
      %v2857 = vpop.f32.mrf.mxu0
      %v2858 = vadd.f32 %v2809, %v2857
      %2859 = vmatmul.bf16.gmra.mxu0 %v918
      %v2860 = vpop.f32.mrf.mxu0
      %v2861 = vadd.f32 %v2812, %v2860
      %v2862 = vpop.f32.mrf.mxu0
      %v2863 = vadd.f32 %v2814, %v2862
      %2864 = vmatmul.bf16.gmra.mxu0 %v925
      %v2865 = vpop.f32.mrf.mxu0
      %v2866 = vadd.f32 %v2817, %v2865
      %v2867 = vpop.f32.mrf.mxu0
      %v2868 = vadd.f32 %v2819, %v2867
      %2869 = vmatmul.bf16.gmra.mxu0 %v932
      %v2870 = vpop.f32.mrf.mxu0
      %v2871 = vadd.f32 %v2822, %v2870
      %v2872 = vpop.f32.mrf.mxu0
      %v2873 = vadd.f32 %v2824, %v2872
      %2874 = vmatmul.bf16.gmra.mxu0 %v939
      %v2875 = vpop.f32.mrf.mxu0
      %v2876 = vadd.f32 %v2827, %v2875
      %v2877 = vpop.f32.mrf.mxu0
      %v2878 = vadd.f32 %v2829, %v2877
      %2879 = vmatmul.bf16.gmra.mxu0 %v946
      %v2880 = vpop.f32.mrf.mxu0
      %v2881 = vadd.f32 %v2832, %v2880
      %v2882 = vpop.f32.mrf.mxu0
      %v2883 = vadd.f32 %v2834, %v2882
      %2884 = vdwg.mxu0
      %2885 = vmatpush.bf16.msra.mxu0 %v1744
      %2886 = vmatpush.bf16.msra.mxu0 %v1740
      %2887 = vmatpush.bf16.msra.mxu0 %v1736
      %2888 = vmatpush.bf16.msra.mxu0 %v1732
      %2889 = vmatpush.bf16.msra.mxu0 %v1728
      %2890 = vmatpush.bf16.msra.mxu0 %v1724
      %2891 = vmatpush.bf16.msra.mxu0 %v1720
      %2892 = vmatpush.bf16.msra.mxu0 %v1716
      %2893 = vmatmul.bf16.gmra.mxu0 %v898
      %v2894 = vpop.f32.mrf.mxu0
      %v2895 = vadd.f32 %v2846, %v2894
      %v2896 = vpop.f32.mrf.mxu0
      %v2897 = vadd.f32 %v2848, %v2896
      %2898 = vmatmul.bf16.gmra.mxu0 %v905
      %v2899 = vpop.f32.mrf.mxu0
      %v2900 = vadd.f32 %v2851, %v2899
      %v2901 = vpop.f32.mrf.mxu0
      %v2902 = vadd.f32 %v2853, %v2901
      %2903 = vmatmul.bf16.gmra.mxu0 %v912
      %v2904 = vpop.f32.mrf.mxu0
      %v2905 = vadd.f32 %v2856, %v2904
      %v2906 = vpop.f32.mrf.mxu0
      %v2907 = vadd.f32 %v2858, %v2906
      %2908 = vmatmul.bf16.gmra.mxu0 %v919
      %v2909 = vpop.f32.mrf.mxu0
      %v2910 = vadd.f32 %v2861, %v2909
      %v2911 = vpop.f32.mrf.mxu0
      %v2912 = vadd.f32 %v2863, %v2911
      %2913 = vmatmul.bf16.gmra.mxu0 %v926
      %v2914 = vpop.f32.mrf.mxu0
      %v2915 = vadd.f32 %v2866, %v2914
      %v2916 = vpop.f32.mrf.mxu0
      %v2917 = vadd.f32 %v2868, %v2916
      %2918 = vmatmul.bf16.gmra.mxu0 %v933
      %v2919 = vpop.f32.mrf.mxu0
      %v2920 = vadd.f32 %v2871, %v2919
      %v2921 = vpop.f32.mrf.mxu0
      %v2922 = vadd.f32 %v2873, %v2921
      %2923 = vmatmul.bf16.gmra.mxu0 %v940
      %v2924 = vpop.f32.mrf.mxu0
      %v2925 = vadd.f32 %v2876, %v2924
      %v2926 = vpop.f32.mrf.mxu0
      %v2927 = vadd.f32 %v2878, %v2926
      %2928 = vmatmul.bf16.gmra.mxu0 %v947
      %v2929 = vpop.f32.mrf.mxu0
      %v2930 = vadd.f32 %v2881, %v2929
      %v2931 = vpop.f32.mrf.mxu0
      %v2932 = vadd.f32 %v2883, %v2931
      %2933 = vdwg.mxu0
      %2934 = vmatpush.bf16.msra.mxu0 %v1776
      %2935 = vmatpush.bf16.msra.mxu0 %v1772
      %2936 = vmatpush.bf16.msra.mxu0 %v1768
      %2937 = vmatpush.bf16.msra.mxu0 %v1764
      %2938 = vmatpush.bf16.msra.mxu0 %v1760
      %2939 = vmatpush.bf16.msra.mxu0 %v1756
      %2940 = vmatpush.bf16.msra.mxu0 %v1752
      %2941 = vmatpush.bf16.msra.mxu0 %v1748
      %2942 = vmatmul.bf16.gmra.mxu0 %v899
      %v2943 = vpop.f32.mrf.mxu0
      %v2944 = vadd.f32 %v2895, %v2943
      %v2945 = vpop.f32.mrf.mxu0
      %v2946 = vadd.f32 %v2897, %v2945
      %2947 = vmatmul.bf16.gmra.mxu0 %v906
      %v2948 = vpop.f32.mrf.mxu0
      %v2949 = vadd.f32 %v2900, %v2948
      %v2950 = vpop.f32.mrf.mxu0
      %v2951 = vadd.f32 %v2902, %v2950
      %2952 = vmatmul.bf16.gmra.mxu0 %v913
      %v2953 = vpop.f32.mrf.mxu0
      %v2954 = vadd.f32 %v2905, %v2953
      %v2955 = vpop.f32.mrf.mxu0
      %v2956 = vadd.f32 %v2907, %v2955
      %2957 = vmatmul.bf16.gmra.mxu0 %v920
      %v2958 = vpop.f32.mrf.mxu0
      %v2959 = vadd.f32 %v2910, %v2958
      %v2960 = vpop.f32.mrf.mxu0
      %v2961 = vadd.f32 %v2912, %v2960
      %2962 = vmatmul.bf16.gmra.mxu0 %v927
      %v2963 = vpop.f32.mrf.mxu0
      %v2964 = vadd.f32 %v2915, %v2963
      %v2965 = vpop.f32.mrf.mxu0
      %v2966 = vadd.f32 %v2917, %v2965
      %2967 = vmatmul.bf16.gmra.mxu0 %v934
      %v2968 = vpop.f32.mrf.mxu0
      %v2969 = vadd.f32 %v2920, %v2968
      %v2970 = vpop.f32.mrf.mxu0
      %v2971 = vadd.f32 %v2922, %v2970
      %2972 = vmatmul.bf16.gmra.mxu0 %v941
      %v2973 = vpop.f32.mrf.mxu0
      %v2974 = vadd.f32 %v2925, %v2973
      %v2975 = vpop.f32.mrf.mxu0
      %v2976 = vadd.f32 %v2927, %v2975
      %2977 = vmatmul.bf16.gmra.mxu0 %v948
      %v2978 = vpop.f32.mrf.mxu0
      %v2979 = vadd.f32 %v2930, %v2978
      %v2980 = vpop.f32.mrf.mxu0
      %v2981 = vadd.f32 %v2932, %v2980
      %2982 = vdwg.mxu0
      %2983 = vmatpush.bf16.msra.mxu0 0
      %2984 = vmatpush.bf16.msra.mxu0 0
      %2985 = vmatpush.bf16.msra.mxu0 0
      %2986 = vmatpush.bf16.msra.mxu0 0
      %2987 = vmatpush.bf16.msra.mxu0 0
      %2988 = vmatpush.bf16.msra.mxu0 0
      %2989 = vmatpush.bf16.msra.mxu0 0
      %2990 = vmatpush.bf16.msra.mxu0 %v1780
      %2991 = vmatmul.bf16.gmra.mxu0 %v1980
      %v2992 = vpop.f32.mrf.mxu0
      %v2993 = vadd.f32 %v2944, %v2992
      %v2994 = vpop.f32.mrf.mxu0
      %v2995 = vadd.f32 %v2946, %v2994
      %2996 = vmatmul.bf16.gmra.mxu0 %v1983
      %v2997 = vpop.f32.mrf.mxu0
      %v2998 = vadd.f32 %v2949, %v2997
      %v2999 = vpop.f32.mrf.mxu0
      %v3000 = vadd.f32 %v2951, %v2999
      %3001 = vmatmul.bf16.gmra.mxu0 %v1986
      %v3002 = vpop.f32.mrf.mxu0
      %v3003 = vadd.f32 %v2954, %v3002
      %v3004 = vpop.f32.mrf.mxu0
      %v3005 = vadd.f32 %v2956, %v3004
      %3006 = vmatmul.bf16.gmra.mxu0 %v1989
      %v3007 = vpop.f32.mrf.mxu0
      %v3008 = vadd.f32 %v2959, %v3007
      %v3009 = vpop.f32.mrf.mxu0
      %v3010 = vadd.f32 %v2961, %v3009
      %3011 = vmatmul.bf16.gmra.mxu0 %v1992
      %v3012 = vpop.f32.mrf.mxu0
      %v3013 = vadd.f32 %v2964, %v3012
      %v3014 = vpop.f32.mrf.mxu0
      %v3015 = vadd.f32 %v2966, %v3014
      %3016 = vmatmul.bf16.gmra.mxu0 %v1995
      %v3017 = vpop.f32.mrf.mxu0
      %v3018 = vadd.f32 %v2969, %v3017
      %v3019 = vpop.f32.mrf.mxu0
      %v3020 = vadd.f32 %v2971, %v3019
      %3021 = vmatmul.bf16.gmra.mxu0 %v1998
      %v3022 = vpop.f32.mrf.mxu0
      %v3023 = vadd.f32 %v2974, %v3022
      %v3024 = vpop.f32.mrf.mxu0
      %v3025 = vadd.f32 %v2976, %v3024
      %3026 = vmatmul.bf16.gmra.mxu0 %v2001
      %v3027 = vpop.f32.mrf.mxu0
      %v3028 = vadd.f32 %v2979, %v3027
      %v3029 = vpop.f32.mrf.mxu0
      %v3030 = vadd.f32 %v2981, %v3029
      %3031 = vdwg.mxu0
      %3032 = vmatpush.bf16.msra.mxu0 %v1617
      %3033 = vmatpush.bf16.msra.mxu0 %v1613
      %3034 = vmatpush.bf16.msra.mxu0 %v1609
      %3035 = vmatpush.bf16.msra.mxu0 %v1605
      %3036 = vmatpush.bf16.msra.mxu0 %v1601
      %3037 = vmatpush.bf16.msra.mxu0 %v1597
      %3038 = vmatpush.bf16.msra.mxu0 %v1593
      %3039 = vmatpush.bf16.msra.mxu0 %v1589
      %3040 = vmatmul.bf16.gmra.mxu0 %v894
      %v3041 = vpop.f32.mrf.mxu0
      %v3042 = vadd.f32 %v713, %v3041
      %v3043 = vpop.f32.mrf.mxu0
      %v3044 = vadd.f32 %v713, %v3043
      %3045 = vmatmul.bf16.gmra.mxu0 %v901
      %v3046 = vpop.f32.mrf.mxu0
      %v3047 = vadd.f32 %v713, %v3046
      %v3048 = vpop.f32.mrf.mxu0
      %v3049 = vadd.f32 %v713, %v3048
      %3050 = vmatmul.bf16.gmra.mxu0 %v908
      %v3051 = vpop.f32.mrf.mxu0
      %v3052 = vadd.f32 %v713, %v3051
      %v3053 = vpop.f32.mrf.mxu0
      %v3054 = vadd.f32 %v713, %v3053
      %3055 = vmatmul.bf16.gmra.mxu0 %v915
      %v3056 = vpop.f32.mrf.mxu0
      %v3057 = vadd.f32 %v713, %v3056
      %v3058 = vpop.f32.mrf.mxu0
      %v3059 = vadd.f32 %v713, %v3058
      %3060 = vmatmul.bf16.gmra.mxu0 %v922
      %v3061 = vpop.f32.mrf.mxu0
      %v3062 = vadd.f32 %v713, %v3061
      %v3063 = vpop.f32.mrf.mxu0
      %v3064 = vadd.f32 %v713, %v3063
      %3065 = vmatmul.bf16.gmra.mxu0 %v929
      %v3066 = vpop.f32.mrf.mxu0
      %v3067 = vadd.f32 %v713, %v3066
      %v3068 = vpop.f32.mrf.mxu0
      %v3069 = vadd.f32 %v713, %v3068
      %3070 = vmatmul.bf16.gmra.mxu0 %v936
      %v3071 = vpop.f32.mrf.mxu0
      %v3072 = vadd.f32 %v713, %v3071
      %v3073 = vpop.f32.mrf.mxu0
      %v3074 = vadd.f32 %v713, %v3073
      %3075 = vmatmul.bf16.gmra.mxu0 %v943
      %v3076 = vpop.f32.mrf.mxu0
      %v3077 = vadd.f32 %v713, %v3076
      %v3078 = vpop.f32.mrf.mxu0
      %v3079 = vadd.f32 %v713, %v3078
      %3080 = vdwg.mxu0
      %3081 = vmatpush.bf16.msra.mxu0 %v1649
      %3082 = vmatpush.bf16.msra.mxu0 %v1645
      %3083 = vmatpush.bf16.msra.mxu0 %v1641
      %3084 = vmatpush.bf16.msra.mxu0 %v1637
      %3085 = vmatpush.bf16.msra.mxu0 %v1633
      %3086 = vmatpush.bf16.msra.mxu0 %v1629
      %3087 = vmatpush.bf16.msra.mxu0 %v1625
      %3088 = vmatpush.bf16.msra.mxu0 %v1621
      %3089 = vmatmul.bf16.gmra.mxu0 %v895
      %v3090 = vpop.f32.mrf.mxu0
      %v3091 = vadd.f32 %v3042, %v3090
      %v3092 = vpop.f32.mrf.mxu0
      %v3093 = vadd.f32 %v3044, %v3092
      %3094 = vmatmul.bf16.gmra.mxu0 %v902
      %v3095 = vpop.f32.mrf.mxu0
      %v3096 = vadd.f32 %v3047, %v3095
      %v3097 = vpop.f32.mrf.mxu0
      %v3098 = vadd.f32 %v3049, %v3097
      %3099 = vmatmul.bf16.gmra.mxu0 %v909
      %v3100 = vpop.f32.mrf.mxu0
      %v3101 = vadd.f32 %v3052, %v3100
      %v3102 = vpop.f32.mrf.mxu0
      %v3103 = vadd.f32 %v3054, %v3102
      %3104 = vmatmul.bf16.gmra.mxu0 %v916
      %v3105 = vpop.f32.mrf.mxu0
      %v3106 = vadd.f32 %v3057, %v3105
      %v3107 = vpop.f32.mrf.mxu0
      %v3108 = vadd.f32 %v3059, %v3107
      %3109 = vmatmul.bf16.gmra.mxu0 %v923
      %v3110 = vpop.f32.mrf.mxu0
      %v3111 = vadd.f32 %v3062, %v3110
      %v3112 = vpop.f32.mrf.mxu0
      %v3113 = vadd.f32 %v3064, %v3112
      %3114 = vmatmul.bf16.gmra.mxu0 %v930
      %v3115 = vpop.f32.mrf.mxu0
      %v3116 = vadd.f32 %v3067, %v3115
      %v3117 = vpop.f32.mrf.mxu0
      %v3118 = vadd.f32 %v3069, %v3117
      %3119 = vmatmul.bf16.gmra.mxu0 %v937
      %v3120 = vpop.f32.mrf.mxu0
      %v3121 = vadd.f32 %v3072, %v3120
      %v3122 = vpop.f32.mrf.mxu0
      %v3123 = vadd.f32 %v3074, %v3122
      %3124 = vmatmul.bf16.gmra.mxu0 %v944
      %v3125 = vpop.f32.mrf.mxu0
      %v3126 = vadd.f32 %v3077, %v3125
      %v3127 = vpop.f32.mrf.mxu0
      %v3128 = vadd.f32 %v3079, %v3127
      %3129 = vdwg.mxu0
      %3130 = vmatpush.bf16.msra.mxu0 %v1681
      %3131 = vmatpush.bf16.msra.mxu0 %v1677
      %3132 = vmatpush.bf16.msra.mxu0 %v1673
      %3133 = vmatpush.bf16.msra.mxu0 %v1669
      %3134 = vmatpush.bf16.msra.mxu0 %v1665
      %3135 = vmatpush.bf16.msra.mxu0 %v1661
      %3136 = vmatpush.bf16.msra.mxu0 %v1657
      %3137 = vmatpush.bf16.msra.mxu0 %v1653
      %3138 = vmatmul.bf16.gmra.mxu0 %v896
      %v3139 = vpop.f32.mrf.mxu0
      %v3140 = vadd.f32 %v3091, %v3139
      %v3141 = vpop.f32.mrf.mxu0
      %v3142 = vadd.f32 %v3093, %v3141
      %3143 = vmatmul.bf16.gmra.mxu0 %v903
      %v3144 = vpop.f32.mrf.mxu0
      %v3145 = vadd.f32 %v3096, %v3144
      %v3146 = vpop.f32.mrf.mxu0
      %v3147 = vadd.f32 %v3098, %v3146
      %3148 = vmatmul.bf16.gmra.mxu0 %v910
      %v3149 = vpop.f32.mrf.mxu0
      %v3150 = vadd.f32 %v3101, %v3149
      %v3151 = vpop.f32.mrf.mxu0
      %v3152 = vadd.f32 %v3103, %v3151
      %3153 = vmatmul.bf16.gmra.mxu0 %v917
      %v3154 = vpop.f32.mrf.mxu0
      %v3155 = vadd.f32 %v3106, %v3154
      %v3156 = vpop.f32.mrf.mxu0
      %v3157 = vadd.f32 %v3108, %v3156
      %3158 = vmatmul.bf16.gmra.mxu0 %v924
      %v3159 = vpop.f32.mrf.mxu0
      %v3160 = vadd.f32 %v3111, %v3159
      %v3161 = vpop.f32.mrf.mxu0
      %v3162 = vadd.f32 %v3113, %v3161
      %3163 = vmatmul.bf16.gmra.mxu0 %v931
      %v3164 = vpop.f32.mrf.mxu0
      %v3165 = vadd.f32 %v3116, %v3164
      %v3166 = vpop.f32.mrf.mxu0
      %v3167 = vadd.f32 %v3118, %v3166
      %3168 = vmatmul.bf16.gmra.mxu0 %v938
      %v3169 = vpop.f32.mrf.mxu0
      %v3170 = vadd.f32 %v3121, %v3169
      %v3171 = vpop.f32.mrf.mxu0
      %v3172 = vadd.f32 %v3123, %v3171
      %3173 = vmatmul.bf16.gmra.mxu0 %v945
      %v3174 = vpop.f32.mrf.mxu0
      %v3175 = vadd.f32 %v3126, %v3174
      %v3176 = vpop.f32.mrf.mxu0
      %v3177 = vadd.f32 %v3128, %v3176
      %3178 = vdwg.mxu0
      %3179 = vmatpush.bf16.msra.mxu0 %v1713
      %3180 = vmatpush.bf16.msra.mxu0 %v1709
      %3181 = vmatpush.bf16.msra.mxu0 %v1705
      %3182 = vmatpush.bf16.msra.mxu0 %v1701
      %3183 = vmatpush.bf16.msra.mxu0 %v1697
      %3184 = vmatpush.bf16.msra.mxu0 %v1693
      %3185 = vmatpush.bf16.msra.mxu0 %v1689
      %3186 = vmatpush.bf16.msra.mxu0 %v1685
      %3187 = vmatmul.bf16.gmra.mxu0 %v897
      %v3188 = vpop.f32.mrf.mxu0
      %v3189 = vadd.f32 %v3140, %v3188
      %v3190 = vpop.f32.mrf.mxu0
      %v3191 = vadd.f32 %v3142, %v3190
      %3192 = vmatmul.bf16.gmra.mxu0 %v904
      %v3193 = vpop.f32.mrf.mxu0
      %v3194 = vadd.f32 %v3145, %v3193
      %v3195 = vpop.f32.mrf.mxu0
      %v3196 = vadd.f32 %v3147, %v3195
      %3197 = vmatmul.bf16.gmra.mxu0 %v911
      %v3198 = vpop.f32.mrf.mxu0
      %v3199 = vadd.f32 %v3150, %v3198
      %v3200 = vpop.f32.mrf.mxu0
      %v3201 = vadd.f32 %v3152, %v3200
      %3202 = vmatmul.bf16.gmra.mxu0 %v918
      %v3203 = vpop.f32.mrf.mxu0
      %v3204 = vadd.f32 %v3155, %v3203
      %v3205 = vpop.f32.mrf.mxu0
      %v3206 = vadd.f32 %v3157, %v3205
      %3207 = vmatmul.bf16.gmra.mxu0 %v925
      %v3208 = vpop.f32.mrf.mxu0
      %v3209 = vadd.f32 %v3160, %v3208
      %v3210 = vpop.f32.mrf.mxu0
      %v3211 = vadd.f32 %v3162, %v3210
      %3212 = vmatmul.bf16.gmra.mxu0 %v932
      %v3213 = vpop.f32.mrf.mxu0
      %v3214 = vadd.f32 %v3165, %v3213
      %v3215 = vpop.f32.mrf.mxu0
      %v3216 = vadd.f32 %v3167, %v3215
      %3217 = vmatmul.bf16.gmra.mxu0 %v939
      %v3218 = vpop.f32.mrf.mxu0
      %v3219 = vadd.f32 %v3170, %v3218
      %v3220 = vpop.f32.mrf.mxu0
      %v3221 = vadd.f32 %v3172, %v3220
      %3222 = vmatmul.bf16.gmra.mxu0 %v946
      %v3223 = vpop.f32.mrf.mxu0
      %v3224 = vadd.f32 %v3175, %v3223
      %v3225 = vpop.f32.mrf.mxu0
      %v3226 = vadd.f32 %v3177, %v3225
      %3227 = vdwg.mxu0
      %3228 = vmatpush.bf16.msra.mxu0 %v1745
      %3229 = vmatpush.bf16.msra.mxu0 %v1741
      %3230 = vmatpush.bf16.msra.mxu0 %v1737
      %3231 = vmatpush.bf16.msra.mxu0 %v1733
      %3232 = vmatpush.bf16.msra.mxu0 %v1729
      %3233 = vmatpush.bf16.msra.mxu0 %v1725
      %3234 = vmatpush.bf16.msra.mxu0 %v1721
      %3235 = vmatpush.bf16.msra.mxu0 %v1717
      %3236 = vmatmul.bf16.gmra.mxu0 %v898
      %v3237 = vpop.f32.mrf.mxu0
      %v3238 = vadd.f32 %v3189, %v3237
      %v3239 = vpop.f32.mrf.mxu0
      %v3240 = vadd.f32 %v3191, %v3239
      %3241 = vmatmul.bf16.gmra.mxu0 %v905
      %v3242 = vpop.f32.mrf.mxu0
      %v3243 = vadd.f32 %v3194, %v3242
      %v3244 = vpop.f32.mrf.mxu0
      %v3245 = vadd.f32 %v3196, %v3244
      %3246 = vmatmul.bf16.gmra.mxu0 %v912
      %v3247 = vpop.f32.mrf.mxu0
      %v3248 = vadd.f32 %v3199, %v3247
      %v3249 = vpop.f32.mrf.mxu0
      %v3250 = vadd.f32 %v3201, %v3249
      %3251 = vmatmul.bf16.gmra.mxu0 %v919
      %v3252 = vpop.f32.mrf.mxu0
      %v3253 = vadd.f32 %v3204, %v3252
      %v3254 = vpop.f32.mrf.mxu0
      %v3255 = vadd.f32 %v3206, %v3254
      %3256 = vmatmul.bf16.gmra.mxu0 %v926
      %v3257 = vpop.f32.mrf.mxu0
      %v3258 = vadd.f32 %v3209, %v3257
      %v3259 = vpop.f32.mrf.mxu0
      %v3260 = vadd.f32 %v3211, %v3259
      %3261 = vmatmul.bf16.gmra.mxu0 %v933
      %v3262 = vpop.f32.mrf.mxu0
      %v3263 = vadd.f32 %v3214, %v3262
      %v3264 = vpop.f32.mrf.mxu0
      %v3265 = vadd.f32 %v3216, %v3264
      %3266 = vmatmul.bf16.gmra.mxu0 %v940
      %v3267 = vpop.f32.mrf.mxu0
      %v3268 = vadd.f32 %v3219, %v3267
      %v3269 = vpop.f32.mrf.mxu0
      %v3270 = vadd.f32 %v3221, %v3269
      %3271 = vmatmul.bf16.gmra.mxu0 %v947
      %v3272 = vpop.f32.mrf.mxu0
      %v3273 = vadd.f32 %v3224, %v3272
      %v3274 = vpop.f32.mrf.mxu0
      %v3275 = vadd.f32 %v3226, %v3274
      %3276 = vdwg.mxu0
      %3277 = vmatpush.bf16.msra.mxu0 %v1777
      %3278 = vmatpush.bf16.msra.mxu0 %v1773
      %3279 = vmatpush.bf16.msra.mxu0 %v1769
      %3280 = vmatpush.bf16.msra.mxu0 %v1765
      %3281 = vmatpush.bf16.msra.mxu0 %v1761
      %3282 = vmatpush.bf16.msra.mxu0 %v1757
      %3283 = vmatpush.bf16.msra.mxu0 %v1753
      %3284 = vmatpush.bf16.msra.mxu0 %v1749
      %3285 = vmatmul.bf16.gmra.mxu0 %v899
      %v3286 = vpop.f32.mrf.mxu0
      %v3287 = vadd.f32 %v3238, %v3286
      %v3288 = vpop.f32.mrf.mxu0
      %v3289 = vadd.f32 %v3240, %v3288
      %3290 = vmatmul.bf16.gmra.mxu0 %v906
      %v3291 = vpop.f32.mrf.mxu0
      %v3292 = vadd.f32 %v3243, %v3291
      %v3293 = vpop.f32.mrf.mxu0
      %v3294 = vadd.f32 %v3245, %v3293
      %3295 = vmatmul.bf16.gmra.mxu0 %v913
      %v3296 = vpop.f32.mrf.mxu0
      %v3297 = vadd.f32 %v3248, %v3296
      %v3298 = vpop.f32.mrf.mxu0
      %v3299 = vadd.f32 %v3250, %v3298
      %3300 = vmatmul.bf16.gmra.mxu0 %v920
      %v3301 = vpop.f32.mrf.mxu0
      %v3302 = vadd.f32 %v3253, %v3301
      %v3303 = vpop.f32.mrf.mxu0
      %v3304 = vadd.f32 %v3255, %v3303
      %3305 = vmatmul.bf16.gmra.mxu0 %v927
      %v3306 = vpop.f32.mrf.mxu0
      %v3307 = vadd.f32 %v3258, %v3306
      %v3308 = vpop.f32.mrf.mxu0
      %v3309 = vadd.f32 %v3260, %v3308
      %3310 = vmatmul.bf16.gmra.mxu0 %v934
      %v3311 = vpop.f32.mrf.mxu0
      %v3312 = vadd.f32 %v3263, %v3311
      %v3313 = vpop.f32.mrf.mxu0
      %v3314 = vadd.f32 %v3265, %v3313
      %3315 = vmatmul.bf16.gmra.mxu0 %v941
      %v3316 = vpop.f32.mrf.mxu0
      %v3317 = vadd.f32 %v3268, %v3316
      %v3318 = vpop.f32.mrf.mxu0
      %v3319 = vadd.f32 %v3270, %v3318
      %3320 = vmatmul.bf16.gmra.mxu0 %v948
      %v3321 = vpop.f32.mrf.mxu0
      %v3322 = vadd.f32 %v3273, %v3321
      %v3323 = vpop.f32.mrf.mxu0
      %v3324 = vadd.f32 %v3275, %v3323
      %3325 = vdwg.mxu0
      %3326 = vmatpush.bf16.msra.mxu0 0
      %3327 = vmatpush.bf16.msra.mxu0 0
      %3328 = vmatpush.bf16.msra.mxu0 0
      %3329 = vmatpush.bf16.msra.mxu0 0
      %3330 = vmatpush.bf16.msra.mxu0 0
      %3331 = vmatpush.bf16.msra.mxu0 0
      %3332 = vmatpush.bf16.msra.mxu0 0
      %3333 = vmatpush.bf16.msra.mxu0 %v1781
      %3334 = vmatmul.bf16.gmra.mxu0 %v1980
      %v3335 = vpop.f32.mrf.mxu0
      %v3336 = vadd.f32 %v3287, %v3335
      %v3337 = vpop.f32.mrf.mxu0
      %v3338 = vadd.f32 %v3289, %v3337
      %3339 = vmatmul.bf16.gmra.mxu0 %v1983
      %v3340 = vpop.f32.mrf.mxu0
      %v3341 = vadd.f32 %v3292, %v3340
      %v3342 = vpop.f32.mrf.mxu0
      %v3343 = vadd.f32 %v3294, %v3342
      %3344 = vmatmul.bf16.gmra.mxu0 %v1986
      %v3345 = vpop.f32.mrf.mxu0
      %v3346 = vadd.f32 %v3297, %v3345
      %v3347 = vpop.f32.mrf.mxu0
      %v3348 = vadd.f32 %v3299, %v3347
      %3349 = vmatmul.bf16.gmra.mxu0 %v1989
      %v3350 = vpop.f32.mrf.mxu0
      %v3351 = vadd.f32 %v3302, %v3350
      %v3352 = vpop.f32.mrf.mxu0
      %v3353 = vadd.f32 %v3304, %v3352
      %3354 = vmatmul.bf16.gmra.mxu0 %v1992
      %v3355 = vpop.f32.mrf.mxu0
      %v3356 = vadd.f32 %v3307, %v3355
      %v3357 = vpop.f32.mrf.mxu0
      %v3358 = vadd.f32 %v3309, %v3357
      %3359 = vmatmul.bf16.gmra.mxu0 %v1995
      %v3360 = vpop.f32.mrf.mxu0
      %v3361 = vadd.f32 %v3312, %v3360
      %v3362 = vpop.f32.mrf.mxu0
      %v3363 = vadd.f32 %v3314, %v3362
      %3364 = vmatmul.bf16.gmra.mxu0 %v1998
      %v3365 = vpop.f32.mrf.mxu0
      %v3366 = vadd.f32 %v3317, %v3365
      %v3367 = vpop.f32.mrf.mxu0
      %v3368 = vadd.f32 %v3319, %v3367
      %3369 = vmatmul.bf16.gmra.mxu0 %v2001
      %v3370 = vpop.f32.mrf.mxu0
      %v3371 = vadd.f32 %v3322, %v3370
      %v3372 = vpop.f32.mrf.mxu0
      %v3373 = vadd.f32 %v3324, %v3372
      %3374 = vdwg.mxu0
      %v3375 = vmax.f32 %v2307, 0.0
      %v3376 = vmax.f32 %v2650, 0.0
      %v3377 = vmax.f32 %v2993, 0.0
      %v3378 = vmax.f32 %v3336, 0.0
      %v3379 = vmax.f32 %v2309, 0.0
      %v3380 = vmax.f32 %v2652, 0.0
      %v3381 = vmax.f32 %v2995, 0.0
      %v3382 = vmax.f32 %v3338, 0.0
      %v3383 = vmax.f32 %v2312, 0.0
      %v3384 = vmax.f32 %v2655, 0.0
      %v3385 = vmax.f32 %v2998, 0.0
      %v3386 = vmax.f32 %v3341, 0.0
      %v3387 = vmax.f32 %v2314, 0.0
      %v3388 = vmax.f32 %v2657, 0.0
      %v3389 = vmax.f32 %v3000, 0.0
      %v3390 = vmax.f32 %v3343, 0.0
      %v3391 = vmax.f32 %v2317, 0.0
      %v3392 = vmax.f32 %v2660, 0.0
      %v3393 = vmax.f32 %v3003, 0.0
      %v3394 = vmax.f32 %v3346, 0.0
      %v3395 = vmax.f32 %v2319, 0.0
      %v3396 = vmax.f32 %v2662, 0.0
      %v3397 = vmax.f32 %v3005, 0.0
      %v3398 = vmax.f32 %v3348, 0.0
      %v3399 = vmax.f32 %v2322, 0.0
      %v3400 = vmax.f32 %v2665, 0.0
      %v3401 = vmax.f32 %v3008, 0.0
      %v3402 = vmax.f32 %v3351, 0.0
      %v3403 = vmax.f32 %v2324, 0.0
      %v3404 = vmax.f32 %v2667, 0.0
      %v3405 = vmax.f32 %v3010, 0.0
      %v3406 = vmax.f32 %v3353, 0.0
      %v3407 = vmax.f32 %v2327, 0.0
      %v3408 = vmax.f32 %v2670, 0.0
      %v3409 = vmax.f32 %v3013, 0.0
      %v3410 = vmax.f32 %v3356, 0.0
      %v3411 = vmax.f32 %v2329, 0.0
      %v3412 = vmax.f32 %v2672, 0.0
      %v3413 = vmax.f32 %v3015, 0.0
      %v3414 = vmax.f32 %v3358, 0.0
      %v3415 = vmax.f32 %v2332, 0.0
      %v3416 = vmax.f32 %v2675, 0.0
      %v3417 = vmax.f32 %v3018, 0.0
      %v3418 = vmax.f32 %v3361, 0.0
      %v3419 = vmax.f32 %v2334, 0.0
      %v3420 = vmax.f32 %v2677, 0.0
      %v3421 = vmax.f32 %v3020, 0.0
      %v3422 = vmax.f32 %v3363, 0.0
      %v3423 = vmax.f32 %v2337, 0.0
      %v3424 = vmax.f32 %v2680, 0.0
      %v3425 = vmax.f32 %v3023, 0.0
      %v3426 = vmax.f32 %v3366, 0.0
      %v3427 = vmax.f32 %v2339, 0.0
      %v3428 = vmax.f32 %v2682, 0.0
      %v3429 = vmax.f32 %v3025, 0.0
      %v3430 = vmax.f32 %v3368, 0.0
      %v3431 = vmax.f32 %v2342, 0.0
      %v3432 = vmax.f32 %v2685, 0.0
      %v3433 = vmax.f32 %v3028, 0.0
      %v3434 = vmax.f32 %v3371, 0.0
      %v3435 = vmax.f32 %v2344, 0.0
      %v3436 = vmax.f32 %v2687, 0.0
      %v3437 = vmax.f32 %v3030, 0.0
      %v3438 = vmax.f32 %v3373, 0.0
      %v3439 = vpack.c.bf16 %v3379, %v3375
      %v3440 = vpack.c.bf16 %v3380, %v3376
      %v3441 = vpack.c.bf16 %v3381, %v3377
      %v3442 = vpack.c.bf16 %v3382, %v3378
      %v3443 = vpack.c.bf16 %v3387, %v3383
      %v3444 = vpack.c.bf16 %v3388, %v3384
      %v3445 = vpack.c.bf16 %v3389, %v3385
      %v3446 = vpack.c.bf16 %v3390, %v3386
      %v3447 = vpack.c.bf16 %v3395, %v3391
      %v3448 = vpack.c.bf16 %v3396, %v3392
      %v3449 = vpack.c.bf16 %v3397, %v3393
      %v3450 = vpack.c.bf16 %v3398, %v3394
      %v3451 = vpack.c.bf16 %v3403, %v3399
      %v3452 = vpack.c.bf16 %v3404, %v3400
      %v3453 = vpack.c.bf16 %v3405, %v3401
      %v3454 = vpack.c.bf16 %v3406, %v3402
      %v3455 = vpack.c.bf16 %v3411, %v3407
      %v3456 = vpack.c.bf16 %v3412, %v3408
      %v3457 = vpack.c.bf16 %v3413, %v3409
      %v3458 = vpack.c.bf16 %v3414, %v3410
      %v3459 = vpack.c.bf16 %v3419, %v3415
      %v3460 = vpack.c.bf16 %v3420, %v3416
      %v3461 = vpack.c.bf16 %v3421, %v3417
      %v3462 = vpack.c.bf16 %v3422, %v3418
      %v3463 = vpack.c.bf16 %v3427, %v3423
      %v3464 = vpack.c.bf16 %v3428, %v3424
      %v3465 = vpack.c.bf16 %v3429, %v3425
      %v3466 = vpack.c.bf16 %v3430, %v3426
      %v3467 = vpack.c.bf16 %v3435, %v3431
      %v3468 = vpack.c.bf16 %v3436, %v3432
      %v3469 = vpack.c.bf16 %v3437, %v3433
      %v3470 = vpack.c.bf16 %v3438, %v3434
      %v3471 = vld [vmem:[%s2] sm:$0xff]
      %v3472 = vld [vmem:[%s2 + $0x8] sm:$0xff]
      %v3473 = vld [vmem:[%s2 + $0x10] sm:$0xff]
      %v3474 = vld [vmem:[%s2 + $0x18] sm:$0xff]
      %v3475 = vld [vmem:[%s2 + $0x20] sm:$0xff]
      %v3476 = vld [vmem:[%s2 + $0x28] sm:$0xff]
      %v3477 = vld [vmem:[%s2 + $0x30] sm:$0xff]
      %v3478 = vld [vmem:[%s2 + $0x38] sm:$0xff]
      %v3479 = vld [vmem:[%s2 + $0x40] sm:$0xff]
      %v3480 = vld [vmem:[%s2 + $0x48] sm:$0xff]
      %v3481 = vld [vmem:[%s2 + $0x50] sm:$0xff]
      %v3482 = vld [vmem:[%s2 + $0x58] sm:$0xff]
      %v3483 = vld [vmem:[%s2 + $0x60] sm:$0xff]
      %v3484 = vld [vmem:[%s2 + $0x68] sm:$0xff]
      %v3485 = vld [vmem:[%s2 + $0x70] sm:$0xff]
      %v3486 = vld [vmem:[%s2 + $0x78] sm:$0xff]
      %v3487 = vld [vmem:[%s2 + $0x80] sm:$0xff]
      %v3488 = vld [vmem:[%s2 + $0x88] sm:$0xff]
      %v3489 = vld [vmem:[%s2 + $0x90] sm:$0xff]
      %v3490 = vld [vmem:[%s2 + $0x98] sm:$0xff]
      %v3491 = vld [vmem:[%s2 + $0xa0] sm:$0xff]
      %v3492 = vld [vmem:[%s2 + $0xa8] sm:$0xff]
      %v3493 = vld [vmem:[%s2 + $0xb0] sm:$0xff]
      %v3494 = vld [vmem:[%s2 + $0xb8] sm:$0xff]
      %v3495 = vld [vmem:[%s2 + $0xc0] sm:$0xff]
      %v3496 = vld [vmem:[%s2 + $0xc8] sm:$0xff]
      %v3497 = vld [vmem:[%s2 + $0xd0] sm:$0xff]
      %v3498 = vld [vmem:[%s2 + $0xd8] sm:$0xff]
      %v3499 = vld [vmem:[%s2 + $0xe0] sm:$0xff]
      %v3500 = vld [vmem:[%s2 + $0xe8] sm:$0xff]
      %v3501 = vld [vmem:[%s2 + $0xf0] sm:$0xff]
      %v3502 = vld [vmem:[%s2 + $0xf8] sm:$0xff]
      %v3503 = vld [vmem:[%s2 + $0x100] sm:$0xff]
      %v3504 = vld [vmem:[%s2 + $0x108] sm:$0xff]
      %v3505 = vld [vmem:[%s2 + $0x110] sm:$0xff]
      %v3506 = vld [vmem:[%s2 + $0x118] sm:$0xff]
      %v3507 = vld [vmem:[%s2 + $0x120] sm:$0xff]
      %v3508 = vld [vmem:[%s2 + $0x128] sm:$0xff]
      %v3509 = vld [vmem:[%s2 + $0x130] sm:$0xff]
      %v3510 = vld [vmem:[%s2 + $0x138] sm:$0xff]
      %v3511 = vld [vmem:[%s2 + $0x140] sm:$0xff]
      %v3512 = vld [vmem:[%s2 + $0x148] sm:$0xff]
      %v3513 = vld [vmem:[%s2 + $0x150] sm:$0xff]
      %v3514 = vld [vmem:[%s2 + $0x158] sm:$0xff]
      %v3515 = vld [vmem:[%s2 + $0x160] sm:$0xff]
      %v3516 = vld [vmem:[%s2 + $0x168] sm:$0xff]
      %v3517 = vld [vmem:[%s2 + $0x170] sm:$0xff]
      %v3518 = vld [vmem:[%s2 + $0x178] sm:$0xff]
      %v3519 = vld [vmem:[%s2 + $0x180] sm:$0xff]
      %v3520 = vld [vmem:[%s2 + $0x188] sm:$0xff]
      %v3521 = vld [vmem:[%s2 + $0x190] sm:$0xff]
      %v3522 = vld [vmem:[%s2 + $0x198] sm:$0xff]
      %v3523 = vld [vmem:[%s2 + $0x1a0] sm:$0xff]
      %v3524 = vld [vmem:[%s2 + $0x1a8] sm:$0xff]
      %v3525 = vld [vmem:[%s2 + $0x1b0] sm:$0xff]
      %v3526 = vld [vmem:[%s2 + $0x1b8] sm:$0xff]
      %v3527 = vld [vmem:[%s2 + $0x1c0] sm:$0xff]
      %v3528 = vld [vmem:[%s2 + $0x1c8] sm:$0xff]
      %v3529 = vld [vmem:[%s2 + $0x1d0] sm:$0xff]
      %v3530 = vld [vmem:[%s2 + $0x1d8] sm:$0xff]
      %v3531 = vld [vmem:[%s2 + $0x1e0] sm:$0xff]
      %v3532 = vld [vmem:[%s2 + $0x1e8] sm:$0xff]
      %v3533 = vld [vmem:[%s2 + $0x1f0] sm:$0xff]
      %v3534 = vld [vmem:[%s2 + $0x1f8] sm:$0xff]
      %v3535 = vld [vmem:[%s8] sm:$0x3]
      %v3537 = vperm.slane %v3535, 0
      %v3538 = vperm.slane %v3535, 1
      %v3605 = vunpack.c.l.b16 %v3471
      %v3606 = vunpack.c.h.b16 %v3471
      %v3607 = vunpack.c.l.b16 %v3472
      %v3608 = vunpack.c.h.b16 %v3472
      %v3609 = vunpack.c.l.b16 %v3473
      %v3610 = vunpack.c.h.b16 %v3473
      %v3611 = vunpack.c.l.b16 %v3474
      %v3612 = vunpack.c.h.b16 %v3474
      %v3613 = vunpack.c.l.b16 %v3475
      %v3614 = vunpack.c.h.b16 %v3475
      %v3615 = vunpack.c.l.b16 %v3476
      %v3616 = vunpack.c.h.b16 %v3476
      %v3617 = vunpack.c.l.b16 %v3477
      %v3618 = vunpack.c.h.b16 %v3477
      %v3619 = vunpack.c.l.b16 %v3478
      %v3620 = vunpack.c.h.b16 %v3478
      %v3621 = vunpack.c.l.b16 %v3479
      %v3622 = vunpack.c.h.b16 %v3479
      %v3623 = vunpack.c.l.b16 %v3480
      %v3624 = vunpack.c.h.b16 %v3480
      %v3625 = vunpack.c.l.b16 %v3481
      %v3626 = vunpack.c.h.b16 %v3481
      %v3627 = vunpack.c.l.b16 %v3482
      %v3628 = vunpack.c.h.b16 %v3482
      %v3629 = vunpack.c.l.b16 %v3483
      %v3630 = vunpack.c.h.b16 %v3483
      %v3631 = vunpack.c.l.b16 %v3484
      %v3632 = vunpack.c.h.b16 %v3484
      %v3633 = vunpack.c.l.b16 %v3485
      %v3634 = vunpack.c.h.b16 %v3485
      %v3635 = vunpack.c.l.b16 %v3486
      %v3636 = vunpack.c.h.b16 %v3486
      %v3637 = vunpack.c.l.b16 %v3487
      %v3638 = vunpack.c.h.b16 %v3487
      %v3639 = vunpack.c.l.b16 %v3488
      %v3640 = vunpack.c.h.b16 %v3488
      %v3641 = vunpack.c.l.b16 %v3489
      %v3642 = vunpack.c.h.b16 %v3489
      %v3643 = vunpack.c.l.b16 %v3490
      %v3644 = vunpack.c.h.b16 %v3490
      %v3645 = vunpack.c.l.b16 %v3491
      %v3646 = vunpack.c.h.b16 %v3491
      %v3647 = vunpack.c.l.b16 %v3492
      %v3648 = vunpack.c.h.b16 %v3492
      %v3649 = vunpack.c.l.b16 %v3493
      %v3650 = vunpack.c.h.b16 %v3493
      %v3651 = vunpack.c.l.b16 %v3494
      %v3652 = vunpack.c.h.b16 %v3494
      %v3653 = vunpack.c.l.b16 %v3495
      %v3654 = vunpack.c.h.b16 %v3495
      %v3655 = vunpack.c.l.b16 %v3496
      %v3656 = vunpack.c.h.b16 %v3496
      %v3657 = vunpack.c.l.b16 %v3497
      %v3658 = vunpack.c.h.b16 %v3497
      %v3659 = vunpack.c.l.b16 %v3498
      %v3660 = vunpack.c.h.b16 %v3498
      %v3661 = vunpack.c.l.b16 %v3499
      %v3662 = vunpack.c.h.b16 %v3499
      %v3663 = vunpack.c.l.b16 %v3500
      %v3664 = vunpack.c.h.b16 %v3500
      %v3665 = vunpack.c.l.b16 %v3501
      %v3666 = vunpack.c.h.b16 %v3501
      %v3667 = vunpack.c.l.b16 %v3502
      %v3668 = vunpack.c.h.b16 %v3502
      %v3669 = vunpack.c.l.b16 %v3503
      %v3670 = vunpack.c.h.b16 %v3503
      %v3671 = vunpack.c.l.b16 %v3504
      %v3672 = vunpack.c.h.b16 %v3504
      %v3673 = vunpack.c.l.b16 %v3505
      %v3674 = vunpack.c.h.b16 %v3505
      %v3675 = vunpack.c.l.b16 %v3506
      %v3676 = vunpack.c.h.b16 %v3506
      %v3677 = vunpack.c.l.b16 %v3507
      %v3678 = vunpack.c.h.b16 %v3507
      %v3679 = vunpack.c.l.b16 %v3508
      %v3680 = vunpack.c.h.b16 %v3508
      %v3681 = vunpack.c.l.b16 %v3509
      %v3682 = vunpack.c.h.b16 %v3509
      %v3683 = vunpack.c.l.b16 %v3510
      %v3684 = vunpack.c.h.b16 %v3510
      %v3685 = vunpack.c.l.b16 %v3511
      %v3686 = vunpack.c.h.b16 %v3511
      %v3687 = vunpack.c.l.b16 %v3512
      %v3688 = vunpack.c.h.b16 %v3512
      %v3689 = vunpack.c.l.b16 %v3513
      %v3690 = vunpack.c.h.b16 %v3513
      %v3691 = vunpack.c.l.b16 %v3514
      %v3692 = vunpack.c.h.b16 %v3514
      %v3693 = vunpack.c.l.b16 %v3515
      %v3694 = vunpack.c.h.b16 %v3515
      %v3695 = vunpack.c.l.b16 %v3516
      %v3696 = vunpack.c.h.b16 %v3516
      %v3697 = vunpack.c.l.b16 %v3517
      %v3698 = vunpack.c.h.b16 %v3517
      %v3699 = vunpack.c.l.b16 %v3518
      %v3700 = vunpack.c.h.b16 %v3518
      %v3701 = vunpack.c.l.b16 %v3519
      %v3702 = vunpack.c.h.b16 %v3519
      %v3703 = vunpack.c.l.b16 %v3520
      %v3704 = vunpack.c.h.b16 %v3520
      %v3705 = vunpack.c.l.b16 %v3521
      %v3706 = vunpack.c.h.b16 %v3521
      %v3707 = vunpack.c.l.b16 %v3522
      %v3708 = vunpack.c.h.b16 %v3522
      %v3709 = vunpack.c.l.b16 %v3523
      %v3710 = vunpack.c.h.b16 %v3523
      %v3711 = vunpack.c.l.b16 %v3524
      %v3712 = vunpack.c.h.b16 %v3524
      %v3713 = vunpack.c.l.b16 %v3525
      %v3714 = vunpack.c.h.b16 %v3525
      %v3715 = vunpack.c.l.b16 %v3526
      %v3716 = vunpack.c.h.b16 %v3526
      %v3717 = vunpack.c.l.b16 %v3527
      %v3718 = vunpack.c.h.b16 %v3527
      %v3719 = vunpack.c.l.b16 %v3528
      %v3720 = vunpack.c.h.b16 %v3528
      %v3721 = vunpack.c.l.b16 %v3529
      %v3722 = vunpack.c.h.b16 %v3529
      %v3723 = vunpack.c.l.b16 %v3530
      %v3724 = vunpack.c.h.b16 %v3530
      %v3725 = vunpack.c.l.b16 %v3531
      %v3726 = vunpack.c.h.b16 %v3531
      %v3727 = vunpack.c.l.b16 %v3532
      %v3728 = vunpack.c.h.b16 %v3532
      %v3729 = vunpack.c.l.b16 %v3533
      %v3730 = vunpack.c.h.b16 %v3533
      %v3731 = vunpack.c.l.b16 %v3534
      %v3732 = vunpack.c.h.b16 %v3534
      %v3733 = vpack.c.b16 %v3607, %v3605
      %v3734 = vpack.c.b16 %v3608, %v3606
      %v3735 = vpack.c.b16 %v3611, %v3609
      %v3736 = vpack.c.b16 %v3612, %v3610
      %v3737 = vpack.c.b16 %v3615, %v3613
      %v3738 = vpack.c.b16 %v3616, %v3614
      %v3739 = vpack.c.b16 %v3619, %v3617
      %v3740 = vpack.c.b16 %v3620, %v3618
      %v3741 = vpack.c.b16 %v3623, %v3621
      %v3742 = vpack.c.b16 %v3624, %v3622
      %v3743 = vpack.c.b16 %v3627, %v3625
      %v3744 = vpack.c.b16 %v3628, %v3626
      %v3745 = vpack.c.b16 %v3631, %v3629
      %v3746 = vpack.c.b16 %v3632, %v3630
      %v3747 = vpack.c.b16 %v3635, %v3633
      %v3748 = vpack.c.b16 %v3636, %v3634
      %v3749 = vpack.c.b16 %v3639, %v3637
      %v3750 = vpack.c.b16 %v3640, %v3638
      %v3751 = vpack.c.b16 %v3643, %v3641
      %v3752 = vpack.c.b16 %v3644, %v3642
      %v3753 = vpack.c.b16 %v3647, %v3645
      %v3754 = vpack.c.b16 %v3648, %v3646
      %v3755 = vpack.c.b16 %v3651, %v3649
      %v3756 = vpack.c.b16 %v3652, %v3650
      %v3757 = vpack.c.b16 %v3655, %v3653
      %v3758 = vpack.c.b16 %v3656, %v3654
      %v3759 = vpack.c.b16 %v3659, %v3657
      %v3760 = vpack.c.b16 %v3660, %v3658
      %v3761 = vpack.c.b16 %v3663, %v3661
      %v3762 = vpack.c.b16 %v3664, %v3662
      %v3763 = vpack.c.b16 %v3667, %v3665
      %v3764 = vpack.c.b16 %v3668, %v3666
      %v3765 = vpack.c.b16 %v3671, %v3669
      %v3766 = vpack.c.b16 %v3672, %v3670
      %v3767 = vpack.c.b16 %v3675, %v3673
      %v3768 = vpack.c.b16 %v3676, %v3674
      %v3769 = vpack.c.b16 %v3679, %v3677
      %v3770 = vpack.c.b16 %v3680, %v3678
      %v3771 = vpack.c.b16 %v3683, %v3681
      %v3772 = vpack.c.b16 %v3684, %v3682
      %v3773 = vpack.c.b16 %v3687, %v3685
      %v3774 = vpack.c.b16 %v3688, %v3686
      %v3775 = vpack.c.b16 %v3691, %v3689
      %v3776 = vpack.c.b16 %v3692, %v3690
      %v3777 = vpack.c.b16 %v3695, %v3693
      %v3778 = vpack.c.b16 %v3696, %v3694
      %v3779 = vpack.c.b16 %v3699, %v3697
      %v3780 = vpack.c.b16 %v3700, %v3698
      %v3781 = vpack.c.b16 %v3703, %v3701
      %v3782 = vpack.c.b16 %v3704, %v3702
      %v3783 = vpack.c.b16 %v3707, %v3705
      %v3784 = vpack.c.b16 %v3708, %v3706
      %v3785 = vpack.c.b16 %v3711, %v3709
      %v3786 = vpack.c.b16 %v3712, %v3710
      %v3787 = vpack.c.b16 %v3715, %v3713
      %v3788 = vpack.c.b16 %v3716, %v3714
      %v3789 = vpack.c.b16 %v3719, %v3717
      %v3790 = vpack.c.b16 %v3720, %v3718
      %v3791 = vpack.c.b16 %v3723, %v3721
      %v3792 = vpack.c.b16 %v3724, %v3722
      %v3793 = vpack.c.b16 %v3727, %v3725
      %v3794 = vpack.c.b16 %v3728, %v3726
      %v3795 = vpack.c.b16 %v3731, %v3729
      %v3796 = vpack.c.b16 %v3732, %v3730
      %3861 = vmatpush.bf16.msra.mxu0 %v3747
      %3862 = vmatpush.bf16.msra.mxu0 %v3745
      %3863 = vmatpush.bf16.msra.mxu0 %v3743
      %3864 = vmatpush.bf16.msra.mxu0 %v3741
      %3865 = vmatpush.bf16.msra.mxu0 %v3739
      %3866 = vmatpush.bf16.msra.mxu0 %v3737
      %3867 = vmatpush.bf16.msra.mxu0 %v3735
      %3868 = vmatpush.bf16.msra.mxu0 %v3733
      %3869 = vmatmul.bf16.gmra.mxu0 %v3439
      %v3870 = vpop.f32.mrf.mxu0
      %v3871 = vadd.f32 %v3537, %v3870
      %v3872 = vpop.f32.mrf.mxu0
      %v3873 = vadd.f32 %v3537, %v3872
      %3874 = vmatmul.bf16.gmra.mxu0 %v3443
      %v3875 = vpop.f32.mrf.mxu0
      %v3876 = vadd.f32 %v3537, %v3875
      %v3877 = vpop.f32.mrf.mxu0
      %v3878 = vadd.f32 %v3537, %v3877
      %3879 = vmatmul.bf16.gmra.mxu0 %v3447
      %v3880 = vpop.f32.mrf.mxu0
      %v3881 = vadd.f32 %v3537, %v3880
      %v3882 = vpop.f32.mrf.mxu0
      %v3883 = vadd.f32 %v3537, %v3882
      %3884 = vmatmul.bf16.gmra.mxu0 %v3451
      %v3885 = vpop.f32.mrf.mxu0
      %v3886 = vadd.f32 %v3537, %v3885
      %v3887 = vpop.f32.mrf.mxu0
      %v3888 = vadd.f32 %v3537, %v3887
      %3889 = vmatmul.bf16.gmra.mxu0 %v3455
      %v3890 = vpop.f32.mrf.mxu0
      %v3891 = vadd.f32 %v3537, %v3890
      %v3892 = vpop.f32.mrf.mxu0
      %v3893 = vadd.f32 %v3537, %v3892
      %3894 = vmatmul.bf16.gmra.mxu0 %v3459
      %v3895 = vpop.f32.mrf.mxu0
      %v3896 = vadd.f32 %v3537, %v3895
      %v3897 = vpop.f32.mrf.mxu0
      %v3898 = vadd.f32 %v3537, %v3897
      %3899 = vmatmul.bf16.gmra.mxu0 %v3463
      %v3900 = vpop.f32.mrf.mxu0
      %v3901 = vadd.f32 %v3537, %v3900
      %v3902 = vpop.f32.mrf.mxu0
      %v3903 = vadd.f32 %v3537, %v3902
      %3904 = vmatmul.bf16.gmra.mxu0 %v3467
      %v3905 = vpop.f32.mrf.mxu0
      %v3906 = vadd.f32 %v3537, %v3905
      %v3907 = vpop.f32.mrf.mxu0
      %v3908 = vadd.f32 %v3537, %v3907
      %3909 = vdwg.mxu0
      %3910 = vmatpush.bf16.msra.mxu0 %v3763
      %3911 = vmatpush.bf16.msra.mxu0 %v3761
      %3912 = vmatpush.bf16.msra.mxu0 %v3759
      %3913 = vmatpush.bf16.msra.mxu0 %v3757
      %3914 = vmatpush.bf16.msra.mxu0 %v3755
      %3915 = vmatpush.bf16.msra.mxu0 %v3753
      %3916 = vmatpush.bf16.msra.mxu0 %v3751
      %3917 = vmatpush.bf16.msra.mxu0 %v3749
      %3918 = vmatmul.bf16.gmra.mxu0 %v3440
      %v3919 = vpop.f32.mrf.mxu0
      %v3920 = vadd.f32 %v3871, %v3919
      %v3921 = vpop.f32.mrf.mxu0
      %v3922 = vadd.f32 %v3873, %v3921
      %3923 = vmatmul.bf16.gmra.mxu0 %v3444
      %v3924 = vpop.f32.mrf.mxu0
      %v3925 = vadd.f32 %v3876, %v3924
      %v3926 = vpop.f32.mrf.mxu0
      %v3927 = vadd.f32 %v3878, %v3926
      %3928 = vmatmul.bf16.gmra.mxu0 %v3448
      %v3929 = vpop.f32.mrf.mxu0
      %v3930 = vadd.f32 %v3881, %v3929
      %v3931 = vpop.f32.mrf.mxu0
      %v3932 = vadd.f32 %v3883, %v3931
      %3933 = vmatmul.bf16.gmra.mxu0 %v3452
      %v3934 = vpop.f32.mrf.mxu0
      %v3935 = vadd.f32 %v3886, %v3934
      %v3936 = vpop.f32.mrf.mxu0
      %v3937 = vadd.f32 %v3888, %v3936
      %3938 = vmatmul.bf16.gmra.mxu0 %v3456
      %v3939 = vpop.f32.mrf.mxu0
      %v3940 = vadd.f32 %v3891, %v3939
      %v3941 = vpop.f32.mrf.mxu0
      %v3942 = vadd.f32 %v3893, %v3941
      %3943 = vmatmul.bf16.gmra.mxu0 %v3460
      %v3944 = vpop.f32.mrf.mxu0
      %v3945 = vadd.f32 %v3896, %v3944
      %v3946 = vpop.f32.mrf.mxu0
      %v3947 = vadd.f32 %v3898, %v3946
      %3948 = vmatmul.bf16.gmra.mxu0 %v3464
      %v3949 = vpop.f32.mrf.mxu0
      %v3950 = vadd.f32 %v3901, %v3949
      %v3951 = vpop.f32.mrf.mxu0
      %v3952 = vadd.f32 %v3903, %v3951
      %3953 = vmatmul.bf16.gmra.mxu0 %v3468
      %v3954 = vpop.f32.mrf.mxu0
      %v3955 = vadd.f32 %v3906, %v3954
      %v3956 = vpop.f32.mrf.mxu0
      %v3957 = vadd.f32 %v3908, %v3956
      %3958 = vdwg.mxu0
      %3959 = vmatpush.bf16.msra.mxu0 %v3779
      %3960 = vmatpush.bf16.msra.mxu0 %v3777
      %3961 = vmatpush.bf16.msra.mxu0 %v3775
      %3962 = vmatpush.bf16.msra.mxu0 %v3773
      %3963 = vmatpush.bf16.msra.mxu0 %v3771
      %3964 = vmatpush.bf16.msra.mxu0 %v3769
      %3965 = vmatpush.bf16.msra.mxu0 %v3767
      %3966 = vmatpush.bf16.msra.mxu0 %v3765
      %3967 = vmatmul.bf16.gmra.mxu0 %v3441
      %v3968 = vpop.f32.mrf.mxu0
      %v3969 = vadd.f32 %v3920, %v3968
      %v3970 = vpop.f32.mrf.mxu0
      %v3971 = vadd.f32 %v3922, %v3970
      %3972 = vmatmul.bf16.gmra.mxu0 %v3445
      %v3973 = vpop.f32.mrf.mxu0
      %v3974 = vadd.f32 %v3925, %v3973
      %v3975 = vpop.f32.mrf.mxu0
      %v3976 = vadd.f32 %v3927, %v3975
      %3977 = vmatmul.bf16.gmra.mxu0 %v3449
      %v3978 = vpop.f32.mrf.mxu0
      %v3979 = vadd.f32 %v3930, %v3978
      %v3980 = vpop.f32.mrf.mxu0
      %v3981 = vadd.f32 %v3932, %v3980
      %3982 = vmatmul.bf16.gmra.mxu0 %v3453
      %v3983 = vpop.f32.mrf.mxu0
      %v3984 = vadd.f32 %v3935, %v3983
      %v3985 = vpop.f32.mrf.mxu0
      %v3986 = vadd.f32 %v3937, %v3985
      %3987 = vmatmul.bf16.gmra.mxu0 %v3457
      %v3988 = vpop.f32.mrf.mxu0
      %v3989 = vadd.f32 %v3940, %v3988
      %v3990 = vpop.f32.mrf.mxu0
      %v3991 = vadd.f32 %v3942, %v3990
      %3992 = vmatmul.bf16.gmra.mxu0 %v3461
      %v3993 = vpop.f32.mrf.mxu0
      %v3994 = vadd.f32 %v3945, %v3993
      %v3995 = vpop.f32.mrf.mxu0
      %v3996 = vadd.f32 %v3947, %v3995
      %3997 = vmatmul.bf16.gmra.mxu0 %v3465
      %v3998 = vpop.f32.mrf.mxu0
      %v3999 = vadd.f32 %v3950, %v3998
      %v4000 = vpop.f32.mrf.mxu0
      %v4001 = vadd.f32 %v3952, %v4000
      %4002 = vmatmul.bf16.gmra.mxu0 %v3469
      %v4003 = vpop.f32.mrf.mxu0
      %v4004 = vadd.f32 %v3955, %v4003
      %v4005 = vpop.f32.mrf.mxu0
      %v4006 = vadd.f32 %v3957, %v4005
      %4007 = vdwg.mxu0
      %4008 = vmatpush.bf16.msra.mxu0 %v3795
      %4009 = vmatpush.bf16.msra.mxu0 %v3793
      %4010 = vmatpush.bf16.msra.mxu0 %v3791
      %4011 = vmatpush.bf16.msra.mxu0 %v3789
      %4012 = vmatpush.bf16.msra.mxu0 %v3787
      %4013 = vmatpush.bf16.msra.mxu0 %v3785
      %4014 = vmatpush.bf16.msra.mxu0 %v3783
      %4015 = vmatpush.bf16.msra.mxu0 %v3781
      %4016 = vmatmul.bf16.gmra.mxu0 %v3442
      %v4017 = vpop.f32.mrf.mxu0
      %v4018 = vadd.f32 %v3969, %v4017
      %v4019 = vpop.f32.mrf.mxu0
      %v4020 = vadd.f32 %v3971, %v4019
      %4021 = vmatmul.bf16.gmra.mxu0 %v3446
      %v4022 = vpop.f32.mrf.mxu0
      %v4023 = vadd.f32 %v3974, %v4022
      %v4024 = vpop.f32.mrf.mxu0
      %v4025 = vadd.f32 %v3976, %v4024
      %4026 = vmatmul.bf16.gmra.mxu0 %v3450
      %v4027 = vpop.f32.mrf.mxu0
      %v4028 = vadd.f32 %v3979, %v4027
      %v4029 = vpop.f32.mrf.mxu0
      %v4030 = vadd.f32 %v3981, %v4029
      %4031 = vmatmul.bf16.gmra.mxu0 %v3454
      %v4032 = vpop.f32.mrf.mxu0
      %v4033 = vadd.f32 %v3984, %v4032
      %v4034 = vpop.f32.mrf.mxu0
      %v4035 = vadd.f32 %v3986, %v4034
      %4036 = vmatmul.bf16.gmra.mxu0 %v3458
      %v4037 = vpop.f32.mrf.mxu0
      %v4038 = vadd.f32 %v3989, %v4037
      %v4039 = vpop.f32.mrf.mxu0
      %v4040 = vadd.f32 %v3991, %v4039
      %4041 = vmatmul.bf16.gmra.mxu0 %v3462
      %v4042 = vpop.f32.mrf.mxu0
      %v4043 = vadd.f32 %v3994, %v4042
      %v4044 = vpop.f32.mrf.mxu0
      %v4045 = vadd.f32 %v3996, %v4044
      %4046 = vmatmul.bf16.gmra.mxu0 %v3466
      %v4047 = vpop.f32.mrf.mxu0
      %v4048 = vadd.f32 %v3999, %v4047
      %v4049 = vpop.f32.mrf.mxu0
      %v4050 = vadd.f32 %v4001, %v4049
      %4051 = vmatmul.bf16.gmra.mxu0 %v3470
      %v4052 = vpop.f32.mrf.mxu0
      %v4053 = vadd.f32 %v4004, %v4052
      %v4054 = vpop.f32.mrf.mxu0
      %v4055 = vadd.f32 %v4006, %v4054
      %4056 = vdwg.mxu0
      %4057 = vmatpush.bf16.msra.mxu0 %v3748
      %4058 = vmatpush.bf16.msra.mxu0 %v3746
      %4059 = vmatpush.bf16.msra.mxu0 %v3744
      %4060 = vmatpush.bf16.msra.mxu0 %v3742
      %4061 = vmatpush.bf16.msra.mxu0 %v3740
      %4062 = vmatpush.bf16.msra.mxu0 %v3738
      %4063 = vmatpush.bf16.msra.mxu0 %v3736
      %4064 = vmatpush.bf16.msra.mxu0 %v3734
      %4065 = vmatmul.bf16.gmra.mxu0 %v3439
      %v4066 = vpop.f32.mrf.mxu0
      %v4067 = vadd.f32 %v3538, %v4066
      %v4068 = vpop.f32.mrf.mxu0
      %v4069 = vadd.f32 %v3538, %v4068
      %4070 = vmatmul.bf16.gmra.mxu0 %v3443
      %v4071 = vpop.f32.mrf.mxu0
      %v4072 = vadd.f32 %v3538, %v4071
      %v4073 = vpop.f32.mrf.mxu0
      %v4074 = vadd.f32 %v3538, %v4073
      %4075 = vmatmul.bf16.gmra.mxu0 %v3447
      %v4076 = vpop.f32.mrf.mxu0
      %v4077 = vadd.f32 %v3538, %v4076
      %v4078 = vpop.f32.mrf.mxu0
      %v4079 = vadd.f32 %v3538, %v4078
      %4080 = vmatmul.bf16.gmra.mxu0 %v3451
      %v4081 = vpop.f32.mrf.mxu0
      %v4082 = vadd.f32 %v3538, %v4081
      %v4083 = vpop.f32.mrf.mxu0
      %v4084 = vadd.f32 %v3538, %v4083
      %4085 = vmatmul.bf16.gmra.mxu0 %v3455
      %v4086 = vpop.f32.mrf.mxu0
      %v4087 = vadd.f32 %v3538, %v4086
      %v4088 = vpop.f32.mrf.mxu0
      %v4089 = vadd.f32 %v3538, %v4088
      %4090 = vmatmul.bf16.gmra.mxu0 %v3459
      %v4091 = vpop.f32.mrf.mxu0
      %v4092 = vadd.f32 %v3538, %v4091
      %v4093 = vpop.f32.mrf.mxu0
      %v4094 = vadd.f32 %v3538, %v4093
      %4095 = vmatmul.bf16.gmra.mxu0 %v3463
      %v4096 = vpop.f32.mrf.mxu0
      %v4097 = vadd.f32 %v3538, %v4096
      %v4098 = vpop.f32.mrf.mxu0
      %v4099 = vadd.f32 %v3538, %v4098
      %4100 = vmatmul.bf16.gmra.mxu0 %v3467
      %v4101 = vpop.f32.mrf.mxu0
      %v4102 = vadd.f32 %v3538, %v4101
      %v4103 = vpop.f32.mrf.mxu0
      %v4104 = vadd.f32 %v3538, %v4103
      %4105 = vdwg.mxu0
      %4106 = vmatpush.bf16.msra.mxu0 %v3764
      %4107 = vmatpush.bf16.msra.mxu0 %v3762
      %4108 = vmatpush.bf16.msra.mxu0 %v3760
      %4109 = vmatpush.bf16.msra.mxu0 %v3758
      %4110 = vmatpush.bf16.msra.mxu0 %v3756
      %4111 = vmatpush.bf16.msra.mxu0 %v3754
      %4112 = vmatpush.bf16.msra.mxu0 %v3752
      %4113 = vmatpush.bf16.msra.mxu0 %v3750
      %4114 = vmatmul.bf16.gmra.mxu0 %v3440
      %v4115 = vpop.f32.mrf.mxu0
      %v4116 = vadd.f32 %v4067, %v4115
      %v4117 = vpop.f32.mrf.mxu0
      %v4118 = vadd.f32 %v4069, %v4117
      %4119 = vmatmul.bf16.gmra.mxu0 %v3444
      %v4120 = vpop.f32.mrf.mxu0
      %v4121 = vadd.f32 %v4072, %v4120
      %v4122 = vpop.f32.mrf.mxu0
      %v4123 = vadd.f32 %v4074, %v4122
      %4124 = vmatmul.bf16.gmra.mxu0 %v3448
      %v4125 = vpop.f32.mrf.mxu0
      %v4126 = vadd.f32 %v4077, %v4125
      %v4127 = vpop.f32.mrf.mxu0
      %v4128 = vadd.f32 %v4079, %v4127
      %4129 = vmatmul.bf16.gmra.mxu0 %v3452
      %v4130 = vpop.f32.mrf.mxu0
      %v4131 = vadd.f32 %v4082, %v4130
      %v4132 = vpop.f32.mrf.mxu0
      %v4133 = vadd.f32 %v4084, %v4132
      %4134 = vmatmul.bf16.gmra.mxu0 %v3456
      %v4135 = vpop.f32.mrf.mxu0
      %v4136 = vadd.f32 %v4087, %v4135
      %v4137 = vpop.f32.mrf.mxu0
      %v4138 = vadd.f32 %v4089, %v4137
      %4139 = vmatmul.bf16.gmra.mxu0 %v3460
      %v4140 = vpop.f32.mrf.mxu0
      %v4141 = vadd.f32 %v4092, %v4140
      %v4142 = vpop.f32.mrf.mxu0
      %v4143 = vadd.f32 %v4094, %v4142
      %4144 = vmatmul.bf16.gmra.mxu0 %v3464
      %v4145 = vpop.f32.mrf.mxu0
      %v4146 = vadd.f32 %v4097, %v4145
      %v4147 = vpop.f32.mrf.mxu0
      %v4148 = vadd.f32 %v4099, %v4147
      %4149 = vmatmul.bf16.gmra.mxu0 %v3468
      %v4150 = vpop.f32.mrf.mxu0
      %v4151 = vadd.f32 %v4102, %v4150
      %v4152 = vpop.f32.mrf.mxu0
      %v4153 = vadd.f32 %v4104, %v4152
      %4154 = vdwg.mxu0
      %4155 = vmatpush.bf16.msra.mxu0 %v3780
      %4156 = vmatpush.bf16.msra.mxu0 %v3778
      %4157 = vmatpush.bf16.msra.mxu0 %v3776
      %4158 = vmatpush.bf16.msra.mxu0 %v3774
      %4159 = vmatpush.bf16.msra.mxu0 %v3772
      %4160 = vmatpush.bf16.msra.mxu0 %v3770
      %4161 = vmatpush.bf16.msra.mxu0 %v3768
      %4162 = vmatpush.bf16.msra.mxu0 %v3766
      %4163 = vmatmul.bf16.gmra.mxu0 %v3441
      %v4164 = vpop.f32.mrf.mxu0
      %v4165 = vadd.f32 %v4116, %v4164
      %v4166 = vpop.f32.mrf.mxu0
      %v4167 = vadd.f32 %v4118, %v4166
      %4168 = vmatmul.bf16.gmra.mxu0 %v3445
      %v4169 = vpop.f32.mrf.mxu0
      %v4170 = vadd.f32 %v4121, %v4169
      %v4171 = vpop.f32.mrf.mxu0
      %v4172 = vadd.f32 %v4123, %v4171
      %4173 = vmatmul.bf16.gmra.mxu0 %v3449
      %v4174 = vpop.f32.mrf.mxu0
      %v4175 = vadd.f32 %v4126, %v4174
      %v4176 = vpop.f32.mrf.mxu0
      %v4177 = vadd.f32 %v4128, %v4176
      %4178 = vmatmul.bf16.gmra.mxu0 %v3453
      %v4179 = vpop.f32.mrf.mxu0
      %v4180 = vadd.f32 %v4131, %v4179
      %v4181 = vpop.f32.mrf.mxu0
      %v4182 = vadd.f32 %v4133, %v4181
      %4183 = vmatmul.bf16.gmra.mxu0 %v3457
      %v4184 = vpop.f32.mrf.mxu0
      %v4185 = vadd.f32 %v4136, %v4184
      %v4186 = vpop.f32.mrf.mxu0
      %v4187 = vadd.f32 %v4138, %v4186
      %4188 = vmatmul.bf16.gmra.mxu0 %v3461
      %v4189 = vpop.f32.mrf.mxu0
      %v4190 = vadd.f32 %v4141, %v4189
      %v4191 = vpop.f32.mrf.mxu0
      %v4192 = vadd.f32 %v4143, %v4191
      %4193 = vmatmul.bf16.gmra.mxu0 %v3465
      %v4194 = vpop.f32.mrf.mxu0
      %v4195 = vadd.f32 %v4146, %v4194
      %v4196 = vpop.f32.mrf.mxu0
      %v4197 = vadd.f32 %v4148, %v4196
      %4198 = vmatmul.bf16.gmra.mxu0 %v3469
      %v4199 = vpop.f32.mrf.mxu0
      %v4200 = vadd.f32 %v4151, %v4199
      %v4201 = vpop.f32.mrf.mxu0
      %v4202 = vadd.f32 %v4153, %v4201
      %4203 = vdwg.mxu0
      %4204 = vmatpush.bf16.msra.mxu0 %v3796
      %4205 = vmatpush.bf16.msra.mxu0 %v3794
      %4206 = vmatpush.bf16.msra.mxu0 %v3792
      %4207 = vmatpush.bf16.msra.mxu0 %v3790
      %4208 = vmatpush.bf16.msra.mxu0 %v3788
      %4209 = vmatpush.bf16.msra.mxu0 %v3786
      %4210 = vmatpush.bf16.msra.mxu0 %v3784
      %4211 = vmatpush.bf16.msra.mxu0 %v3782
      %4212 = vmatmul.bf16.gmra.mxu0 %v3442
      %v4213 = vpop.f32.mrf.mxu0
      %v4214 = vadd.f32 %v4165, %v4213
      %v4215 = vpop.f32.mrf.mxu0
      %v4216 = vadd.f32 %v4167, %v4215
      %4217 = vmatmul.bf16.gmra.mxu0 %v3446
      %v4218 = vpop.f32.mrf.mxu0
      %v4219 = vadd.f32 %v4170, %v4218
      %v4220 = vpop.f32.mrf.mxu0
      %v4221 = vadd.f32 %v4172, %v4220
      %4222 = vmatmul.bf16.gmra.mxu0 %v3450
      %v4223 = vpop.f32.mrf.mxu0
      %v4224 = vadd.f32 %v4175, %v4223
      %v4225 = vpop.f32.mrf.mxu0
      %v4226 = vadd.f32 %v4177, %v4225
      %4227 = vmatmul.bf16.gmra.mxu0 %v3454
      %v4228 = vpop.f32.mrf.mxu0
      %v4229 = vadd.f32 %v4180, %v4228
      %v4230 = vpop.f32.mrf.mxu0
      %v4231 = vadd.f32 %v4182, %v4230
      %4232 = vmatmul.bf16.gmra.mxu0 %v3458
      %v4233 = vpop.f32.mrf.mxu0
      %v4234 = vadd.f32 %v4185, %v4233
      %v4235 = vpop.f32.mrf.mxu0
      %v4236 = vadd.f32 %v4187, %v4235
      %4237 = vmatmul.bf16.gmra.mxu0 %v3462
      %v4238 = vpop.f32.mrf.mxu0
      %v4239 = vadd.f32 %v4190, %v4238
      %v4240 = vpop.f32.mrf.mxu0
      %v4241 = vadd.f32 %v4192, %v4240
      %4242 = vmatmul.bf16.gmra.mxu0 %v3466
      %v4243 = vpop.f32.mrf.mxu0
      %v4244 = vadd.f32 %v4195, %v4243
      %v4245 = vpop.f32.mrf.mxu0
      %v4246 = vadd.f32 %v4197, %v4245
      %4247 = vmatmul.bf16.gmra.mxu0 %v3470
      %v4248 = vpop.f32.mrf.mxu0
      %v4249 = vadd.f32 %v4200, %v4248
      %v4250 = vpop.f32.mrf.mxu0
      %v4251 = vadd.f32 %v4202, %v4250
      %4252 = vdwg.mxu0
      %v4253 = vmax.f32 %v4018, 0.0
      %v4254 = vmax.f32 %v4214, 0.0
      %v4255 = vmax.f32 %v4020, 0.0
      %v4256 = vmax.f32 %v4216, 0.0
      %v4257 = vmax.f32 %v4023, 0.0
      %v4258 = vmax.f32 %v4219, 0.0
      %v4259 = vmax.f32 %v4025, 0.0
      %v4260 = vmax.f32 %v4221, 0.0
      %v4261 = vmax.f32 %v4028, 0.0
      %v4262 = vmax.f32 %v4224, 0.0
      %v4263 = vmax.f32 %v4030, 0.0
      %v4264 = vmax.f32 %v4226, 0.0
      %v4265 = vmax.f32 %v4033, 0.0
      %v4266 = vmax.f32 %v4229, 0.0
      %v4267 = vmax.f32 %v4035, 0.0
      %v4268 = vmax.f32 %v4231, 0.0
      %v4269 = vmax.f32 %v4038, 0.0
      %v4270 = vmax.f32 %v4234, 0.0
      %v4271 = vmax.f32 %v4040, 0.0
      %v4272 = vmax.f32 %v4236, 0.0
      %v4273 = vmax.f32 %v4043, 0.0
      %v4274 = vmax.f32 %v4239, 0.0
      %v4275 = vmax.f32 %v4045, 0.0
      %v4276 = vmax.f32 %v4241, 0.0
      %v4277 = vmax.f32 %v4048, 0.0
      %v4278 = vmax.f32 %v4244, 0.0
      %v4279 = vmax.f32 %v4050, 0.0
      %v4280 = vmax.f32 %v4246, 0.0
      %v4281 = vmax.f32 %v4053, 0.0
      %v4282 = vmax.f32 %v4249, 0.0
      %v4283 = vmax.f32 %v4055, 0.0
      %v4284 = vmax.f32 %v4251, 0.0
      %v4285 = vpack.c.bf16 %v4255, %v4253
      %v4286 = vpack.c.bf16 %v4256, %v4254
      %v4287 = vpack.c.bf16 %v4259, %v4257
      %v4288 = vpack.c.bf16 %v4260, %v4258
      %v4289 = vpack.c.bf16 %v4263, %v4261
      %v4290 = vpack.c.bf16 %v4264, %v4262
      %v4291 = vpack.c.bf16 %v4267, %v4265
      %v4292 = vpack.c.bf16 %v4268, %v4266
      %v4293 = vpack.c.bf16 %v4271, %v4269
      %v4294 = vpack.c.bf16 %v4272, %v4270
      %v4295 = vpack.c.bf16 %v4275, %v4273
      %v4296 = vpack.c.bf16 %v4276, %v4274
      %v4297 = vpack.c.bf16 %v4279, %v4277
      %v4298 = vpack.c.bf16 %v4280, %v4278
      %v4299 = vpack.c.bf16 %v4283, %v4281
      %v4300 = vpack.c.bf16 %v4284, %v4282
      %v4301 = vld [vmem:[%s3] sm:$0xf]
      %v4302 = vld [vmem:[%s3 + $0x4] sm:$0xf]
      %v4303 = vld [vmem:[%s3 + $0x8] sm:$0xf]
      %v4304 = vld [vmem:[%s3 + $0xc] sm:$0xf]
      %v4305 = vld [vmem:[%s3 + $0x10] sm:$0xf]
      %v4306 = vld [vmem:[%s3 + $0x14] sm:$0xf]
      %v4307 = vld [vmem:[%s3 + $0x18] sm:$0xf]
      %v4308 = vld [vmem:[%s3 + $0x1c] sm:$0xf]
      %v4309 = vld [vmem:[%s3 + $0x20] sm:$0xf]
      %v4310 = vld [vmem:[%s3 + $0x24] sm:$0xf]
      %v4311 = vld [vmem:[%s3 + $0x28] sm:$0xf]
      %v4312 = vld [vmem:[%s3 + $0x2c] sm:$0xf]
      %v4313 = vld [vmem:[%s3 + $0x30] sm:$0xf]
      %v4314 = vld [vmem:[%s3 + $0x34] sm:$0xf]
      %v4315 = vld [vmem:[%s3 + $0x38] sm:$0xf]
      %v4316 = vld [vmem:[%s3 + $0x3c] sm:$0xf]
      %v4317 = vld [vmem:[%s3 + $0x40] sm:$0xf]
      %v4318 = vld [vmem:[%s3 + $0x44] sm:$0xf]
      %v4319 = vld [vmem:[%s3 + $0x48] sm:$0xf]
      %v4320 = vld [vmem:[%s3 + $0x4c] sm:$0xf]
      %v4321 = vld [vmem:[%s3 + $0x50] sm:$0xf]
      %v4322 = vld [vmem:[%s3 + $0x54] sm:$0xf]
      %v4323 = vld [vmem:[%s3 + $0x58] sm:$0xf]
      %v4324 = vld [vmem:[%s3 + $0x5c] sm:$0xf]
      %v4325 = vld [vmem:[%s3 + $0x60] sm:$0xf]
      %v4326 = vld [vmem:[%s3 + $0x64] sm:$0xf]
      %v4327 = vld [vmem:[%s3 + $0x68] sm:$0xf]
      %v4328 = vld [vmem:[%s3 + $0x6c] sm:$0xf]
      %v4329 = vld [vmem:[%s3 + $0x70] sm:$0xf]
      %v4330 = vld [vmem:[%s3 + $0x74] sm:$0xf]
      %v4331 = vld [vmem:[%s3 + $0x78] sm:$0xf]
      %v4332 = vld [vmem:[%s3 + $0x7c] sm:$0xf]
      %v4333 = vld [vmem:[%s9] sm:$0x1]
      %v4335 = vperm.slane %v4333, 0
      %v4369 = vunpack.c.l.b16 %v4301
      %v4370 = vunpack.c.l.b16 %v4302
      %v4371 = vunpack.c.l.b16 %v4303
      %v4372 = vunpack.c.l.b16 %v4304
      %v4373 = vunpack.c.l.b16 %v4305
      %v4374 = vunpack.c.l.b16 %v4306
      %v4375 = vunpack.c.l.b16 %v4307
      %v4376 = vunpack.c.l.b16 %v4308
      %v4377 = vunpack.c.l.b16 %v4309
      %v4378 = vunpack.c.l.b16 %v4310
      %v4379 = vunpack.c.l.b16 %v4311
      %v4380 = vunpack.c.l.b16 %v4312
      %v4381 = vunpack.c.l.b16 %v4313
      %v4382 = vunpack.c.l.b16 %v4314
      %v4383 = vunpack.c.l.b16 %v4315
      %v4384 = vunpack.c.l.b16 %v4316
      %v4385 = vunpack.c.l.b16 %v4317
      %v4386 = vunpack.c.l.b16 %v4318
      %v4387 = vunpack.c.l.b16 %v4319
      %v4388 = vunpack.c.l.b16 %v4320
      %v4389 = vunpack.c.l.b16 %v4321
      %v4390 = vunpack.c.l.b16 %v4322
      %v4391 = vunpack.c.l.b16 %v4323
      %v4392 = vunpack.c.l.b16 %v4324
      %v4393 = vunpack.c.l.b16 %v4325
      %v4394 = vunpack.c.l.b16 %v4326
      %v4395 = vunpack.c.l.b16 %v4327
      %v4396 = vunpack.c.l.b16 %v4328
      %v4397 = vunpack.c.l.b16 %v4329
      %v4398 = vunpack.c.l.b16 %v4330
      %v4399 = vunpack.c.l.b16 %v4331
      %v4400 = vunpack.c.l.b16 %v4332
      %v4401 = vpack.c.b16 %v4370, %v4369
      %v4402 = vpack.c.b16 %v4372, %v4371
      %v4403 = vpack.c.b16 %v4374, %v4373
      %v4404 = vpack.c.b16 %v4376, %v4375
      %v4405 = vpack.c.b16 %v4378, %v4377
      %v4406 = vpack.c.b16 %v4380, %v4379
      %v4407 = vpack.c.b16 %v4382, %v4381
      %v4408 = vpack.c.b16 %v4384, %v4383
      %v4409 = vpack.c.b16 %v4386, %v4385
      %v4410 = vpack.c.b16 %v4388, %v4387
      %v4411 = vpack.c.b16 %v4390, %v4389
      %v4412 = vpack.c.b16 %v4392, %v4391
      %v4413 = vpack.c.b16 %v4394, %v4393
      %v4414 = vpack.c.b16 %v4396, %v4395
      %v4415 = vpack.c.b16 %v4398, %v4397
      %v4416 = vpack.c.b16 %v4400, %v4399
      %4433 = vmatpush.bf16.msra.mxu0 %v4408
      %4434 = vmatpush.bf16.msra.mxu0 %v4407
      %4435 = vmatpush.bf16.msra.mxu0 %v4406
      %4436 = vmatpush.bf16.msra.mxu0 %v4405
      %4437 = vmatpush.bf16.msra.mxu0 %v4404
      %4438 = vmatpush.bf16.msra.mxu0 %v4403
      %4439 = vmatpush.bf16.msra.mxu0 %v4402
      %4440 = vmatpush.bf16.msra.mxu0 %v4401
      %4441 = vmatmul.bf16.gmra.mxu0 %v4285
      %v4442 = vpop.f32.mrf.mxu0
      %v4443 = vadd.f32 %v4335, %v4442
      %v4444 = vpop.f32.mrf.mxu0
      %v4445 = vadd.f32 %v4335, %v4444
      %4446 = vmatmul.bf16.gmra.mxu0 %v4287
      %v4447 = vpop.f32.mrf.mxu0
      %v4448 = vadd.f32 %v4335, %v4447
      %v4449 = vpop.f32.mrf.mxu0
      %v4450 = vadd.f32 %v4335, %v4449
      %4451 = vmatmul.bf16.gmra.mxu0 %v4289
      %v4452 = vpop.f32.mrf.mxu0
      %v4453 = vadd.f32 %v4335, %v4452
      %v4454 = vpop.f32.mrf.mxu0
      %v4455 = vadd.f32 %v4335, %v4454
      %4456 = vmatmul.bf16.gmra.mxu0 %v4291
      %v4457 = vpop.f32.mrf.mxu0
      %v4458 = vadd.f32 %v4335, %v4457
      %v4459 = vpop.f32.mrf.mxu0
      %v4460 = vadd.f32 %v4335, %v4459
      %4461 = vmatmul.bf16.gmra.mxu0 %v4293
      %v4462 = vpop.f32.mrf.mxu0
      %v4463 = vadd.f32 %v4335, %v4462
      %v4464 = vpop.f32.mrf.mxu0
      %v4465 = vadd.f32 %v4335, %v4464
      %4466 = vmatmul.bf16.gmra.mxu0 %v4295
      %v4467 = vpop.f32.mrf.mxu0
      %v4468 = vadd.f32 %v4335, %v4467
      %v4469 = vpop.f32.mrf.mxu0
      %v4470 = vadd.f32 %v4335, %v4469
      %4471 = vmatmul.bf16.gmra.mxu0 %v4297
      %v4472 = vpop.f32.mrf.mxu0
      %v4473 = vadd.f32 %v4335, %v4472
      %v4474 = vpop.f32.mrf.mxu0
      %v4475 = vadd.f32 %v4335, %v4474
      %4476 = vmatmul.bf16.gmra.mxu0 %v4299
      %v4477 = vpop.f32.mrf.mxu0
      %v4478 = vadd.f32 %v4335, %v4477
      %v4479 = vpop.f32.mrf.mxu0
      %v4480 = vadd.f32 %v4335, %v4479
      %4481 = vdwg.mxu0
      %4482 = vmatpush.bf16.msra.mxu0 %v4416
      %4483 = vmatpush.bf16.msra.mxu0 %v4415
      %4484 = vmatpush.bf16.msra.mxu0 %v4414
      %4485 = vmatpush.bf16.msra.mxu0 %v4413
      %4486 = vmatpush.bf16.msra.mxu0 %v4412
      %4487 = vmatpush.bf16.msra.mxu0 %v4411
      %4488 = vmatpush.bf16.msra.mxu0 %v4410
      %4489 = vmatpush.bf16.msra.mxu0 %v4409
      %4490 = vmatmul.bf16.gmra.mxu0 %v4286
      %v4491 = vpop.f32.mrf.mxu0
      %v4492 = vadd.f32 %v4443, %v4491
      %v4493 = vpop.f32.mrf.mxu0
      %v4494 = vadd.f32 %v4445, %v4493
      %4495 = vmatmul.bf16.gmra.mxu0 %v4288
      %v4496 = vpop.f32.mrf.mxu0
      %v4497 = vadd.f32 %v4448, %v4496
      %v4498 = vpop.f32.mrf.mxu0
      %v4499 = vadd.f32 %v4450, %v4498
      %4500 = vmatmul.bf16.gmra.mxu0 %v4290
      %v4501 = vpop.f32.mrf.mxu0
      %v4502 = vadd.f32 %v4453, %v4501
      %v4503 = vpop.f32.mrf.mxu0
      %v4504 = vadd.f32 %v4455, %v4503
      %4505 = vmatmul.bf16.gmra.mxu0 %v4292
      %v4506 = vpop.f32.mrf.mxu0
      %v4507 = vadd.f32 %v4458, %v4506
      %v4508 = vpop.f32.mrf.mxu0
      %v4509 = vadd.f32 %v4460, %v4508
      %4510 = vmatmul.bf16.gmra.mxu0 %v4294
      %v4511 = vpop.f32.mrf.mxu0
      %v4512 = vadd.f32 %v4463, %v4511
      %v4513 = vpop.f32.mrf.mxu0
      %v4514 = vadd.f32 %v4465, %v4513
      %4515 = vmatmul.bf16.gmra.mxu0 %v4296
      %v4516 = vpop.f32.mrf.mxu0
      %v4517 = vadd.f32 %v4468, %v4516
      %v4518 = vpop.f32.mrf.mxu0
      %v4519 = vadd.f32 %v4470, %v4518
      %4520 = vmatmul.bf16.gmra.mxu0 %v4298
      %v4521 = vpop.f32.mrf.mxu0
      %v4522 = vadd.f32 %v4473, %v4521
      %v4523 = vpop.f32.mrf.mxu0
      %v4524 = vadd.f32 %v4475, %v4523
      %4525 = vmatmul.bf16.gmra.mxu0 %v4300
      %v4526 = vpop.f32.mrf.mxu0
      %v4527 = vadd.f32 %v4478, %v4526
      %v4528 = vpop.f32.mrf.mxu0
      %v4529 = vadd.f32 %v4480, %v4528
      %4530 = vdwg.mxu0
      %v4531 = vmax.f32 %v4492, 0.0
      %v4532 = vmax.f32 %v4494, 0.0
      %v4533 = vmax.f32 %v4497, 0.0
      %v4534 = vmax.f32 %v4499, 0.0
      %v4535 = vmax.f32 %v4502, 0.0
      %v4536 = vmax.f32 %v4504, 0.0
      %v4537 = vmax.f32 %v4507, 0.0
      %v4538 = vmax.f32 %v4509, 0.0
      %v4539 = vmax.f32 %v4512, 0.0
      %v4540 = vmax.f32 %v4514, 0.0
      %v4541 = vmax.f32 %v4517, 0.0
      %v4542 = vmax.f32 %v4519, 0.0
      %v4543 = vmax.f32 %v4522, 0.0
      %v4544 = vmax.f32 %v4524, 0.0
      %v4545 = vmax.f32 %v4527, 0.0
      %v4546 = vmax.f32 %v4529, 0.0
      %v4547 = vpack.c.bf16 %v4532, %v4531
      %v4548 = vpack.c.bf16 %v4534, %v4533
      %v4549 = vpack.c.bf16 %v4536, %v4535
      %v4550 = vpack.c.bf16 %v4538, %v4537
      %v4551 = vpack.c.bf16 %v4540, %v4539
      %v4552 = vpack.c.bf16 %v4542, %v4541
      %v4553 = vpack.c.bf16 %v4544, %v4543
      %v4554 = vpack.c.bf16 %v4546, %v4545
      %v4555 = vld [vmem:[%s4] sm:$0xf]
      %v4556 = vld [vmem:[%s4 + $0x4] sm:$0xf]
      %v4557 = vld [vmem:[%s4 + $0x8] sm:$0xf]
      %v4558 = vld [vmem:[%s4 + $0xc] sm:$0xf]
      %v4559 = vld [vmem:[%s4 + $0x10] sm:$0xf]
      %v4560 = vld [vmem:[%s4 + $0x14] sm:$0xf]
      %v4561 = vld [vmem:[%s4 + $0x18] sm:$0xf]
      %v4562 = vld [vmem:[%s4 + $0x1c] sm:$0xf]
      %v4563 = vld [vmem:[%s4 + $0x20] sm:$0xf]
      %v4564 = vld [vmem:[%s4 + $0x24] sm:$0xf]
      %v4565 = vld [vmem:[%s4 + $0x28] sm:$0xf]
      %v4566 = vld [vmem:[%s4 + $0x2c] sm:$0xf]
      %v4567 = vld [vmem:[%s4 + $0x30] sm:$0xf]
      %v4568 = vld [vmem:[%s4 + $0x34] sm:$0xf]
      %v4569 = vld [vmem:[%s4 + $0x38] sm:$0xf]
      %v4570 = vld [vmem:[%s4 + $0x3c] sm:$0xf]
      %v4571 = vld [vmem:[%s10] sm:$0x1]
      %v4573 = vperm.slane %v4571, 0
      %v4591 = vunpack.c.l.b16 %v4555
      %v4592 = vunpack.c.l.b16 %v4556
      %v4593 = vunpack.c.l.b16 %v4557
      %v4594 = vunpack.c.l.b16 %v4558
      %v4595 = vunpack.c.l.b16 %v4559
      %v4596 = vunpack.c.l.b16 %v4560
      %v4597 = vunpack.c.l.b16 %v4561
      %v4598 = vunpack.c.l.b16 %v4562
      %v4599 = vunpack.c.l.b16 %v4563
      %v4600 = vunpack.c.l.b16 %v4564
      %v4601 = vunpack.c.l.b16 %v4565
      %v4602 = vunpack.c.l.b16 %v4566
      %v4603 = vunpack.c.l.b16 %v4567
      %v4604 = vunpack.c.l.b16 %v4568
      %v4605 = vunpack.c.l.b16 %v4569
      %v4606 = vunpack.c.l.b16 %v4570
      %v4607 = vpack.c.b16 %v4592, %v4591
      %v4608 = vpack.c.b16 %v4594, %v4593
      %v4609 = vpack.c.b16 %v4596, %v4595
      %v4610 = vpack.c.b16 %v4598, %v4597
      %v4611 = vpack.c.b16 %v4600, %v4599
      %v4612 = vpack.c.b16 %v4602, %v4601
      %v4613 = vpack.c.b16 %v4604, %v4603
      %v4614 = vpack.c.b16 %v4606, %v4605
      %4623 = vmatpush.bf16.msra.mxu0 %v4614
      %4624 = vmatpush.bf16.msra.mxu0 %v4613
      %4625 = vmatpush.bf16.msra.mxu0 %v4612
      %4626 = vmatpush.bf16.msra.mxu0 %v4611
      %4627 = vmatpush.bf16.msra.mxu0 %v4610
      %4628 = vmatpush.bf16.msra.mxu0 %v4609
      %4629 = vmatpush.bf16.msra.mxu0 %v4608
      %4630 = vmatpush.bf16.msra.mxu0 %v4607
      %4631 = vmatmul.bf16.gmra.mxu0 %v4547
      %v4632 = vpop.f32.mrf.mxu0
      %v4633 = vadd.f32 %v4573, %v4632
      %v4634 = vpop.f32.mrf.mxu0
      %v4635 = vadd.f32 %v4573, %v4634
      %4636 = vmatmul.bf16.gmra.mxu0 %v4548
      %v4637 = vpop.f32.mrf.mxu0
      %v4638 = vadd.f32 %v4573, %v4637
      %v4639 = vpop.f32.mrf.mxu0
      %v4640 = vadd.f32 %v4573, %v4639
      %4641 = vmatmul.bf16.gmra.mxu0 %v4549
      %v4642 = vpop.f32.mrf.mxu0
      %v4643 = vadd.f32 %v4573, %v4642
      %v4644 = vpop.f32.mrf.mxu0
      %v4645 = vadd.f32 %v4573, %v4644
      %4646 = vmatmul.bf16.gmra.mxu0 %v4550
      %v4647 = vpop.f32.mrf.mxu0
      %v4648 = vadd.f32 %v4573, %v4647
      %v4649 = vpop.f32.mrf.mxu0
      %v4650 = vadd.f32 %v4573, %v4649
      %4651 = vmatmul.bf16.gmra.mxu0 %v4551
      %v4652 = vpop.f32.mrf.mxu0
      %v4653 = vadd.f32 %v4573, %v4652
      %v4654 = vpop.f32.mrf.mxu0
      %v4655 = vadd.f32 %v4573, %v4654
      %4656 = vmatmul.bf16.gmra.mxu0 %v4552
      %v4657 = vpop.f32.mrf.mxu0
      %v4658 = vadd.f32 %v4573, %v4657
      %v4659 = vpop.f32.mrf.mxu0
      %v4660 = vadd.f32 %v4573, %v4659
      %4661 = vmatmul.bf16.gmra.mxu0 %v4553
      %v4662 = vpop.f32.mrf.mxu0
      %v4663 = vadd.f32 %v4573, %v4662
      %v4664 = vpop.f32.mrf.mxu0
      %v4665 = vadd.f32 %v4573, %v4664
      %4666 = vmatmul.bf16.gmra.mxu0 %v4554
      %v4667 = vpop.f32.mrf.mxu0
      %v4668 = vadd.f32 %v4573, %v4667
      %v4669 = vpop.f32.mrf.mxu0
      %v4670 = vadd.f32 %v4573, %v4669
      %4671 = vdwg.mxu0
      %v4672 = vmax.f32 %v4633, 0.0
      %v4673 = vmax.f32 %v4635, 0.0
      %v4674 = vmax.f32 %v4638, 0.0
      %v4675 = vmax.f32 %v4640, 0.0
      %v4676 = vmax.f32 %v4643, 0.0
      %v4677 = vmax.f32 %v4645, 0.0
      %v4678 = vmax.f32 %v4648, 0.0
      %v4679 = vmax.f32 %v4650, 0.0
      %v4680 = vmax.f32 %v4653, 0.0
      %v4681 = vmax.f32 %v4655, 0.0
      %v4682 = vmax.f32 %v4658, 0.0
      %v4683 = vmax.f32 %v4660, 0.0
      %v4684 = vmax.f32 %v4663, 0.0
      %v4685 = vmax.f32 %v4665, 0.0
      %v4686 = vmax.f32 %v4668, 0.0
      %v4687 = vmax.f32 %v4670, 0.0
      %v4688 = vpack.c.bf16 %v4673, %v4672
      %v4689 = vpack.c.bf16 %v4675, %v4674
      %v4690 = vpack.c.bf16 %v4677, %v4676
      %v4691 = vpack.c.bf16 %v4679, %v4678
      %v4692 = vpack.c.bf16 %v4681, %v4680
      %v4693 = vpack.c.bf16 %v4683, %v4682
      %v4694 = vpack.c.bf16 %v4685, %v4684
      %v4695 = vpack.c.bf16 %v4687, %v4686
      %v4696 = vld [vmem:[%s5] sm:$0xf]
      %v4697 = vld [vmem:[%s5 + $0x4] sm:$0xf]
      %v4698 = vld [vmem:[%s5 + $0x8] sm:$0xf]
      %v4699 = vld [vmem:[%s5 + $0xc] sm:$0xf]
      %v4700 = vld [vmem:[%s5 + $0x10] sm:$0xf]
      %v4701 = vld [vmem:[%s5 + $0x14] sm:$0xf]
      %v4702 = vld [vmem:[%s5 + $0x18] sm:$0xf]
      %v4703 = vld [vmem:[%s5 + $0x1c] sm:$0xf]
      %v4704 = vld [vmem:[%s5 + $0x20] sm:$0xf]
      %v4705 = vld [vmem:[%s5 + $0x24] sm:$0xf]
      %v4706 = vld [vmem:[%s5 + $0x28] sm:$0xf]
      %v4707 = vld [vmem:[%s5 + $0x2c] sm:$0xf]
      %v4708 = vld [vmem:[%s5 + $0x30] sm:$0xf]
      %v4709 = vld [vmem:[%s5 + $0x34] sm:$0xf]
      %v4710 = vld [vmem:[%s5 + $0x38] sm:$0xf]
      %v4711 = vld [vmem:[%s5 + $0x3c] sm:$0xf]
      %v4712 = vld [vmem:[%s11] sm:$0x1]
      %v4714 = vperm.slane %v4712, 0
      %v4732 = vunpack.c.l.b16 %v4696
      %v4733 = vunpack.c.l.b16 %v4697
      %v4734 = vunpack.c.l.b16 %v4698
      %v4735 = vunpack.c.l.b16 %v4699
      %v4736 = vunpack.c.l.b16 %v4700
      %v4737 = vunpack.c.l.b16 %v4701
      %v4738 = vunpack.c.l.b16 %v4702
      %v4739 = vunpack.c.l.b16 %v4703
      %v4740 = vunpack.c.l.b16 %v4704
      %v4741 = vunpack.c.l.b16 %v4705
      %v4742 = vunpack.c.l.b16 %v4706
      %v4743 = vunpack.c.l.b16 %v4707
      %v4744 = vunpack.c.l.b16 %v4708
      %v4745 = vunpack.c.l.b16 %v4709
      %v4746 = vunpack.c.l.b16 %v4710
      %v4747 = vunpack.c.l.b16 %v4711
      %v4748 = vpack.c.b16 %v4733, %v4732
      %v4749 = vpack.c.b16 %v4735, %v4734
      %v4750 = vpack.c.b16 %v4737, %v4736
      %v4751 = vpack.c.b16 %v4739, %v4738
      %v4752 = vpack.c.b16 %v4741, %v4740
      %v4753 = vpack.c.b16 %v4743, %v4742
      %v4754 = vpack.c.b16 %v4745, %v4744
      %v4755 = vpack.c.b16 %v4747, %v4746
      %4764 = vmatpush.bf16.msra.mxu0 %v4755
      %4765 = vmatpush.bf16.msra.mxu0 %v4754
      %4766 = vmatpush.bf16.msra.mxu0 %v4753
      %4767 = vmatpush.bf16.msra.mxu0 %v4752
      %4768 = vmatpush.bf16.msra.mxu0 %v4751
      %4769 = vmatpush.bf16.msra.mxu0 %v4750
      %4770 = vmatpush.bf16.msra.mxu0 %v4749
      %4771 = vmatpush.bf16.msra.mxu0 %v4748
      %4772 = vmatmul.bf16.gmra.mxu0 %v4688
      %v4773 = vpop.f32.mrf.mxu0
      %v4774 = vadd.f32 %v4714, %v4773
      %v4775 = vpop.f32.mrf.mxu0
      %v4776 = vadd.f32 %v4714, %v4775
      %4777 = vmatmul.bf16.gmra.mxu0 %v4689
      %v4778 = vpop.f32.mrf.mxu0
      %v4779 = vadd.f32 %v4714, %v4778
      %v4780 = vpop.f32.mrf.mxu0
      %v4781 = vadd.f32 %v4714, %v4780
      %4782 = vmatmul.bf16.gmra.mxu0 %v4690
      %v4783 = vpop.f32.mrf.mxu0
      %v4784 = vadd.f32 %v4714, %v4783
      %v4785 = vpop.f32.mrf.mxu0
      %v4786 = vadd.f32 %v4714, %v4785
      %4787 = vmatmul.bf16.gmra.mxu0 %v4691
      %v4788 = vpop.f32.mrf.mxu0
      %v4789 = vadd.f32 %v4714, %v4788
      %v4790 = vpop.f32.mrf.mxu0
      %v4791 = vadd.f32 %v4714, %v4790
      %4792 = vmatmul.bf16.gmra.mxu0 %v4692
      %v4793 = vpop.f32.mrf.mxu0
      %v4794 = vadd.f32 %v4714, %v4793
      %v4795 = vpop.f32.mrf.mxu0
      %v4796 = vadd.f32 %v4714, %v4795
      %4797 = vmatmul.bf16.gmra.mxu0 %v4693
      %v4798 = vpop.f32.mrf.mxu0
      %v4799 = vadd.f32 %v4714, %v4798
      %v4800 = vpop.f32.mrf.mxu0
      %v4801 = vadd.f32 %v4714, %v4800
      %4802 = vmatmul.bf16.gmra.mxu0 %v4694
      %v4803 = vpop.f32.mrf.mxu0
      %v4804 = vadd.f32 %v4714, %v4803
      %v4805 = vpop.f32.mrf.mxu0
      %v4806 = vadd.f32 %v4714, %v4805
      %4807 = vmatmul.bf16.gmra.mxu0 %v4695
      %v4808 = vpop.f32.mrf.mxu0
      %v4809 = vadd.f32 %v4714, %v4808
      %v4810 = vpop.f32.mrf.mxu0
      %v4811 = vadd.f32 %v4714, %v4810
      %4812 = vdwg.mxu0
      %v4813 = vmax.f32 %v4774, 0.0
      %v4814 = vmax.f32 %v4776, 0.0
      %v4815 = vmax.f32 %v4779, 0.0
      %v4816 = vmax.f32 %v4781, 0.0
      %v4817 = vmax.f32 %v4784, 0.0
      %v4818 = vmax.f32 %v4786, 0.0
      %v4819 = vmax.f32 %v4789, 0.0
      %v4820 = vmax.f32 %v4791, 0.0
      %v4821 = vmax.f32 %v4794, 0.0
      %v4822 = vmax.f32 %v4796, 0.0
      %v4823 = vmax.f32 %v4799, 0.0
      %v4824 = vmax.f32 %v4801, 0.0
      %v4825 = vmax.f32 %v4804, 0.0
      %v4826 = vmax.f32 %v4806, 0.0
      %v4827 = vmax.f32 %v4809, 0.0
      %v4828 = vmax.f32 %v4811, 0.0
      %v4829 = vpack.c.bf16 %v4814, %v4813
      %v4830 = vpack.c.bf16 %v4816, %v4815
      %v4831 = vpack.c.bf16 %v4818, %v4817
      %v4832 = vpack.c.bf16 %v4820, %v4819
      %v4833 = vpack.c.bf16 %v4822, %v4821
      %v4834 = vpack.c.bf16 %v4824, %v4823
      %v4835 = vpack.c.bf16 %v4826, %v4825
      %v4836 = vpack.c.bf16 %v4828, %v4827
      %v4837 = vld [vmem:[%s6] sm:$0xf]
      %v4838 = vld [vmem:[%s6 + $0x4] sm:$0xf]
      %v4839 = vld [vmem:[%s6 + $0x8] sm:$0xf]
      %v4840 = vld [vmem:[%s6 + $0xc] sm:$0xf]
      %v4841 = vld [vmem:[%s6 + $0x10] sm:$0xf]
      %v4842 = vld [vmem:[%s6 + $0x14] sm:$0xf]
      %v4843 = vld [vmem:[%s6 + $0x18] sm:$0xf]
      %v4844 = vld [vmem:[%s6 + $0x1c] sm:$0xf]
      %v4845 = vld [vmem:[%s6 + $0x20] sm:$0xf]
      %v4846 = vld [vmem:[%s6 + $0x24] sm:$0xf]
      %v4847 = vld [vmem:[%s6 + $0x28] sm:$0xf]
      %v4848 = vld [vmem:[%s6 + $0x2c] sm:$0xf]
      %v4849 = vld [vmem:[%s6 + $0x30] sm:$0xf]
      %v4850 = vld [vmem:[%s6 + $0x34] sm:$0xf]
      %v4851 = vld [vmem:[%s6 + $0x38] sm:$0xf]
      %v4852 = vld [vmem:[%s6 + $0x3c] sm:$0xf]
      %v4853 = vld [vmem:[%s12] sm:$0x1]
      %v4855 = vperm.slane %v4853, 0
      %v4873 = vunpack.c.l.b16 %v4837
      %v4874 = vunpack.c.l.b16 %v4838
      %v4875 = vunpack.c.l.b16 %v4839
      %v4876 = vunpack.c.l.b16 %v4840
      %v4877 = vunpack.c.l.b16 %v4841
      %v4878 = vunpack.c.l.b16 %v4842
      %v4879 = vunpack.c.l.b16 %v4843
      %v4880 = vunpack.c.l.b16 %v4844
      %v4881 = vunpack.c.l.b16 %v4845
      %v4882 = vunpack.c.l.b16 %v4846
      %v4883 = vunpack.c.l.b16 %v4847
      %v4884 = vunpack.c.l.b16 %v4848
      %v4885 = vunpack.c.l.b16 %v4849
      %v4886 = vunpack.c.l.b16 %v4850
      %v4887 = vunpack.c.l.b16 %v4851
      %v4888 = vunpack.c.l.b16 %v4852
      %v4889 = vpack.c.b16 %v4874, %v4873
      %v4890 = vpack.c.b16 %v4876, %v4875
      %v4891 = vpack.c.b16 %v4878, %v4877
      %v4892 = vpack.c.b16 %v4880, %v4879
      %v4893 = vpack.c.b16 %v4882, %v4881
      %v4894 = vpack.c.b16 %v4884, %v4883
      %v4895 = vpack.c.b16 %v4886, %v4885
      %v4896 = vpack.c.b16 %v4888, %v4887
      %4905 = vmatpush.bf16.msra.mxu0 %v4896
      %4906 = vmatpush.bf16.msra.mxu0 %v4895
      %4907 = vmatpush.bf16.msra.mxu0 %v4894
      %4908 = vmatpush.bf16.msra.mxu0 %v4893
      %4909 = vmatpush.bf16.msra.mxu0 %v4892
      %4910 = vmatpush.bf16.msra.mxu0 %v4891
      %4911 = vmatpush.bf16.msra.mxu0 %v4890
      %4912 = vmatpush.bf16.msra.mxu0 %v4889
      %4913 = vmatmul.bf16.gmra.mxu0 %v4829
      %v4914 = vpop.f32.mrf.mxu0
      %v4915 = vadd.f32 %v4855, %v4914
      %v4916 = vpop.f32.mrf.mxu0
      %v4917 = vadd.f32 %v4855, %v4916
      %4918 = vmatmul.bf16.gmra.mxu0 %v4830
      %v4919 = vpop.f32.mrf.mxu0
      %v4920 = vadd.f32 %v4855, %v4919
      %v4921 = vpop.f32.mrf.mxu0
      %v4922 = vadd.f32 %v4855, %v4921
      %4923 = vmatmul.bf16.gmra.mxu0 %v4831
      %v4924 = vpop.f32.mrf.mxu0
      %v4925 = vadd.f32 %v4855, %v4924
      %v4926 = vpop.f32.mrf.mxu0
      %v4927 = vadd.f32 %v4855, %v4926
      %4928 = vmatmul.bf16.gmra.mxu0 %v4832
      %v4929 = vpop.f32.mrf.mxu0
      %v4930 = vadd.f32 %v4855, %v4929
      %v4931 = vpop.f32.mrf.mxu0
      %v4932 = vadd.f32 %v4855, %v4931
      %4933 = vmatmul.bf16.gmra.mxu0 %v4833
      %v4934 = vpop.f32.mrf.mxu0
      %v4935 = vadd.f32 %v4855, %v4934
      %v4936 = vpop.f32.mrf.mxu0
      %v4937 = vadd.f32 %v4855, %v4936
      %4938 = vmatmul.bf16.gmra.mxu0 %v4834
      %v4939 = vpop.f32.mrf.mxu0
      %v4940 = vadd.f32 %v4855, %v4939
      %v4941 = vpop.f32.mrf.mxu0
      %v4942 = vadd.f32 %v4855, %v4941
      %4943 = vmatmul.bf16.gmra.mxu0 %v4835
      %v4944 = vpop.f32.mrf.mxu0
      %v4945 = vadd.f32 %v4855, %v4944
      %v4946 = vpop.f32.mrf.mxu0
      %v4947 = vadd.f32 %v4855, %v4946
      %4948 = vmatmul.bf16.gmra.mxu0 %v4836
      %v4949 = vpop.f32.mrf.mxu0
      %v4950 = vadd.f32 %v4855, %v4949
      %v4951 = vpop.f32.mrf.mxu0
      %v4952 = vadd.f32 %v4855, %v4951
      %4953 = vdwg.mxu0
      %v4954 = vlaneseq
      %v4955 = vand.u32 %v4954, 127
      %vm4956 = vcmp.lt.s32.totalorder %v4955, 10
      %v4957 = vsel %vm4956, %v4915, -1e+30
      %v4958 = vsel %vm4956, %v4917, -1e+30
      %v4959 = vsel %vm4956, %v4920, -1e+30
      %v4960 = vsel %vm4956, %v4922, -1e+30
      %v4961 = vsel %vm4956, %v4925, -1e+30
      %v4962 = vsel %vm4956, %v4927, -1e+30
      %v4963 = vsel %vm4956, %v4930, -1e+30
      %v4964 = vsel %vm4956, %v4932, -1e+30
      %v4965 = vsel %vm4956, %v4935, -1e+30
      %v4966 = vsel %vm4956, %v4937, -1e+30
      %v4967 = vsel %vm4956, %v4940, -1e+30
      %v4968 = vsel %vm4956, %v4942, -1e+30
      %v4969 = vsel %vm4956, %v4945, -1e+30
      %v4970 = vsel %vm4956, %v4947, -1e+30
      %v4971 = vsel %vm4956, %v4950, -1e+30
      %v4972 = vsel %vm4956, %v4952, -1e+30
      %4973 = vmax.xlane.f32.xlu0 %v4957
      %v4974 = vpop.xlane.xlu0 %4973
      %4975 = vmax.xlane.f32.xlu0 %v4958
      %v4976 = vpop.xlane.xlu0 %4975
      %4977 = vmax.xlane.f32.xlu0 %v4959
      %v4978 = vpop.xlane.xlu0 %4977
      %4979 = vmax.xlane.f32.xlu0 %v4960
      %v4980 = vpop.xlane.xlu0 %4979
      %4981 = vmax.xlane.f32.xlu0 %v4961
      %v4982 = vpop.xlane.xlu0 %4981
      %4983 = vmax.xlane.f32.xlu0 %v4962
      %v4984 = vpop.xlane.xlu0 %4983
      %4985 = vmax.xlane.f32.xlu0 %v4963
      %v4986 = vpop.xlane.xlu0 %4985
      %4987 = vmax.xlane.f32.xlu0 %v4964
      %v4988 = vpop.xlane.xlu0 %4987
      %4989 = vmax.xlane.f32.xlu0 %v4965
      %v4990 = vpop.xlane.xlu0 %4989
      %4991 = vmax.xlane.f32.xlu0 %v4966
      %v4992 = vpop.xlane.xlu0 %4991
      %4993 = vmax.xlane.f32.xlu0 %v4967
      %v4994 = vpop.xlane.xlu0 %4993
      %4995 = vmax.xlane.f32.xlu0 %v4968
      %v4996 = vpop.xlane.xlu0 %4995
      %4997 = vmax.xlane.f32.xlu0 %v4969
      %v4998 = vpop.xlane.xlu0 %4997
      %4999 = vmax.xlane.f32.xlu0 %v4970
      %v5000 = vpop.xlane.xlu0 %4999
      %5001 = vmax.xlane.f32.xlu0 %v4971
      %v5002 = vpop.xlane.xlu0 %5001
      %5003 = vmax.xlane.f32.xlu0 %v4972
      %v5004 = vpop.xlane.xlu0 %5003
      %v5005 = vsub.f32 %v4957, %v4974
      %v5006 = vsub.f32 %v4958, %v4976
      %v5007 = vsub.f32 %v4959, %v4978
      %v5008 = vsub.f32 %v4960, %v4980
      %v5009 = vsub.f32 %v4961, %v4982
      %v5010 = vsub.f32 %v4962, %v4984
      %v5011 = vsub.f32 %v4963, %v4986
      %v5012 = vsub.f32 %v4964, %v4988
      %v5013 = vsub.f32 %v4965, %v4990
      %v5014 = vsub.f32 %v4966, %v4992
      %v5015 = vsub.f32 %v4967, %v4994
      %v5016 = vsub.f32 %v4968, %v4996
      %v5017 = vsub.f32 %v4969, %v4998
      %v5018 = vsub.f32 %v4970, %v5000
      %v5019 = vsub.f32 %v4971, %v5002
      %v5020 = vsub.f32 %v4972, %v5004
      %v5021 = vmul.f32 %v5005, 1.442695
      %v5022 = vpow.pop %v5021
      %v5023 = vmul.f32 %v5006, 1.442695
      %v5024 = vpow.pop %v5023
      %v5025 = vmul.f32 %v5007, 1.442695
      %v5026 = vpow.pop %v5025
      %v5027 = vmul.f32 %v5008, 1.442695
      %v5028 = vpow.pop %v5027
      %v5029 = vmul.f32 %v5009, 1.442695
      %v5030 = vpow.pop %v5029
      %v5031 = vmul.f32 %v5010, 1.442695
      %v5032 = vpow.pop %v5031
      %v5033 = vmul.f32 %v5011, 1.442695
      %v5034 = vpow.pop %v5033
      %v5035 = vmul.f32 %v5012, 1.442695
      %v5036 = vpow.pop %v5035
      %v5037 = vmul.f32 %v5013, 1.442695
      %v5038 = vpow.pop %v5037
      %v5039 = vmul.f32 %v5014, 1.442695
      %v5040 = vpow.pop %v5039
      %v5041 = vmul.f32 %v5015, 1.442695
      %v5042 = vpow.pop %v5041
      %v5043 = vmul.f32 %v5016, 1.442695
      %v5044 = vpow.pop %v5043
      %v5045 = vmul.f32 %v5017, 1.442695
      %v5046 = vpow.pop %v5045
      %v5047 = vmul.f32 %v5018, 1.442695
      %v5048 = vpow.pop %v5047
      %v5049 = vmul.f32 %v5019, 1.442695
      %v5050 = vpow.pop %v5049
      %v5051 = vmul.f32 %v5020, 1.442695
      %v5052 = vpow.pop %v5051
      %v5053 = vsel %vm4956, %v5022, 0.0
      %v5054 = vsel %vm4956, %v5024, 0.0
      %v5055 = vsel %vm4956, %v5026, 0.0
      %v5056 = vsel %vm4956, %v5028, 0.0
      %v5057 = vsel %vm4956, %v5030, 0.0
      %v5058 = vsel %vm4956, %v5032, 0.0
      %v5059 = vsel %vm4956, %v5034, 0.0
      %v5060 = vsel %vm4956, %v5036, 0.0
      %v5061 = vsel %vm4956, %v5038, 0.0
      %v5062 = vsel %vm4956, %v5040, 0.0
      %v5063 = vsel %vm4956, %v5042, 0.0
      %v5064 = vsel %vm4956, %v5044, 0.0
      %v5065 = vsel %vm4956, %v5046, 0.0
      %v5066 = vsel %vm4956, %v5048, 0.0
      %v5067 = vsel %vm4956, %v5050, 0.0
      %v5068 = vsel %vm4956, %v5052, 0.0
      %5069 = vadd.xlane.f32.xlu0 %v5053
      %v5070 = vpop.xlane.xlu0 %5069
      %5071 = vadd.xlane.f32.xlu0 %v5054
      %v5072 = vpop.xlane.xlu0 %5071
      %5073 = vadd.xlane.f32.xlu0 %v5055
      %v5074 = vpop.xlane.xlu0 %5073
      %5075 = vadd.xlane.f32.xlu0 %v5056
      %v5076 = vpop.xlane.xlu0 %5075
      %5077 = vadd.xlane.f32.xlu0 %v5057
      %v5078 = vpop.xlane.xlu0 %5077
      %5079 = vadd.xlane.f32.xlu0 %v5058
      %v5080 = vpop.xlane.xlu0 %5079
      %5081 = vadd.xlane.f32.xlu0 %v5059
      %v5082 = vpop.xlane.xlu0 %5081
      %5083 = vadd.xlane.f32.xlu0 %v5060
      %v5084 = vpop.xlane.xlu0 %5083
      %5085 = vadd.xlane.f32.xlu0 %v5061
      %v5086 = vpop.xlane.xlu0 %5085
      %5087 = vadd.xlane.f32.xlu0 %v5062
      %v5088 = vpop.xlane.xlu0 %5087
      %5089 = vadd.xlane.f32.xlu0 %v5063
      %v5090 = vpop.xlane.xlu0 %5089
      %5091 = vadd.xlane.f32.xlu0 %v5064
      %v5092 = vpop.xlane.xlu0 %5091
      %5093 = vadd.xlane.f32.xlu0 %v5065
      %v5094 = vpop.xlane.xlu0 %5093
      %5095 = vadd.xlane.f32.xlu0 %v5066
      %v5096 = vpop.xlane.xlu0 %5095
      %5097 = vadd.xlane.f32.xlu0 %v5067
      %v5098 = vpop.xlane.xlu0 %5097
      %5099 = vadd.xlane.f32.xlu0 %v5068
      %v5100 = vpop.xlane.xlu0 %5099
      %v5101 = vlog2.pop %v5070
      %v5102 = vmul.f32 %v5101, 0.6931472
      %v5103 = vlog2.pop %v5072
      %v5104 = vmul.f32 %v5103, 0.6931472
      %v5105 = vlog2.pop %v5074
      %v5106 = vmul.f32 %v5105, 0.6931472
      %v5107 = vlog2.pop %v5076
      %v5108 = vmul.f32 %v5107, 0.6931472
      %v5109 = vlog2.pop %v5078
      %v5110 = vmul.f32 %v5109, 0.6931472
      %v5111 = vlog2.pop %v5080
      %v5112 = vmul.f32 %v5111, 0.6931472
      %v5113 = vlog2.pop %v5082
      %v5114 = vmul.f32 %v5113, 0.6931472
      %v5115 = vlog2.pop %v5084
      %v5116 = vmul.f32 %v5115, 0.6931472
      %v5117 = vlog2.pop %v5086
      %v5118 = vmul.f32 %v5117, 0.6931472
      %v5119 = vlog2.pop %v5088
      %v5120 = vmul.f32 %v5119, 0.6931472
      %v5121 = vlog2.pop %v5090
      %v5122 = vmul.f32 %v5121, 0.6931472
      %v5123 = vlog2.pop %v5092
      %v5124 = vmul.f32 %v5123, 0.6931472
      %v5125 = vlog2.pop %v5094
      %v5126 = vmul.f32 %v5125, 0.6931472
      %v5127 = vlog2.pop %v5096
      %v5128 = vmul.f32 %v5127, 0.6931472
      %v5129 = vlog2.pop %v5098
      %v5130 = vmul.f32 %v5129, 0.6931472
      %v5131 = vlog2.pop %v5100
      %v5132 = vmul.f32 %v5131, 0.6931472
      %v5133 = vsub.f32 %v5005, %v5102
      %v5134 = vsub.f32 %v5006, %v5104
      %v5135 = vsub.f32 %v5007, %v5106
      %v5136 = vsub.f32 %v5008, %v5108
      %v5137 = vsub.f32 %v5009, %v5110
      %v5138 = vsub.f32 %v5010, %v5112
      %v5139 = vsub.f32 %v5011, %v5114
      %v5140 = vsub.f32 %v5012, %v5116
      %v5141 = vsub.f32 %v5013, %v5118
      %v5142 = vsub.f32 %v5014, %v5120
      %v5143 = vsub.f32 %v5015, %v5122
      %v5144 = vsub.f32 %v5016, %v5124
      %v5145 = vsub.f32 %v5017, %v5126
      %v5146 = vsub.f32 %v5018, %v5128
      %v5147 = vsub.f32 %v5019, %v5130
      %v5148 = vsub.f32 %v5020, %v5132
      %5149 = vst [vmem:[%s445] sm:$0xff] %v5133
      %5150 = vst [vmem:[%s445 + $0x8] sm:$0xff] %v5134
      %5151 = vst [vmem:[%s445 + $0x10] sm:$0xff] %v5135
      %5152 = vst [vmem:[%s445 + $0x18] sm:$0xff] %v5136
      %5153 = vst [vmem:[%s445 + $0x20] sm:$0xff] %v5137
      %5154 = vst [vmem:[%s445 + $0x28] sm:$0xff] %v5138
      %5155 = vst [vmem:[%s445 + $0x30] sm:$0xff] %v5139
      %5156 = vst [vmem:[%s445 + $0x38] sm:$0xff] %v5140
      %5157 = vst [vmem:[%s445 + $0x40] sm:$0xff] %v5141
      %5158 = vst [vmem:[%s445 + $0x48] sm:$0xff] %v5142
      %5159 = vst [vmem:[%s445 + $0x50] sm:$0xff] %v5143
      %5160 = vst [vmem:[%s445 + $0x58] sm:$0xff] %v5144
      %5161 = vst [vmem:[%s445 + $0x60] sm:$0xff] %v5145
      %5162 = vst [vmem:[%s445 + $0x68] sm:$0xff] %v5146
      %5163 = vst [vmem:[%s445 + $0x70] sm:$0xff] %v5147
      %5164 = vst [vmem:[%s445 + $0x78] sm:$0xff] %v5148
      %s5165 = smul.u32 16, %s24
      %p5166 = scmp.lt.s32.totalorder %s5165, 31
      %s5167 = scalar_select %p5166, %s5165, 31
      %s5168 = smul.addr %s5167, 8
      %s5169 = scalar_lea.vmem %s13, %s5168
      // Predicated region
      $region73: #{net_forward.1} parent=71 // pred_check
        %p5170 = pneg %p320
      $region74: #{net_forward.1} parent=71 // pred_check_branch
        %5172 = sbr.rel (%p5170) target = $region76
      $region75: #{net_forward.1} parent=71 // pred_region
        %s5173 = smul.u32 16, %s24
      $region76: #{net_forward.1} parent=71 // pred_fallthru
        _
    $region72: #{net_forward.1} parent=5 // pred_fallthru
      _
    %p5174 = scmp.le.s32.totalorder 2, %s19
    // Predicated region
    $region77: #{net_forward.1} parent=5 // pred_check
      %p5175 = pneg %p5174
    $region78: #{net_forward.1} parent=5 // pred_check_branch
      %5177 = sbr.rel (%p5175) target = $region80
    $region79: #{net_forward.1} parent=5 // pred_region
      %s5178 = ssub.s32 %s19, 2
      // Predicated region
      $region81: #{net_forward.1} parent=79 // pred_check
        %p5179 = pneg %p326
      $region82: #{net_forward.1} parent=79 // pred_check_branch
        %5181 = sbr.rel (%p5179) target = $region84
      $region83: #{net_forward.1} parent=79 // pred_region
        %s5182 = smul.u32 16, %s25
        %p5183 = scmp.lt.s32.totalorder %s5182, 31
        %s5184 = scalar_select %p5183, %s5182, 31
        %s5185 = smul.addr %s5184, 8
        %s5186 = scalar_lea.vmem %s13, %s5185
      $region84: #{net_forward.1} parent=79 // pred_fallthru
        _
    $region80: #{net_forward.1} parent=5 // pred_fallthru
      _
  $region6: #{net_forward.1} parent=0 // loop_footer
    %s23 = sadd.s32 1, %s19
  $region7: #{net_forward.1} parent=0 // loop_footer_branch
    %18 = sbr.rel target = $region3
  $region8: #{net_forward.1} parent=0 // loop_exit
    _

</llo_original>
